<compile_context>
chip_gen: v7x
topology: tpu7x:2x2x1
jax: 0.10.0
libtpu: 0.0.40
codegen_flags: <defaults>
</compile_context>

<pallas_src>
import functools

import jax
import jax.numpy as jnp
from jax import lax
from jax.experimental import pallas as pl
from jax.experimental.pallas import tpu as pltpu


# ----------------------------------------------------------------------------
# Generation-dependent tiling constants
# ----------------------------------------------------------------------------

try:
    _KIND = jax.devices()[0].device_kind.lower()
except Exception:  # pragma: no cover
    _KIND = ""
_IS_V5E = ("v5e" in _KIND) or ("v5 lite" in _KIND) or ("v5litepod" in _KIND)
_IS_V7 = "v7" in _KIND

_TM_PREF = 128 if _IS_V5E else 256   # v5e MXU is 4x128x128; v6e/v7x are 2x256x256
_TN_PREF = 128 if _IS_V5E else 256
# v7x has only 64 MiB physical VMEM per TensorCore -> keep the scoped limit modest there;
# v5e/v6e have 128 MiB -> allow more headroom for the conv blocks.
_VMEM_LIMIT = (32 if _IS_V7 else 64) * 1024 * 1024


def _round_up(x, m):
    return ((x + m - 1) // m) * m


def _pick_tile(dim, pref):
    """Largest tile from the ladder that divides `dim` (or the full dim if small)."""
    if dim <= pref:
        return dim
    for t in (pref, 128):
        if dim % t == 0:
            return t
    return None  # caller must guard


# ----------------------------------------------------------------------------
# Pallas kernels
# ----------------------------------------------------------------------------

def _matmul_bias_kernel(a_ref, b_ref, bias_ref, o_ref, *, relu):
    """o = a @ b + bias (+ReLU). bf16 operands, f32 MXU accumulation, full-K block."""
    y = jnp.dot(a_ref[...], b_ref[...], preferred_element_type=jnp.float32)
    y = y + bias_ref[...]
    if relu:
        y = jnp.maximum(y, 0.0)
    o_ref[...] = y.astype(o_ref.dtype)


def _matmul_bias_res_kernel(a_ref, b_ref, bias_ref, r_ref, o_ref, *, relu):
    """o = relu(a @ b + bias + residual): conv3 of a bottleneck with fused skip-add."""
    y = jnp.dot(a_ref[...], b_ref[...], preferred_element_type=jnp.float32)
    y = y + bias_ref[...] + r_ref[...].astype(jnp.float32)
    if relu:
        y = jnp.maximum(y, 0.0)
    o_ref[...] = y.astype(o_ref.dtype)


def _tap_conv_kernel(x_ref, w_ref, bias_ref, o_ref, xk_ref, *, KH, KW, PB, W, Wp, relu):
    """Stride-1 KHxKW conv (pad PB before, KH-1-PB after on both spatial axes) for one
    batch element and one Cout tile, with the KW column taps packed along K.

    x_ref:    (H, W, C)           bf16  unpadded NHWC image (one batch element)
    w_ref:    (KH, KW*C, TN)      bf16  per-row-tap weights, BN scale folded in
    bias_ref: (1, TN)             f32
    o_ref:    (H, W, TN)          bf16
    xk_ref:   (H+KH-1, Wp, KW*C)  bf16  scratch: zero-padded, column-tap-packed input

    The scratch is built with KW shifted copies (instead of KH*KW misaligned slices),
    then KH matmuls of K = KW*C accumulate the output.  Row slices xk_ref[di:di+H] are
    8-sublane aligned because Wp is a multiple of 8.
    """
    H, _, C = x_ref.shape
    TN = o_ref.shape[-1]

    # Padded, dj-packed input (padding handled here -> no jnp.pad in the wrapper).
    xk_ref[...] = jnp.zeros_like(xk_ref)
    for dj in range(KW):               # static unroll, KW copies
        bs = max(0, PB - dj)           # first scratch column written
        xs = max(0, dj - PB)           # first input column read
        wl = W - xs
        xk_ref[PB:PB + H, bs:bs + wl, dj * C:(dj + 1) * C] = x_ref[:, xs:xs + wl, :]

    # KH accumulation passes, each a (H*Wp, KW*C) x (KW*C, TN) MXU matmul.
    acc = jnp.zeros((H * Wp, TN), jnp.float32)
    for di in range(KH):               # static unroll over row taps
        a = xk_ref[di:di + H, :, :].reshape(H * Wp, KW * C)
        acc = acc + jnp.dot(a, w_ref[di], preferred_element_type=jnp.float32)

    y = acc + bias_ref[...]
    if relu:
        y = jnp.maximum(y, 0.0)
    y = y.reshape(H, Wp, TN)[:, :W, :]          # drop the alignment-pad (junk) columns
    o_ref[...] = y.astype(o_ref.dtype)


# ----------------------------------------------------------------------------
# Cached pallas_call builders
# ----------------------------------------------------------------------------

@functools.lru_cache(maxsize=None)
def _build_matmul(Mp, K, N, TM, TN, relu, fuse_res, out_dtype):
    grid = (Mp // TM, N // TN)
    in_specs = [
        pl.BlockSpec((TM, K), lambda i, j: (i, 0)),     # A: full-K row block
        pl.BlockSpec((K, TN), lambda i, j: (0, j)),     # B: full-K column block (weights)
        pl.BlockSpec((1, TN), lambda i, j: (0, j)),     # bias
    ]
    if fuse_res:
        in_specs.append(pl.BlockSpec((TM, TN), lambda i, j: (i, j)))   # residual
        kernel = functools.partial(_matmul_bias_res_kernel, relu=relu)
    else:
        kernel = functools.partial(_matmul_bias_kernel, relu=relu)
    return pl.pallas_call(
        kernel,
        out_shape=jax.ShapeDtypeStruct((Mp, N), out_dtype),
        grid=grid,
        in_specs=in_specs,
        out_specs=pl.BlockSpec((TM, TN), lambda i, j: (i, j)),
        compiler_params=pltpu.CompilerParams(
            dimension_semantics=("parallel", "parallel"),
            vmem_limit_bytes=_VMEM_LIMIT,
        ),
    )


@functools.lru_cache(maxsize=None)
def _build_tap_conv(B, H, W, C, Cout, TN, KH, KW, PB, relu):
    Wp = _round_up(max(W + PB, 8), 8)
    assert Wp >= W + PB, (Wp, W, PB)   # packed-column trick requires this
    kernel = functools.partial(_tap_conv_kernel, KH=KH, KW=KW, PB=PB, W=W, Wp=Wp, relu=relu)
    return pl.pallas_call(
        kernel,
        out_shape=jax.ShapeDtypeStruct((B, H, W, Cout), jnp.bfloat16),
        grid=(B, Cout // TN),
        in_specs=[
            pl.BlockSpec((None, H, W, C), lambda b, j: (b, 0, 0, 0)),    # whole image
            pl.BlockSpec((KH, KW * C, TN), lambda b, j: (0, 0, j)),      # row-tap weights
            pl.BlockSpec((1, TN), lambda b, j: (0, j)),                  # bias
        ],
        out_specs=pl.BlockSpec((None, H, W, TN), lambda b, j: (b, 0, 0, j)),
        scratch_shapes=[pltpu.VMEM((H + KH - 1, Wp, KW * C), jnp.bfloat16)],
        compiler_params=pltpu.CompilerParams(
            dimension_semantics=("parallel", "parallel"),
            vmem_limit_bytes=_VMEM_LIMIT,
        ),
    )


# ----------------------------------------------------------------------------
# Wrappers
# ----------------------------------------------------------------------------

def matmul_bias(a, b, bias, relu, res=None, out_dtype=jnp.bfloat16):
    """a: (M, K) bf16, b: (K, N) bf16, bias: (1, N) f32, res: (M, N) bf16 or None."""
    M, K = a.shape
    _, N = b.shape
    TN = _pick_tile(N, _TN_PREF)
    if TN is None:
        TN = 128 if N % 128 == 0 else N
    TM = _pick_tile(M, _TM_PREF)
    if TM is None:
        TM = _TM_PREF
    Mp = _round_up(M, TM)
    a_in = a if Mp == M else jnp.pad(a, ((0, Mp - M), (0, 0)))
    args = [a_in.astype(jnp.bfloat16), b, bias]
    fuse_res = res is not None
    if fuse_res:
        r = res if Mp == M else jnp.pad(res, ((0, Mp - M), (0, 0)))
        args.append(r.astype(jnp.bfloat16))
    out = _build_matmul(Mp, K, N, TM, TN, bool(relu), fuse_res, out_dtype)(*args)
    return out if Mp == M else out[:M]


def conv1x1_bn(x, wmat, bias, stride, relu, res=None):
    """1x1 conv + folded BN (+ReLU, + optional fused residual). x: NHWC bf16."""
    if stride != 1:
        # TODO(synk): fold this strided subsample into the matmul's A read.
        x = x[:, ::stride, ::stride, :]
    B, H, W, C = x.shape
    Cout = wmat.shape[1]
    a = x.reshape(B * H * W, C)
    r = None if res is None else res.reshape(B * H * W, Cout)
    y = matmul_bias(a, wmat, bias, relu, res=r)
    return y.reshape(B, H, W, Cout)


def tap_conv_bn(x, wt, bias, kh, kw, pb, relu):
    """Stride-1 khxkw conv + folded BN (+ReLU) via the packed-tap Pallas kernel."""
    B, H, W, C = x.shape
    Cout = wt.shape[-1]
    assert wt.shape == (kh, kw * C, Cout), (wt.shape, (kh, kw * C, Cout))
    TN = _pick_tile(Cout, _TN_PREF)
    if TN is None:
        TN = 128 if Cout % 128 == 0 else Cout
    return _build_tap_conv(B, H, W, C, Cout, TN, kh, kw, pb, bool(relu))(x, wt, bias)


def space_to_depth(x):
    """(B, H, W, C) -> (B, H/2, W/2, 4C) with channel order (rh, rw, c)."""
    B, H, W, C = x.shape
    x = x.reshape(B, H // 2, 2, W // 2, 2, C)
    x = jnp.transpose(x, (0, 1, 3, 2, 4, 5))
    return x.reshape(B, H // 2, W // 2, 4 * C)


def im2col(x, kh, kw, stride, padding):
    """x: NHWC bf16 -> (B*Ho*Wo, kh*kw*C) patches in (tap, channel) column order."""
    B, H, W, C = x.shape
    xp = jnp.pad(x, ((0, 0), (padding, padding), (padding, padding), (0, 0)))
    Ho = (H + 2 * padding - kh) // stride + 1
    Wo = (W + 2 * padding - kw) // stride + 1
    cols = []
    for i in range(kh):
        for j in range(kw):
            cols.append(xp[:, i:i + stride * (Ho - 1) + 1:stride,
                           j:j + stride * (Wo - 1) + 1:stride, :])
    cols = jnp.concatenate(cols, axis=-1)
    return cols.reshape(B * Ho * Wo, kh * kw * C), Ho, Wo


def conv_im2col_bn(x, wmat, bias, kh, kw, stride, padding, relu):
    """Fallback conv via im2col + Pallas matmul (degenerate/odd spatial sizes only)."""
    B = x.shape[0]
    cols, Ho, Wo = im2col(x, kh, kw, stride, padding)
    y = matmul_bias(cols, wmat, bias, relu)
    return y.reshape(B, Ho, Wo, wmat.shape[1])


def maxpool_3x3_s2(x):
    # PyTorch MaxPool2d(kernel_size=3, stride=2, padding=1): pads with -inf.
    return lax.reduce_window(
        x, jnp.array(-jnp.inf, x.dtype), lax.max,
        window_dimensions=(1, 3, 3, 1),
        window_strides=(1, 2, 2, 1),
        padding=((0, 0), (1, 1), (1, 1), (0, 0)),
    )


# ----------------------------------------------------------------------------
# ResNet-50 forward
# ----------------------------------------------------------------------------

def conv2_3x3(x, p, relu=True):
    """The 3x3 conv of a bottleneck (stride 1 or 2), BN folded."""
    stride = p["stride"]
    B, H, W, C = x.shape
    if stride == 1:
        if min(H, W) >= 3:
            return tap_conv_bn(x, p["conv2_wt"], p["conv2_b"], 3, 3, 1, relu)
        return conv_im2col_bn(x, p["conv2_wm"], p["conv2_b"], 3, 3, 1, 1, relu)
    # stride 2: fold via space-to-depth -> 2x2 stride-1 conv over 4*Cin channels
    if H % 2 == 0 and W % 2 == 0 and min(H, W) >= 4:
        return tap_conv_bn(space_to_depth(x), p["conv2_wt"], p["conv2_b"], 2, 2, 1, relu)
    return conv_im2col_bn(x, p["conv2_wm"], p["conv2_b"], 3, 3, stride, 1, relu)


def bottleneck(x, p):
    if "down_w" in p:
        identity = conv1x1_bn(x, p["down_w"], p["down_b"], p["stride"], relu=False)
    else:
        identity = x
    out = conv1x1_bn(x, p["conv1_w"], p["conv1_b"], 1, relu=True)
    out = conv2_3x3(out, p, relu=True)
    # conv3 + BN + residual add + ReLU fused into one Pallas matmul epilogue.
    out = conv1x1_bn(out, p["conv3_w"], p["conv3_b"], 1, relu=True, res=identity)
    return out


def resnet50_forward(params, x_nchw):
    x = jnp.transpose(x_nchw, (0, 2, 3, 1)).astype(jnp.bfloat16)   # NCHW -> NHWC, bf16
    B, H, W, _ = x.shape
    if H % 2 == 0 and W % 2 == 0 and min(H, W) >= 8:
        # 7x7/stride-2 stem folded via space-to-depth into a 4x4 stride-1 conv (pad 2/1).
        x = tap_conv_bn(space_to_depth(x), params["stem_wt"], params["stem_b"], 4, 4, 2, True)
    else:
        x = conv_im2col_bn(x, params["stem_wm"], params["stem_b"], 7, 7, 2, 3, relu=True)
    x = maxpool_3x3_s2(x)
    for stage in params["layers"]:
        for blk in stage:
            x = bottleneck(x, blk)
    pooled = jnp.mean(x.astype(jnp.float32), axis=(1, 2))          # AdaptiveAvgPool2d((1,1))
    # Dropout in eval mode == identity.
    logits = matmul_bias(pooled.astype(jnp.bfloat16), params["fc_w"], params["fc_b"],
                         relu=False, out_dtype=jnp.float32)
    return logits


# ----------------------------------------------------------------------------
# Deterministic synthetic parameters, pre-transformed into kernel-ready layout
# ----------------------------------------------------------------------------

def _prep_matmul_conv(w, scale, bias):
    """(Cout, Cin, kh, kw) -> (kh*kw*Cin, Cout) bf16 with BN scale folded; bias (1, Cout) f32."""
    Cout, Cin, kh, kw = w.shape
    wmat = jnp.transpose(w, (2, 3, 1, 0)).reshape(kh * kw * Cin, Cout)
    wmat = (wmat * scale[None, :]).astype(jnp.bfloat16)
    return wmat, bias.reshape(1, Cout).astype(jnp.float32)


def _prep_tap_conv_s1(w, scale, bias):
    """(Cout, Cin, 3, 3) stride-1 -> (3, 3*Cin, Cout) bf16 (column taps packed along K)."""
    Cout, Cin, kh, kw = w.shape
    wt = jnp.transpose(w, (2, 3, 1, 0)).reshape(kh, kw * Cin, Cout)
    wt = (wt * scale[None, None, :]).astype(jnp.bfloat16)
    return wt, bias.reshape(1, Cout).astype(jnp.float32)


def _prep_s2d_tap_conv(w, scale, bias):
    """Stride-2 (Cout, Cin, k, k) conv -> tap weights of the equivalent stride-1 KHxKH conv
    over the space-to-depth (4*Cin channel) input: (KH, KH*4*Cin, Cout), BN folded.
    k=7 (pad 3) -> KH=4 (pad 2/1);  k=3 (pad 1) -> KH=2 (pad 1/0)."""
    Cout, Cin, k, _ = w.shape
    p = (k - 1) // 2
    pb = (p + 1) // 2
    KH = (k - 1 - p) // 2 + pb + 1
    off = 2 * pb - p
    wt = jnp.transpose(w, (2, 3, 1, 0))     # (k, k, Cin, Cout)
    w4 = jnp.zeros((KH, KH, 2, 2, Cin, Cout), jnp.float32)
    for ti in range(KH):
        for tj in range(KH):
            for rh in range(2):
                for rw in range(2):
                    di = 2 * ti + rh - off
                    dj = 2 * tj + rw - off
                    if 0 <= di < k and 0 <= dj < k:
                        w4 = w4.at[ti, tj, rh, rw].set(wt[di, dj])
    wk = w4.reshape(KH, KH * 4 * Cin, Cout)     # K order: (tj, rh, rw, c) == s2d channels
    wk = (wk * scale[None, None, :]).astype(jnp.bfloat16)
    return wk, bias.reshape(1, Cout).astype(jnp.float32)


def init_resnet50_params(key, num_classes):
    state = {"key": key}

    def nk():
        state["key"], sub = jax.random.split(state["key"])
        return sub

    def conv_w(cout, cin, kh, kw):
        fan = cin * kh * kw
        return jax.random.normal(nk(), (cout, cin, kh, kw), jnp.float32) / jnp.sqrt(fan)

    def bn_fold(c):
        gamma = 1.0 + 0.1 * jax.random.normal(nk(), (c,), jnp.float32)
        beta = 0.1 * jax.random.normal(nk(), (c,), jnp.float32)
        mean = 0.01 * jax.random.normal(nk(), (c,), jnp.float32)
        var = jnp.ones((c,), jnp.float32)
        scale = gamma / jnp.sqrt(var + 1e-5)
        bias = beta - mean * scale
        return scale, bias

    params = {}
    w = conv_w(64, 3, 7, 7)
    s, b = bn_fold(64)
    params["stem_wt"], params["stem_b"] = _prep_s2d_tap_conv(w, s, b)   # s2d 4x4 layout
    params["stem_wm"], _ = _prep_matmul_conv(w, s, b)                   # im2col fallback

    expansion = 4
    cfg = [(64, 3, 1), (128, 4, 2), (256, 6, 2), (512, 3, 2)]
    in_c = 64
    layers = []
    for width, n_blocks, first_stride in cfg:
        stage = []
        for blk_i in range(n_blocks):
            stride = first_stride if blk_i == 0 else 1
            out_c = width * expansion
            blk = {"stride": stride}
            w = conv_w(width, in_c, 1, 1); s, b = bn_fold(width)
            blk["conv1_w"], blk["conv1_b"] = _prep_matmul_conv(w, s, b)
            w = conv_w(width, width, 3, 3); s, b = bn_fold(width)
            if stride == 1:
                blk["conv2_wt"], blk["conv2_b"] = _prep_tap_conv_s1(w, s, b)
            else:
                blk["conv2_wt"], blk["conv2_b"] = _prep_s2d_tap_conv(w, s, b)
            blk["conv2_wm"], _ = _prep_matmul_conv(w, s, b)             # im2col fallback
            w = conv_w(out_c, width, 1, 1); s, b = bn_fold(out_c)
            blk["conv3_w"], blk["conv3_b"] = _prep_matmul_conv(w, s, b)
            if stride != 1 or in_c != out_c:
                w = conv_w(out_c, in_c, 1, 1); s, b = bn_fold(out_c)
                blk["down_w"], blk["down_b"] = _prep_matmul_conv(w, s, b)
            stage.append(blk)
            in_c = out_c
        layers.append(stage)
    params["layers"] = layers

    w_fc = jax.random.normal(nk(), (num_classes, 512 * expansion), jnp.float32) / jnp.sqrt(2048.0)
    b_fc = 0.01 * jax.random.normal(nk(), (num_classes,), jnp.float32)
    params["fc_w"] = jnp.transpose(w_fc).astype(jnp.bfloat16)          # (2048, num_classes)
    params["fc_b"] = b_fc.reshape(1, num_classes).astype(jnp.float32)
    return params


# ----------------------------------------------------------------------------
# Main
# ----------------------------------------------------------------------------

if __name__ == "__main__":
    num_classes = 10
    key = jax.random.PRNGKey(0)
    k_params, k_x = jax.random.split(key)

    params = init_resnet50_params(k_params, num_classes)

    # Small NCHW input; 32x32 spatial survives the 5 downsamplings of ResNet-50.
    # NOTE: tune/benchmark at realistic shapes (224x224, batch >= 8); this size is
    # only a correctness smoke test.
    x = jax.random.normal(k_x, (2, 3, 32, 32), jnp.float32)

    logits = resnet50_forward(params, x)
    logits = jax.block_until_ready(logits)

    assert logits.shape == (2, num_classes), logits.shape
    assert bool(jnp.all(jnp.isfinite(logits)))
    print("KERNEL_OK")
</pallas_src>

<mosaic_0001>
module attributes {stable_mosaic.version = 11 : i64} {
  func.func @_tap_conv_kernel(%arg0: i32, %arg1: i32, %arg2: memref<1x16x16x12xbf16, #tpu.memory_space<vmem>>, %arg3: memref<4x48x64xbf16, #tpu.memory_space<vmem>>, %arg4: memref<1x64xf32, #tpu.memory_space<vmem>>, %arg5: memref<1x16x16x64xbf16, #tpu.memory_space<vmem>>, %arg6: memref<19x24x48xbf16, #tpu.memory_space<vmem>>) attributes {dimension_semantics = [#tpu.dimension_semantics<parallel>, #tpu.dimension_semantics<parallel>], iteration_bounds = array<i64: 2, 1>, scalar_prefetch = 0 : i64, scratch_operands = 1 : i64, tpu.core_type = #tpu.core_type<tc>, window_params = [{transform_indices = @transform_0, window_bounds = array<i64: 1, 16, 16, 12>}, {transform_indices = @transform_1, window_bounds = array<i64: 4, 48, 64>}, {transform_indices = @transform_2, window_bounds = array<i64: 1, 64>}, {transform_indices = @transform_3, window_bounds = array<i64: 1, 16, 16, 64>}]} {
    %cst = arith.constant 0.000000e+00 : bf16
    %0 = vector.broadcast %cst : bf16 to vector<19x24x48xbf16>
    %c0 = arith.constant 0 : index
    %c0_0 = arith.constant 0 : index
    %c0_1 = arith.constant 0 : index
    %1 = vector.load %arg6[%c0, %c0_0, %c0_1] : memref<19x24x48xbf16, #tpu.memory_space<vmem>>, vector<19x24x48xbf16>
    tpu.vector_store %arg6[%c0, %c0_0, %c0_1], %0 {strides = array<i32>} : memref<19x24x48xbf16, #tpu.memory_space<vmem>>, vector<19x24x48xbf16>,
    %c0_2 = arith.constant 0 : index
    %c0_3 = arith.constant 0 : index
    %c0_4 = arith.constant 0 : index
    %c0_5 = arith.constant 0 : index
    %2 = vector.load %arg2[%c0_2, %c0_3, %c0_4, %c0_5] : memref<1x16x16x12xbf16, #tpu.memory_space<vmem>>, vector<1x16x16x12xbf16>
    %3 = vector.shape_cast %2 : vector<1x16x16x12xbf16> to vector<16x16x12xbf16>
    %c2 = arith.constant 2 : index
    %c2_6 = arith.constant 2 : index
    %c0_7 = arith.constant 0 : index
    %4 = vector.load %arg6[%c2, %c2_6, %c0_7] : memref<19x24x48xbf16, #tpu.memory_space<vmem>>, vector<16x16x12xbf16>
    tpu.vector_store %arg6[%c2, %c2_6, %c0_7], %3 {strides = array<i32>} : memref<19x24x48xbf16, #tpu.memory_space<vmem>>, vector<16x16x12xbf16>,
    %c0_8 = arith.constant 0 : index
    %c0_9 = arith.constant 0 : index
    %c0_10 = arith.constant 0 : index
    %c0_11 = arith.constant 0 : index
    %5 = vector.load %arg2[%c0_8, %c0_9, %c0_10, %c0_11] : memref<1x16x16x12xbf16, #tpu.memory_space<vmem>>, vector<1x16x16x12xbf16>
    %6 = vector.shape_cast %5 : vector<1x16x16x12xbf16> to vector<16x16x12xbf16>
    %c2_12 = arith.constant 2 : index
    %c1 = arith.constant 1 : index
    %c12 = arith.constant 12 : index
    %7 = vector.load %arg6[%c2_12, %c1, %c12] : memref<19x24x48xbf16, #tpu.memory_space<vmem>>, vector<16x16x12xbf16>
    tpu.vector_store %arg6[%c2_12, %c1, %c12], %6 {strides = array<i32>} : memref<19x24x48xbf16, #tpu.memory_space<vmem>>, vector<16x16x12xbf16>,
    %c0_13 = arith.constant 0 : index
    %c0_14 = arith.constant 0 : index
    %c0_15 = arith.constant 0 : index
    %c0_16 = arith.constant 0 : index
    %8 = vector.load %arg2[%c0_13, %c0_14, %c0_15, %c0_16] : memref<1x16x16x12xbf16, #tpu.memory_space<vmem>>, vector<1x16x16x12xbf16>
    %9 = vector.shape_cast %8 : vector<1x16x16x12xbf16> to vector<16x16x12xbf16>
    %c2_17 = arith.constant 2 : index
    %c0_18 = arith.constant 0 : index
    %c24 = arith.constant 24 : index
    %10 = vector.load %arg6[%c2_17, %c0_18, %c24] : memref<19x24x48xbf16, #tpu.memory_space<vmem>>, vector<16x16x12xbf16>
    tpu.vector_store %arg6[%c2_17, %c0_18, %c24], %9 {strides = array<i32>} : memref<19x24x48xbf16, #tpu.memory_space<vmem>>, vector<16x16x12xbf16>,
    %c0_19 = arith.constant 0 : index
    %c0_20 = arith.constant 0 : index
    %c1_21 = arith.constant 1 : index
    %c0_22 = arith.constant 0 : index
    %11 = vector.load %arg2[%c0_19, %c0_20, %c1_21, %c0_22] : memref<1x16x16x12xbf16, #tpu.memory_space<vmem>>, vector<1x16x15x12xbf16>
    %12 = vector.shape_cast %11 : vector<1x16x15x12xbf16> to vector<16x15x12xbf16>
    %c2_23 = arith.constant 2 : index
    %c0_24 = arith.constant 0 : index
    %c36 = arith.constant 36 : index
    %13 = vector.load %arg6[%c2_23, %c0_24, %c36] : memref<19x24x48xbf16, #tpu.memory_space<vmem>>, vector<16x15x12xbf16>
    tpu.vector_store %arg6[%c2_23, %c0_24, %c36], %12 {strides = array<i32>} : memref<19x24x48xbf16, #tpu.memory_space<vmem>>, vector<16x15x12xbf16>,
    %cst_25 = arith.constant 0.000000e+00 : f32
    %14 = vector.broadcast %cst_25 : f32 to vector<384x64xf32>
    %c0_26 = arith.constant 0 : index
    %c0_27 = arith.constant 0 : index
    %c0_28 = arith.constant 0 : index
    %15 = vector.load %arg6[%c0_26, %c0_27, %c0_28] : memref<19x24x48xbf16, #tpu.memory_space<vmem>>, vector<16x24x48xbf16>
    %16 = vector.shape_cast %15 : vector<16x24x48xbf16> to vector<384x48xbf16>
    %c0_29 = arith.constant 0 : index
    %c0_30 = arith.constant 0 : index
    %c0_31 = arith.constant 0 : index
    %17 = vector.load %arg3[%c0_29, %c0_30, %c0_31] : memref<4x48x64xbf16, #tpu.memory_space<vmem>>, vector<1x48x64xbf16>
    %18 = vector.shape_cast %17 : vector<1x48x64xbf16> to vector<48x64xbf16>
    %cst_32 = arith.constant dense<0.000000e+00> : vector<384x64xf32>
    %19 = tpu.matmul %16, %18, %cst_32 {dimension_numbers = #tpu.dot_dimension_numbers<[1], [0], [0], [1], [0, 0, 1, 1], [], []>} : vector<384x48xbf16>, vector<48x64xbf16>, vector<384x64xf32> -> vector<384x64xf32>
    %20 = arith.addf %14, %19 : vector<384x64xf32>
    %c1_33 = arith.constant 1 : index
    %c0_34 = arith.constant 0 : index
    %c0_35 = arith.constant 0 : index
    %21 = vector.load %arg6[%c1_33, %c0_34, %c0_35] : memref<19x24x48xbf16, #tpu.memory_space<vmem>>, vector<16x24x48xbf16>
    %22 = vector.shape_cast %21 : vector<16x24x48xbf16> to vector<384x48xbf16>
    %c1_36 = arith.constant 1 : index
    %c0_37 = arith.constant 0 : index
    %c0_38 = arith.constant 0 : index
    %23 = vector.load %arg3[%c1_36, %c0_37, %c0_38] : memref<4x48x64xbf16, #tpu.memory_space<vmem>>, vector<1x48x64xbf16>
    %24 = vector.shape_cast %23 : vector<1x48x64xbf16> to vector<48x64xbf16>
    %cst_39 = arith.constant dense<0.000000e+00> : vector<384x64xf32>
    %25 = tpu.matmul %22, %24, %cst_39 {dimension_numbers = #tpu.dot_dimension_numbers<[1], [0], [0], [1], [0, 0, 1, 1], [], []>} : vector<384x48xbf16>, vector<48x64xbf16>, vector<384x64xf32> -> vector<384x64xf32>
    %26 = arith.addf %20, %25 : vector<384x64xf32>
    %c2_40 = arith.constant 2 : index
    %c0_41 = arith.constant 0 : index
    %c0_42 = arith.constant 0 : index
    %27 = vector.load %arg6[%c2_40, %c0_41, %c0_42] : memref<19x24x48xbf16, #tpu.memory_space<vmem>>, vector<16x24x48xbf16>
    %28 = vector.shape_cast %27 : vector<16x24x48xbf16> to vector<384x48xbf16>
    %c2_43 = arith.constant 2 : index
    %c0_44 = arith.constant 0 : index
    %c0_45 = arith.constant 0 : index
    %29 = vector.load %arg3[%c2_43, %c0_44, %c0_45] : memref<4x48x64xbf16, #tpu.memory_space<vmem>>, vector<1x48x64xbf16>
    %30 = vector.shape_cast %29 : vector<1x48x64xbf16> to vector<48x64xbf16>
    %cst_46 = arith.constant dense<0.000000e+00> : vector<384x64xf32>
    %31 = tpu.matmul %28, %30, %cst_46 {dimension_numbers = #tpu.dot_dimension_numbers<[1], [0], [0], [1], [0, 0, 1, 1], [], []>} : vector<384x48xbf16>, vector<48x64xbf16>, vector<384x64xf32> -> vector<384x64xf32>
    %32 = arith.addf %26, %31 : vector<384x64xf32>
    %c3 = arith.constant 3 : index
    %c0_47 = arith.constant 0 : index
    %c0_48 = arith.constant 0 : index
    %33 = vector.load %arg6[%c3, %c0_47, %c0_48] : memref<19x24x48xbf16, #tpu.memory_space<vmem>>, vector<16x24x48xbf16>
    %34 = vector.shape_cast %33 : vector<16x24x48xbf16> to vector<384x48xbf16>
    %c3_49 = arith.constant 3 : index
    %c0_50 = arith.constant 0 : index
    %c0_51 = arith.constant 0 : index
    %35 = vector.load %arg3[%c3_49, %c0_50, %c0_51] : memref<4x48x64xbf16, #tpu.memory_space<vmem>>, vector<1x48x64xbf16>
    %36 = vector.shape_cast %35 : vector<1x48x64xbf16> to vector<48x64xbf16>
    %cst_52 = arith.constant dense<0.000000e+00> : vector<384x64xf32>
    %37 = tpu.matmul %34, %36, %cst_52 {dimension_numbers = #tpu.dot_dimension_numbers<[1], [0], [0], [1], [0, 0, 1, 1], [], []>} : vector<384x48xbf16>, vector<48x64xbf16>, vector<384x64xf32> -> vector<384x64xf32>
    %38 = arith.addf %32, %37 : vector<384x64xf32>
    %c0_53 = arith.constant 0 : index
    %c0_54 = arith.constant 0 : index
    %39 = vector.load %arg4[%c0_53, %c0_54] : memref<1x64xf32, #tpu.memory_space<vmem>>, vector<1x64xf32>
    %40 = vector.broadcast %39 : vector<1x64xf32> to vector<384x64xf32>
    %41 = arith.addf %38, %40 : vector<384x64xf32>
    %cst_55 = arith.constant 0.000000e+00 : f32
    %42 = vector.broadcast %cst_55 : f32 to vector<384x64xf32>
    %43 = arith.maximumf %41, %42 : vector<384x64xf32>
    %44 = vector.shape_cast %43 : vector<384x64xf32> to vector<16x24x64xf32>
    %45 = vector.extract_strided_slice %44 {offsets = [0, 0, 0], sizes = [16, 16, 64], strides = [1, 1, 1]} : vector<16x24x64xf32> to vector<16x16x64xf32>
    %46 = arith.truncf %45 : vector<16x16x64xf32> to vector<16x16x64xbf16>
    %c0_56 = arith.constant 0 : index
    %c0_57 = arith.constant 0 : index
    %c0_58 = arith.constant 0 : index
    %c0_59 = arith.constant 0 : index
    %47 = vector.load %arg5[%c0_56, %c0_57, %c0_58, %c0_59] : memref<1x16x16x64xbf16, #tpu.memory_space<vmem>>, vector<1x16x16x64xbf16>
    %48 = vector.shape_cast %47 : vector<1x16x16x64xbf16> to vector<16x16x64xbf16>
    %49 = vector.shape_cast %46 : vector<16x16x64xbf16> to vector<1x16x16x64xbf16>
    tpu.vector_store %arg5[%c0_56, %c0_57, %c0_58, %c0_59], %49 {strides = array<i32>} : memref<1x16x16x64xbf16, #tpu.memory_space<vmem>>, vector<1x16x16x64xbf16>,
    return
  }
  func.func @transform_0(%arg0: i32, %arg1: i32) -> (i32, i32, i32, i32) {
    %c0_i32 = arith.constant 0 : i32
    %c0_i32_0 = arith.constant 0 : i32
    %c0_i32_1 = arith.constant 0 : i32
    %c0_i32_2 = arith.constant 0 : i32
    return %arg0, %c0_i32, %c0_i32_0, %c0_i32_1 : i32, i32, i32, i32
  }
  func.func @transform_1(%arg0: i32, %arg1: i32) -> (i32, i32, i32) {
    %c0_i32 = arith.constant 0 : i32
    %c0_i32_0 = arith.constant 0 : i32
    %c0_i32_1 = arith.constant 0 : i32
    return %c0_i32, %c0_i32_0, %arg1 : i32, i32, i32
  }
  func.func @transform_2(%arg0: i32, %arg1: i32) -> (i32, i32) {
    %c0_i32 = arith.constant 0 : i32
    %c0_i32_0 = arith.constant 0 : i32
    return %c0_i32, %arg1 : i32, i32
  }
  func.func @transform_3(%arg0: i32, %arg1: i32) -> (i32, i32, i32, i32) {
    %c0_i32 = arith.constant 0 : i32
    %c0_i32_0 = arith.constant 0 : i32
    %c0_i32_1 = arith.constant 0 : i32
    return %arg0, %c0_i32, %c0_i32_0, %arg1 : i32, i32, i32, i32
  }
}

</mosaic_0001>

<llo_original>
// kernel: tpu_custom_call.1
$region0: #{tpu_custom_call.1}
  #allocation0 [shape = 'u32[]', space=smem, size = 0x4, offset = 0x4, fixed_abs, tag = 'smem constant byte address 0x4 - core index']
  #allocation1 [shape = 'u32[144,128]{1,0:T(1,128)}', space=vmem, size = 0x12000, scoped, tag = 'internal scratch']
  #allocation2 [shape = 'bf16[19,24,48]{2,1,0:T(8,128)(2,1)}', space=vmem, size = 0x1c800, scoped, tag = 'scratch operand']
  %s0 = inlined_call_operand.hbm [shape: bf16[2,16,16,12], index: 0, kind: input, shape index: {}]
  %s1 = inlined_call_operand.hbm [shape: bf16[4,48,64], index: 1, kind: input, shape index: {}]
  %s2 = inlined_call_operand.hbm [shape: f32[1,64], index: 2, kind: input, shape index: {}]
  %s3 = inlined_call_operand.hbm [shape: bf16[2,16,16,64], index: 3, kind: output, shape index: {}]
  %s4 = sld [smem:[#allocation0]]
  $region57: #{tpu_custom_call.1} parent=0
    _
  %s6 = ssub.s32 1, %s4
  %s7 = scalar_select 0, %s6, %s4
  $region1: #{tpu_custom_call.1} parent=0
    #allocation3 [shape = 'u8[131072]{0}', space=vmem, size = 0x20000, scoped, tag = 'input window, operand 0']
    #allocation4 [shape = 's32[2]{0}', space=sflag, size = 0x8, scoped, tag = 'scoped memory for tpu_custom_call.1']
    #allocation5 [shape = 's32[2]{0}', space=sflag, size = 0x8, scoped, tag = 'scoped memory for tpu_custom_call.1']
    #allocation6 [shape = 'u8[49152]{0}', space=vmem, size = 0xc000, scoped, tag = 'input window, operand 1, single buffered']
    #allocation7 [shape = 's32[1]{0}', space=sflag, size = 0x4, scoped, tag = 'scoped memory for tpu_custom_call.1']
    #allocation8 [shape = 'u8[512]{0}', space=vmem, size = 0x400, scoped, tag = 'input window, operand 2, single buffered']
    #allocation9 [shape = 'u8[131072]{0}', space=vmem, size = 0x20000, scoped, tag = 'output window, operand 0']
    %8 = vsyncpa [#allocation4], 0
    %s9 = scalar_lea.sflag [#allocation4], 1
    %10 = vsyncpa %s9, 0
    %11 = vsyncpa [#allocation7], 0
    %12 = vsyncpa [#allocation5], 0
    %s13 = scalar_lea.sflag [#allocation5], 1
    %14 = vsyncpa %s13, 0
    loop: start=0, step=1, limit=4
    $region2: #{tpu_custom_call.1} parent=1 // loop_pre_header
      _
    $region3: #{tpu_custom_call.1} parent=1 // loop_header
      %s16 = sphi 0, %s20
      %p17 = scmp.ge.s32.totalorder %s16, 4
      %s23 = sphi 0, %s35
      %s24 = sphi 0, %s31
      %s25 = sphi 0, %s23
      %s26 = sphi 0, %s24
      %s27 = sphi 0, %s25
      %s28 = sphi 0, %s26
      %s38 = sphi 0, %s40
      %s41 = sphi 0, %s38
      %s42 = sphi 0, %s41
      %s58 = sphi 0, %s42
      %s64 = sphi 0, %s66
      %s67 = sphi 0, %s64
      %s68 = sphi 0, %s67
      %s84 = sphi 0, %s68
      %s90 = sphi 0, %s92
      %s93 = sphi 0, %s90
      %s94 = sphi 0, %s93
      %s110 = sphi 0, %s94
      %s118 = sphi 0, %s120
      %s121 = sphi 0, %s118
      %s122 = sphi 0, %s121
      %s138 = sphi 0, %s122
    $region4: #{tpu_custom_call.1} parent=1 // loop_header_branch
      %19 = sbr.rel (%p17) target = $region8
    $region5: #{tpu_custom_call.1} parent=1 // loop_body
      %s21 = ssub.s32 %s16, 1
      %s22 = ssub.s32 %s16, 2
      %s29 = sadd.s32 1, %s24
      %p30 = scmp.ge.s32.totalorder %s29, 1
      %s31 = scalar_select %p30, 0, %s29
      %s32 = sadd.s32 1, %s23
      %s33 = scalar_select %p30, %s32, %s23
      %p34 = scmp.ge.s32.totalorder %s33, 2
      %s35 = scalar_select %p34, 0, %s33
      %s36 = ssub.s32 %s23, %s35
      %p37 = scmp.eq.s32.totalorder %s36, 0
      %s39 = sadd.s32 %s38, 1
      %s40 = scalar_select %p37, %s38, %s39
      %p43 = pneg %p37
      %p44 = scmp.eq.s32.totalorder %s16, 1
      %p45 = por %p43, %p44
      %p46 = scmp.ne.s32.totalorder %s38, %s41
      %p47 = scmp.eq.s32.totalorder %s16, 0
      %p48 = por %p46, %p47
      %p49 = scmp.ne.s32.totalorder %s38, %s41
      %p50 = scmp.eq.s32.totalorder %s21, 1
      %p51 = por %p49, %p50
      %p52 = scmp.ne.s32.totalorder %s41, %s42
      %p53 = scmp.eq.s32.totalorder %s21, 0
      %p54 = por %p52, %p53
      %p55 = scmp.ne.s32.totalorder %s41, %s42
      %p56 = scmp.eq.s32.totalorder %s22, 1
      %p57 = por %p55, %p56
      %p59 = scmp.ne.s32.totalorder %s42, %s58
      %p60 = scmp.eq.s32.totalorder %s22, 0
      %p61 = por %p59, %p60
      %s62 = ssub.s32 %s24, %s31
      %p63 = scmp.eq.s32.totalorder %s62, 0
      %s65 = sadd.s32 %s64, 1
      %s66 = scalar_select %p63, %s64, %s65
      %p69 = pneg %p63
      %p70 = scmp.eq.s32.totalorder %s16, 1
      %p71 = por %p69, %p70
      %p72 = scmp.ne.s32.totalorder %s64, %s67
      %p73 = scmp.eq.s32.totalorder %s16, 0
      %p74 = por %p72, %p73
      %p75 = scmp.ne.s32.totalorder %s64, %s67
      %p76 = scmp.eq.s32.totalorder %s21, 1
      %p77 = por %p75, %p76
      %p78 = scmp.ne.s32.totalorder %s67, %s68
      %p79 = scmp.eq.s32.totalorder %s21, 0
      %p80 = por %p78, %p79
      %p81 = scmp.ne.s32.totalorder %s67, %s68
      %p82 = scmp.eq.s32.totalorder %s22, 1
      %p83 = por %p81, %p82
      %p85 = scmp.ne.s32.totalorder %s68, %s84
      %p86 = scmp.eq.s32.totalorder %s22, 0
      %p87 = por %p85, %p86
      %s88 = ssub.s32 %s24, %s31
      %p89 = scmp.eq.s32.totalorder %s88, 0
      %s91 = sadd.s32 %s90, 1
      %s92 = scalar_select %p89, %s90, %s91
      %p95 = pneg %p89
      %p96 = scmp.eq.s32.totalorder %s16, 1
      %p97 = por %p95, %p96
      %p98 = scmp.ne.s32.totalorder %s90, %s93
      %p99 = scmp.eq.s32.totalorder %s16, 0
      %p100 = por %p98, %p99
      %p101 = scmp.ne.s32.totalorder %s90, %s93
      %p102 = scmp.eq.s32.totalorder %s21, 1
      %p103 = por %p101, %p102
      %p104 = scmp.ne.s32.totalorder %s93, %s94
      %p105 = scmp.eq.s32.totalorder %s21, 0
      %p106 = por %p104, %p105
      %p107 = scmp.ne.s32.totalorder %s93, %s94
      %p108 = scmp.eq.s32.totalorder %s22, 1
      %p109 = por %p107, %p108
      %p111 = scmp.ne.s32.totalorder %s94, %s110
      %p112 = scmp.eq.s32.totalorder %s22, 0
      %p113 = por %p111, %p112
      %s114 = ssub.s32 %s23, %s35
      %s115 = ssub.s32 %s24, %s31
      %s116 = sor.u32 %s114, %s115
      %p117 = scmp.eq.s32.totalorder %s116, 0
      %s119 = sadd.s32 %s118, 1
      %s120 = scalar_select %p117, %s118, %s119
      %p123 = pneg %p117
      %p124 = scmp.eq.s32.totalorder %s16, 1
      %p125 = por %p123, %p124
      %p126 = scmp.ne.s32.totalorder %s118, %s121
      %p127 = scmp.eq.s32.totalorder %s16, 0
      %p128 = por %p126, %p127
      %p129 = scmp.ne.s32.totalorder %s118, %s121
      %p130 = scmp.eq.s32.totalorder %s21, 1
      %p131 = por %p129, %p130
      %p132 = scmp.ne.s32.totalorder %s121, %s122
      %p133 = scmp.eq.s32.totalorder %s21, 0
      %p134 = por %p132, %p133
      %p135 = scmp.ne.s32.totalorder %s121, %s122
      %p136 = scmp.eq.s32.totalorder %s22, 1
      %p137 = por %p135, %p136
      %p139 = scmp.ne.s32.totalorder %s122, %s138
      %p140 = scmp.eq.s32.totalorder %s22, 0
      %p141 = por %p139, %p140
      %p142 = scmp.le.s32.totalorder 1, %s16
      %p143 = scmp.lt.s32.totalorder %s16, 3
      %p144 = pnand %p142, %p143
      %p145 = pneg %p144
      // Predicated region
      $region9: #{tpu_custom_call.1} parent=5 // pred_check
        _
      $region10: #{tpu_custom_call.1} parent=5 // pred_check_branch
        %147 = sbr.rel (%p144) target = $region12
      $region11: #{tpu_custom_call.1} parent=5 // pred_region
        %s148 = ssub.s32 %s16, 1
        // Predicated region
        $region13: #{tpu_custom_call.1} parent=11 // pred_check
          %p149 = pneg %p80
        $region14: #{tpu_custom_call.1} parent=11 // pred_check_branch
          %151 = sbr.rel (%p149) target = $region16
        $region15: #{tpu_custom_call.1} parent=11 // pred_region
          %s153 = ssub.s32 1536, 1536
          %154 = vsyncadd [#allocation7], %s153
          %s155 = smul.addr %s26, 64
          %s156 = scalar_lea.hbm %s1, %s155
          %s157 = sshll.u32 [#allocation6], 4
          %s158 = int_to_ptr.vmem [resolvable:$true] %s157
          %163 = dma.hbm_to_vmem [thread:$0]  %s156, 1536, %s158, [#allocation7], 64, 64, 4
        $region16: #{tpu_custom_call.1} parent=11 // pred_fallthru
          _
        // Predicated region
        $region17: #{tpu_custom_call.1} parent=11 // pred_check
          %p164 = pneg %p106
        $region18: #{tpu_custom_call.1} parent=11 // pred_check_branch
          %166 = sbr.rel (%p164) target = $region20
        $region19: #{tpu_custom_call.1} parent=11 // pred_region
          %s168 = ssub.s32 16, 16
          %169 = vsyncadd [#allocation7], %s168
          %s170 = smul.addr %s26, 16
          %s171 = scalar_lea.hbm %s2, %s170
          %s173 = sshll.u32 [#allocation8], 4
          %s174 = int_to_ptr.vmem [resolvable:$true] %s173
          %176 = dma.hbm_to_vmem [thread:$0]  %s171, 16, %s174, [#allocation7]
        $region20: #{tpu_custom_call.1} parent=11 // pred_fallthru
          _
      $region12: #{tpu_custom_call.1} parent=5 // pred_fallthru
        _
      %p177 = scmp.lt.s32.totalorder %s16, 2
      // Predicated region
      $region21: #{tpu_custom_call.1} parent=5 // pred_check
        %p178 = pneg %p177
      $region22: #{tpu_custom_call.1} parent=5 // pred_check_branch
        %180 = sbr.rel (%p178) target = $region24
      $region23: #{tpu_custom_call.1} parent=5 // pred_region
        // Predicated region
        $region25: #{tpu_custom_call.1} parent=23 // pred_check
          %p181 = pneg %p48
        $region26: #{tpu_custom_call.1} parent=23 // pred_check_branch
          %183 = sbr.rel (%p181) target = $region28
        $region27: #{tpu_custom_call.1} parent=23 // pred_region
          %s184 = sand.u32 %s38, 1
          %s185 = scalar_lea.sflag [#allocation4], %s184
          %s186 = sand.u32 %s38, 1
          %s187 = smul.addr %s186, 128
          %s188 = scalar_lea.vmem [#allocation3], %s187
          %s190 = ssub.s32 2048, 2048
          %191 = vsyncadd %s185, %s190
          %s192 = smul.addr %s23, 32
          %s193 = smul.addr %s192, 64
          %s194 = scalar_lea.hbm %s0, %s193
          %s195 = sshll.u32 %s188, 4
          %s196 = int_to_ptr.vmem [resolvable:$true] %s195
          %201 = dma.hbm_to_vmem [thread:$0]  %s194, 2048, %s196, %s185, 64, 64, 4
        $region28: #{tpu_custom_call.1} parent=23 // pred_fallthru
          _
      $region24: #{tpu_custom_call.1} parent=5 // pred_fallthru
        _
      %p202 = scmp.le.s32.totalorder 1, %s16
      %p203 = scmp.lt.s32.totalorder %s16, 3
      %p204 = pnand %p202, %p203
      %p205 = pneg %p204
      // Predicated region
      $region29: #{tpu_custom_call.1} parent=5 // pred_check
        _
      $region30: #{tpu_custom_call.1} parent=5 // pred_check_branch
        %207 = sbr.rel (%p204) target = $region32
      $region31: #{tpu_custom_call.1} parent=5 // pred_region
        %s208 = ssub.s32 %s16, 1
        %s209 = sand.u32 %s41, 1
        %s210 = scalar_lea.sflag [#allocation4], %s209
        %s211 = sand.u32 %s41, 1
        %s212 = smul.addr %s211, 128
        %s213 = scalar_lea.vmem [#allocation3], %s212
        // Predicated region
        $region33: #{tpu_custom_call.1} parent=31 // pred_check
          %p214 = pneg %p54
        $region34: #{tpu_custom_call.1} parent=31 // pred_check_branch
          %216 = sbr.rel (%p214) target = $region36
        $region35: #{tpu_custom_call.1} parent=31 // pred_region
          %217 = dma.done %s210, 2048
        $region36: #{tpu_custom_call.1} parent=31 // pred_fallthru
          _
        // Predicated region
        $region37: #{tpu_custom_call.1} parent=31 // pred_check
          %p218 = pneg %p80
        $region38: #{tpu_custom_call.1} parent=31 // pred_check_branch
          %220 = sbr.rel (%p218) target = $region40
        $region39: #{tpu_custom_call.1} parent=31 // pred_region
          %221 = dma.done [#allocation7], 1536
        $region40: #{tpu_custom_call.1} parent=31 // pred_fallthru
          _
        // Predicated region
        $region41: #{tpu_custom_call.1} parent=31 // pred_check
          %p222 = pneg %p106
        $region42: #{tpu_custom_call.1} parent=31 // pred_check_branch
          %224 = sbr.rel (%p222) target = $region44
        $region43: #{tpu_custom_call.1} parent=31 // pred_region
          %225 = dma.done [#allocation7], 16
        $region44: #{tpu_custom_call.1} parent=31 // pred_fallthru
          _
        %s226 = sand.u32 %s41, 1
        %s227 = scalar_lea.sflag [#allocation4], %s226
        %s228 = sand.u32 %s41, 1
        %s229 = smul.addr %s228, 128
        %s230 = scalar_lea.vmem [#allocation3], %s229
        %p231 = pneg %p54
        %p232 = pneg %p51
        %p233 = pneg %p80
        %p234 = pneg %p77
        %p235 = pneg %p106
        %p236 = pneg %p103
        %p237 = pneg %p134
        %p238 = pneg %p131
        %s239 = sand.u32 %s121, 1
        %s240 = scalar_lea.sflag [#allocation5], %s239
        %s241 = sand.u32 %s121, 1
        %s242 = smul.addr %s241, 128
        %s243 = scalar_lea.vmem [#allocation9], %s242
        %vm245 = vcmask 388096
        %246 = vst.msk [vmem:[#allocation2] sm:$0xf] %vm245, 0
        %247 = vst.msk [vmem:[#allocation2 + $0x4] sm:$0xf] %vm245, 0
        %248 = vst.msk [vmem:[#allocation2 + $0x8] sm:$0xf] %vm245, 0
        %249 = vst.msk [vmem:[#allocation2 + $0xc] sm:$0xf] %vm245, 0
        %250 = vst.msk [vmem:[#allocation2 + $0x10] sm:$0xf] %vm245, 0
        %251 = vst.msk [vmem:[#allocation2 + $0x14] sm:$0xf] %vm245, 0
        %252 = vst.msk [vmem:[#allocation2 + $0x18] sm:$0xf] %vm245, 0
        %253 = vst.msk [vmem:[#allocation2 + $0x1c] sm:$0xf] %vm245, 0
        %254 = vst.msk [vmem:[#allocation2 + $0x20] sm:$0xf] %vm245, 0
        %255 = vst.msk [vmem:[#allocation2 + $0x24] sm:$0xf] %vm245, 0
        %256 = vst.msk [vmem:[#allocation2 + $0x28] sm:$0xf] %vm245, 0
        %257 = vst.msk [vmem:[#allocation2 + $0x2c] sm:$0xf] %vm245, 0
        %258 = vst.msk [vmem:[#allocation2 + $0x30] sm:$0xf] %vm245, 0
        %259 = vst.msk [vmem:[#allocation2 + $0x34] sm:$0xf] %vm245, 0
        %260 = vst.msk [vmem:[#allocation2 + $0x38] sm:$0xf] %vm245, 0
        %261 = vst.msk [vmem:[#allocation2 + $0x3c] sm:$0xf] %vm245, 0
        %262 = vst.msk [vmem:[#allocation2 + $0x40] sm:$0xf] %vm245, 0
        %263 = vst.msk [vmem:[#allocation2 + $0x44] sm:$0xf] %vm245, 0
        %264 = vst.msk [vmem:[#allocation2 + $0x48] sm:$0xf] %vm245, 0
        %265 = vst.msk [vmem:[#allocation2 + $0x4c] sm:$0xf] %vm245, 0
        %266 = vst.msk [vmem:[#allocation2 + $0x50] sm:$0xf] %vm245, 0
        %267 = vst.msk [vmem:[#allocation2 + $0x54] sm:$0xf] %vm245, 0
        %268 = vst.msk [vmem:[#allocation2 + $0x58] sm:$0xf] %vm245, 0
        %269 = vst.msk [vmem:[#allocation2 + $0x5c] sm:$0xf] %vm245, 0
        %270 = vst.msk [vmem:[#allocation2 + $0x60] sm:$0xf] %vm245, 0
        %271 = vst.msk [vmem:[#allocation2 + $0x64] sm:$0xf] %vm245, 0
        %272 = vst.msk [vmem:[#allocation2 + $0x68] sm:$0xf] %vm245, 0
        %273 = vst.msk [vmem:[#allocation2 + $0x6c] sm:$0xf] %vm245, 0
        %274 = vst.msk [vmem:[#allocation2 + $0x70] sm:$0xf] %vm245, 0
        %275 = vst.msk [vmem:[#allocation2 + $0x74] sm:$0xf] %vm245, 0
        %276 = vst.msk [vmem:[#allocation2 + $0x78] sm:$0xf] %vm245, 0
        %277 = vst.msk [vmem:[#allocation2 + $0x7c] sm:$0xf] %vm245, 0
        %278 = vst.msk [vmem:[#allocation2 + $0x80] sm:$0xf] %vm245, 0
        %279 = vst.msk [vmem:[#allocation2 + $0x84] sm:$0xf] %vm245, 0
        %280 = vst.msk [vmem:[#allocation2 + $0x88] sm:$0xf] %vm245, 0
        %281 = vst.msk [vmem:[#allocation2 + $0x8c] sm:$0xf] %vm245, 0
        %282 = vst.msk [vmem:[#allocation2 + $0x90] sm:$0xf] %vm245, 0
        %283 = vst.msk [vmem:[#allocation2 + $0x94] sm:$0xf] %vm245, 0
        %284 = vst.msk [vmem:[#allocation2 + $0x98] sm:$0xf] %vm245, 0
        %285 = vst.msk [vmem:[#allocation2 + $0x9c] sm:$0xf] %vm245, 0
        %286 = vst.msk [vmem:[#allocation2 + $0xa0] sm:$0xf] %vm245, 0
        %287 = vst.msk [vmem:[#allocation2 + $0xa4] sm:$0xf] %vm245, 0
        %288 = vst.msk [vmem:[#allocation2 + $0xa8] sm:$0xf] %vm245, 0
        %289 = vst.msk [vmem:[#allocation2 + $0xac] sm:$0xf] %vm245, 0
        %290 = vst.msk [vmem:[#allocation2 + $0xb0] sm:$0xf] %vm245, 0
        %291 = vst.msk [vmem:[#allocation2 + $0xb4] sm:$0xf] %vm245, 0
        %292 = vst.msk [vmem:[#allocation2 + $0xb8] sm:$0xf] %vm245, 0
        %293 = vst.msk [vmem:[#allocation2 + $0xbc] sm:$0xf] %vm245, 0
        %294 = vst.msk [vmem:[#allocation2 + $0xc0] sm:$0xf] %vm245, 0
        %295 = vst.msk [vmem:[#allocation2 + $0xc4] sm:$0xf] %vm245, 0
        %296 = vst.msk [vmem:[#allocation2 + $0xc8] sm:$0xf] %vm245, 0
        %297 = vst.msk [vmem:[#allocation2 + $0xcc] sm:$0xf] %vm245, 0
        %298 = vst.msk [vmem:[#allocation2 + $0xd0] sm:$0xf] %vm245, 0
        %299 = vst.msk [vmem:[#allocation2 + $0xd4] sm:$0xf] %vm245, 0
        %300 = vst.msk [vmem:[#allocation2 + $0xd8] sm:$0xf] %vm245, 0
        %301 = vst.msk [vmem:[#allocation2 + $0xdc] sm:$0xf] %vm245, 0
        %302 = vst.msk [vmem:[#allocation2 + $0xe0] sm:$0xf] %vm245, 0
        %v303 = vld [vmem:[%s213] sm:$0xf]
        %v304 = vld [vmem:[%s213 + $0x4] sm:$0xf]
        %v305 = vld [vmem:[%s213 + $0x8] sm:$0xf]
        %v306 = vld [vmem:[%s213 + $0xc] sm:$0xf]
        %v307 = vld [vmem:[%s213 + $0x10] sm:$0xf]
        %v308 = vld [vmem:[%s213 + $0x14] sm:$0xf]
        %v309 = vld [vmem:[%s213 + $0x18] sm:$0xf]
        %v310 = vld [vmem:[%s213 + $0x1c] sm:$0xf]
        %v311 = vld [vmem:[%s213 + $0x20] sm:$0xf]
        %v312 = vld [vmem:[%s213 + $0x24] sm:$0xf]
        %v313 = vld [vmem:[%s213 + $0x28] sm:$0xf]
        %v314 = vld [vmem:[%s213 + $0x2c] sm:$0xf]
        %v315 = vld [vmem:[%s213 + $0x30] sm:$0xf]
        %v316 = vld [vmem:[%s213 + $0x34] sm:$0xf]
        %v317 = vld [vmem:[%s213 + $0x38] sm:$0xf]
        %v318 = vld [vmem:[%s213 + $0x3c] sm:$0xf]
        %v319 = vld [vmem:[%s213 + $0x40] sm:$0xf]
        %v320 = vld [vmem:[%s213 + $0x44] sm:$0xf]
        %v321 = vld [vmem:[%s213 + $0x48] sm:$0xf]
        %v322 = vld [vmem:[%s213 + $0x4c] sm:$0xf]
        %v323 = vld [vmem:[%s213 + $0x50] sm:$0xf]
        %v324 = vld [vmem:[%s213 + $0x54] sm:$0xf]
        %v325 = vld [vmem:[%s213 + $0x58] sm:$0xf]
        %v326 = vld [vmem:[%s213 + $0x5c] sm:$0xf]
        %v327 = vld [vmem:[%s213 + $0x60] sm:$0xf]
        %v328 = vld [vmem:[%s213 + $0x64] sm:$0xf]
        %v329 = vld [vmem:[%s213 + $0x68] sm:$0xf]
        %v330 = vld [vmem:[%s213 + $0x6c] sm:$0xf]
        %v331 = vld [vmem:[%s213 + $0x70] sm:$0xf]
        %v332 = vld [vmem:[%s213 + $0x74] sm:$0xf]
        %v333 = vld [vmem:[%s213 + $0x78] sm:$0xf]
        %v334 = vld [vmem:[%s213 + $0x7c] sm:$0xf]
        %vm367 = vcmask 1040384
        %vm368 = vcmask 1044484
        %vm369 = vmor %vm367, %vm368
        %v370 = vrot.slane %v303, 7
        %v371 = vrot.slane %v370, 4
        %v372 = vrot.slane %v304, 7
        %v373 = vsel %vm369, %v371, %v372
        %v374 = vrot.slane %v372, 4
        %v375 = vrot.slane %v305, 7
        %v376 = vrot.slane %v375, 4
        %v377 = vrot.slane %v306, 7
        %v378 = vsel %vm369, %v376, %v377
        %v379 = vrot.slane %v377, 4
        %v380 = vrot.slane %v307, 7
        %v381 = vrot.slane %v380, 4
        %v382 = vrot.slane %v308, 7
        %v383 = vsel %vm369, %v381, %v382
        %v384 = vrot.slane %v382, 4
        %v385 = vrot.slane %v309, 7
        %v386 = vrot.slane %v385, 4
        %v387 = vrot.slane %v310, 7
        %v388 = vsel %vm369, %v386, %v387
        %v389 = vrot.slane %v387, 4
        %v390 = vrot.slane %v311, 7
        %v391 = vrot.slane %v390, 4
        %v392 = vrot.slane %v312, 7
        %v393 = vsel %vm369, %v391, %v392
        %v394 = vrot.slane %v392, 4
        %v395 = vrot.slane %v313, 7
        %v396 = vrot.slane %v395, 4
        %v397 = vrot.slane %v314, 7
        %v398 = vsel %vm369, %v396, %v397
        %v399 = vrot.slane %v397, 4
        %v400 = vrot.slane %v315, 7
        %v401 = vrot.slane %v400, 4
        %v402 = vrot.slane %v316, 7
        %v403 = vsel %vm369, %v401, %v402
        %v404 = vrot.slane %v402, 4
        %v405 = vrot.slane %v317, 7
        %v406 = vrot.slane %v405, 4
        %v407 = vrot.slane %v318, 7
        %v408 = vsel %vm369, %v406, %v407
        %v409 = vrot.slane %v407, 4
        %v410 = vrot.slane %v319, 7
        %v411 = vrot.slane %v410, 4
        %v412 = vrot.slane %v320, 7
        %v413 = vsel %vm369, %v411, %v412
        %v414 = vrot.slane %v412, 4
        %v415 = vrot.slane %v321, 7
        %v416 = vrot.slane %v415, 4
        %v417 = vrot.slane %v322, 7
        %v418 = vsel %vm369, %v416, %v417
        %v419 = vrot.slane %v417, 4
        %v420 = vrot.slane %v323, 7
        %v421 = vrot.slane %v420, 4
        %v422 = vrot.slane %v324, 7
        %v423 = vsel %vm369, %v421, %v422
        %v424 = vrot.slane %v422, 4
        %v425 = vrot.slane %v325, 7
        %v426 = vrot.slane %v425, 4
        %v427 = vrot.slane %v326, 7
        %v428 = vsel %vm369, %v426, %v427
        %v429 = vrot.slane %v427, 4
        %v430 = vrot.slane %v327, 7
        %v431 = vrot.slane %v430, 4
        %v432 = vrot.slane %v328, 7
        %v433 = vsel %vm369, %v431, %v432
        %v434 = vrot.slane %v432, 4
        %v435 = vrot.slane %v329, 7
        %v436 = vrot.slane %v435, 4
        %v437 = vrot.slane %v330, 7
        %v438 = vsel %vm369, %v436, %v437
        %v439 = vrot.slane %v437, 4
        %v440 = vrot.slane %v331, 7
        %v441 = vrot.slane %v440, 4
        %v442 = vrot.slane %v332, 7
        %v443 = vsel %vm369, %v441, %v442
        %v444 = vrot.slane %v442, 4
        %v445 = vrot.slane %v333, 7
        %v446 = vrot.slane %v445, 4
        %v447 = vrot.slane %v334, 7
        %v448 = vsel %vm369, %v446, %v447
        %v449 = vrot.slane %v447, 4
        %s498 = scalar_lea.vmem [#allocation2], 24
        %vm499 = vcmask 93185
        %500 = vst.msk [vmem:[%s498] sm:$0xe] %vm499, %v370
        %vm501 = vcmask 93184
        %502 = vst.msk [vmem:[%s498 + $0x4] sm:$0xf] %vm501, %v373
        %vm503 = vcmask 90112
        %504 = vst.msk [vmem:[%s498 + $0x8] sm:$0x1] %vm503, %v374
        %505 = vst.msk [vmem:[%s498 + $0xc] sm:$0xe] %vm499, %v375
        %506 = vst.msk [vmem:[%s498 + $0x10] sm:$0xf] %vm501, %v378
        %507 = vst.msk [vmem:[%s498 + $0x14] sm:$0x1] %vm503, %v379
        %508 = vst.msk [vmem:[%s498 + $0x18] sm:$0xe] %vm499, %v380
        %509 = vst.msk [vmem:[%s498 + $0x1c] sm:$0xf] %vm501, %v383
        %510 = vst.msk [vmem:[%s498 + $0x20] sm:$0x1] %vm503, %v384
        %511 = vst.msk [vmem:[%s498 + $0x24] sm:$0xe] %vm499, %v385
        %512 = vst.msk [vmem:[%s498 + $0x28] sm:$0xf] %vm501, %v388
        %513 = vst.msk [vmem:[%s498 + $0x2c] sm:$0x1] %vm503, %v389
        %514 = vst.msk [vmem:[%s498 + $0x30] sm:$0xe] %vm499, %v390
        %515 = vst.msk [vmem:[%s498 + $0x34] sm:$0xf] %vm501, %v393
        %516 = vst.msk [vmem:[%s498 + $0x38] sm:$0x1] %vm503, %v394
        %517 = vst.msk [vmem:[%s498 + $0x3c] sm:$0xe] %vm499, %v395
        %518 = vst.msk [vmem:[%s498 + $0x40] sm:$0xf] %vm501, %v398
        %519 = vst.msk [vmem:[%s498 + $0x44] sm:$0x1] %vm503, %v399
        %520 = vst.msk [vmem:[%s498 + $0x48] sm:$0xe] %vm499, %v400
        %521 = vst.msk [vmem:[%s498 + $0x4c] sm:$0xf] %vm501, %v403
        %522 = vst.msk [vmem:[%s498 + $0x50] sm:$0x1] %vm503, %v404
        %523 = vst.msk [vmem:[%s498 + $0x54] sm:$0xe] %vm499, %v405
        %524 = vst.msk [vmem:[%s498 + $0x58] sm:$0xf] %vm501, %v408
        %525 = vst.msk [vmem:[%s498 + $0x5c] sm:$0x1] %vm503, %v409
        %526 = vst.msk [vmem:[%s498 + $0x60] sm:$0xe] %vm499, %v410
        %527 = vst.msk [vmem:[%s498 + $0x64] sm:$0xf] %vm501, %v413
        %528 = vst.msk [vmem:[%s498 + $0x68] sm:$0x1] %vm503, %v414
        %529 = vst.msk [vmem:[%s498 + $0x6c] sm:$0xe] %vm499, %v415
        %530 = vst.msk [vmem:[%s498 + $0x70] sm:$0xf] %vm501, %v418
        %531 = vst.msk [vmem:[%s498 + $0x74] sm:$0x1] %vm503, %v419
        %532 = vst.msk [vmem:[%s498 + $0x78] sm:$0xe] %vm499, %v420
        %533 = vst.msk [vmem:[%s498 + $0x7c] sm:$0xf] %vm501, %v423
        %534 = vst.msk [vmem:[%s498 + $0x80] sm:$0x1] %vm503, %v424
        %535 = vst.msk [vmem:[%s498 + $0x84] sm:$0xe] %vm499, %v425
        %536 = vst.msk [vmem:[%s498 + $0x88] sm:$0xf] %vm501, %v428
        %537 = vst.msk [vmem:[%s498 + $0x8c] sm:$0x1] %vm503, %v429
        %538 = vst.msk [vmem:[%s498 + $0x90] sm:$0xe] %vm499, %v430
        %539 = vst.msk [vmem:[%s498 + $0x94] sm:$0xf] %vm501, %v433
        %540 = vst.msk [vmem:[%s498 + $0x98] sm:$0x1] %vm503, %v434
        %541 = vst.msk [vmem:[%s498 + $0x9c] sm:$0xe] %vm499, %v435
        %542 = vst.msk [vmem:[%s498 + $0xa0] sm:$0xf] %vm501, %v438
        %543 = vst.msk [vmem:[%s498 + $0xa4] sm:$0x1] %vm503, %v439
        %544 = vst.msk [vmem:[%s498 + $0xa8] sm:$0xe] %vm499, %v440
        %545 = vst.msk [vmem:[%s498 + $0xac] sm:$0xf] %vm501, %v443
        %546 = vst.msk [vmem:[%s498 + $0xb0] sm:$0x1] %vm503, %v444
        %547 = vst.msk [vmem:[%s498 + $0xb4] sm:$0xe] %vm499, %v445
        %548 = vst.msk [vmem:[%s498 + $0xb8] sm:$0xf] %vm501, %v448
        %549 = vst.msk [vmem:[%s498 + $0xbc] sm:$0x1] %vm503, %v449
        %v550 = vld [vmem:[%s213] sm:$0xf]
        %v551 = vld [vmem:[%s213 + $0x4] sm:$0xf]
        %v552 = vld [vmem:[%s213 + $0x8] sm:$0xf]
        %v553 = vld [vmem:[%s213 + $0xc] sm:$0xf]
        %v554 = vld [vmem:[%s213 + $0x10] sm:$0xf]
        %v555 = vld [vmem:[%s213 + $0x14] sm:$0xf]
        %v556 = vld [vmem:[%s213 + $0x18] sm:$0xf]
        %v557 = vld [vmem:[%s213 + $0x1c] sm:$0xf]
        %v558 = vld [vmem:[%s213 + $0x20] sm:$0xf]
        %v559 = vld [vmem:[%s213 + $0x24] sm:$0xf]
        %v560 = vld [vmem:[%s213 + $0x28] sm:$0xf]
        %v561 = vld [vmem:[%s213 + $0x2c] sm:$0xf]
        %v562 = vld [vmem:[%s213 + $0x30] sm:$0xf]
        %v563 = vld [vmem:[%s213 + $0x34] sm:$0xf]
        %v564 = vld [vmem:[%s213 + $0x38] sm:$0xf]
        %v565 = vld [vmem:[%s213 + $0x3c] sm:$0xf]
        %v566 = vld [vmem:[%s213 + $0x40] sm:$0xf]
        %v567 = vld [vmem:[%s213 + $0x44] sm:$0xf]
        %v568 = vld [vmem:[%s213 + $0x48] sm:$0xf]
        %v569 = vld [vmem:[%s213 + $0x4c] sm:$0xf]
        %v570 = vld [vmem:[%s213 + $0x50] sm:$0xf]
        %v571 = vld [vmem:[%s213 + $0x54] sm:$0xf]
        %v572 = vld [vmem:[%s213 + $0x58] sm:$0xf]
        %v573 = vld [vmem:[%s213 + $0x5c] sm:$0xf]
        %v574 = vld [vmem:[%s213 + $0x60] sm:$0xf]
        %v575 = vld [vmem:[%s213 + $0x64] sm:$0xf]
        %v576 = vld [vmem:[%s213 + $0x68] sm:$0xf]
        %v577 = vld [vmem:[%s213 + $0x6c] sm:$0xf]
        %v578 = vld [vmem:[%s213 + $0x70] sm:$0xf]
        %v579 = vld [vmem:[%s213 + $0x74] sm:$0xf]
        %v580 = vld [vmem:[%s213 + $0x78] sm:$0xf]
        %v581 = vld [vmem:[%s213 + $0x7c] sm:$0xf]
        %vm582 = vsmask.f32 256
        %vm583 = vsmask.f32 4368
        %vm584 = vmor %vm582, %vm583
        %v586 = vshrl.u32 %v550, 16
        %v588 = vrot.slane %v586, 7
        %v589 = vshll.u32 %v550, 16
        %v591 = vor.u32 %v588, %v589
        %v592 = vrot.slane %v588, 4
        %v594 = vshrl.u32 %v551, 16
        %v596 = vrot.slane %v594, 7
        %v597 = vshll.u32 %v551, 16
        %v599 = vor.u32 %v596, %v597
        %v600 = vsel %vm584, %v592, %v599
        %v601 = vrot.slane %v596, 4
        %v603 = vshrl.u32 %v552, 16
        %v605 = vrot.slane %v603, 7
        %v606 = vshll.u32 %v552, 16
        %v608 = vor.u32 %v605, %v606
        %v609 = vrot.slane %v605, 4
        %v611 = vshrl.u32 %v553, 16
        %v613 = vrot.slane %v611, 7
        %v614 = vshll.u32 %v553, 16
        %v616 = vor.u32 %v613, %v614
        %v617 = vsel %vm584, %v609, %v616
        %v618 = vrot.slane %v613, 4
        %v620 = vshrl.u32 %v554, 16
        %v622 = vrot.slane %v620, 7
        %v623 = vshll.u32 %v554, 16
        %v625 = vor.u32 %v622, %v623
        %v626 = vrot.slane %v622, 4
        %v628 = vshrl.u32 %v555, 16
        %v630 = vrot.slane %v628, 7
        %v631 = vshll.u32 %v555, 16
        %v633 = vor.u32 %v630, %v631
        %v634 = vsel %vm584, %v626, %v633
        %v635 = vrot.slane %v630, 4
        %v637 = vshrl.u32 %v556, 16
        %v639 = vrot.slane %v637, 7
        %v640 = vshll.u32 %v556, 16
        %v642 = vor.u32 %v639, %v640
        %v643 = vrot.slane %v639, 4
        %v645 = vshrl.u32 %v557, 16
        %v647 = vrot.slane %v645, 7
        %v648 = vshll.u32 %v557, 16
        %v650 = vor.u32 %v647, %v648
        %v651 = vsel %vm584, %v643, %v650
        %v652 = vrot.slane %v647, 4
        %v654 = vshrl.u32 %v558, 16
        %v656 = vrot.slane %v654, 7
        %v657 = vshll.u32 %v558, 16
        %v659 = vor.u32 %v656, %v657
        %v660 = vrot.slane %v656, 4
        %v662 = vshrl.u32 %v559, 16
        %v664 = vrot.slane %v662, 7
        %v665 = vshll.u32 %v559, 16
        %v667 = vor.u32 %v664, %v665
        %v668 = vsel %vm584, %v660, %v667
        %v669 = vrot.slane %v664, 4
        %v671 = vshrl.u32 %v560, 16
        %v673 = vrot.slane %v671, 7
        %v674 = vshll.u32 %v560, 16
        %v676 = vor.u32 %v673, %v674
        %v677 = vrot.slane %v673, 4
        %v679 = vshrl.u32 %v561, 16
        %v681 = vrot.slane %v679, 7
        %v682 = vshll.u32 %v561, 16
        %v684 = vor.u32 %v681, %v682
        %v685 = vsel %vm584, %v677, %v684
        %v686 = vrot.slane %v681, 4
        %v688 = vshrl.u32 %v562, 16
        %v690 = vrot.slane %v688, 7
        %v691 = vshll.u32 %v562, 16
        %v693 = vor.u32 %v690, %v691
        %v694 = vrot.slane %v690, 4
        %v696 = vshrl.u32 %v563, 16
        %v698 = vrot.slane %v696, 7
        %v699 = vshll.u32 %v563, 16
        %v701 = vor.u32 %v698, %v699
        %v702 = vsel %vm584, %v694, %v701
        %v703 = vrot.slane %v698, 4
        %v705 = vshrl.u32 %v564, 16
        %v707 = vrot.slane %v705, 7
        %v708 = vshll.u32 %v564, 16
        %v710 = vor.u32 %v707, %v708
        %v711 = vrot.slane %v707, 4
        %v713 = vshrl.u32 %v565, 16
        %v715 = vrot.slane %v713, 7
        %v716 = vshll.u32 %v565, 16
        %v718 = vor.u32 %v715, %v716
        %v719 = vsel %vm584, %v711, %v718
        %v720 = vrot.slane %v715, 4
        %v722 = vshrl.u32 %v566, 16
        %v724 = vrot.slane %v722, 7
        %v725 = vshll.u32 %v566, 16
        %v727 = vor.u32 %v724, %v725
        %v728 = vrot.slane %v724, 4
        %v730 = vshrl.u32 %v567, 16
        %v732 = vrot.slane %v730, 7
        %v733 = vshll.u32 %v567, 16
        %v735 = vor.u32 %v732, %v733
        %v736 = vsel %vm584, %v728, %v735
        %v737 = vrot.slane %v732, 4
        %v739 = vshrl.u32 %v568, 16
        %v741 = vrot.slane %v739, 7
        %v742 = vshll.u32 %v568, 16
        %v744 = vor.u32 %v741, %v742
        %v745 = vrot.slane %v741, 4
        %v747 = vshrl.u32 %v569, 16
        %v749 = vrot.slane %v747, 7
        %v750 = vshll.u32 %v569, 16
        %v752 = vor.u32 %v749, %v750
        %v753 = vsel %vm584, %v745, %v752
        %v754 = vrot.slane %v749, 4
        %v756 = vshrl.u32 %v570, 16
        %v758 = vrot.slane %v756, 7
        %v759 = vshll.u32 %v570, 16
        %v761 = vor.u32 %v758, %v759
        %v762 = vrot.slane %v758, 4
        %v764 = vshrl.u32 %v571, 16
        %v766 = vrot.slane %v764, 7
        %v767 = vshll.u32 %v571, 16
        %v769 = vor.u32 %v766, %v767
        %v770 = vsel %vm584, %v762, %v769
        %v771 = vrot.slane %v766, 4
        %v773 = vshrl.u32 %v572, 16
        %v775 = vrot.slane %v773, 7
        %v776 = vshll.u32 %v572, 16
        %v778 = vor.u32 %v775, %v776
        %v779 = vrot.slane %v775, 4
        %v781 = vshrl.u32 %v573, 16
        %v783 = vrot.slane %v781, 7
        %v784 = vshll.u32 %v573, 16
        %v786 = vor.u32 %v783, %v784
        %v787 = vsel %vm584, %v779, %v786
        %v788 = vrot.slane %v783, 4
        %v790 = vshrl.u32 %v574, 16
        %v792 = vrot.slane %v790, 7
        %v793 = vshll.u32 %v574, 16
        %v795 = vor.u32 %v792, %v793
        %v796 = vrot.slane %v792, 4
        %v798 = vshrl.u32 %v575, 16
        %v800 = vrot.slane %v798, 7
        %v801 = vshll.u32 %v575, 16
        %v803 = vor.u32 %v800, %v801
        %v804 = vsel %vm584, %v796, %v803
        %v805 = vrot.slane %v800, 4
        %v807 = vshrl.u32 %v576, 16
        %v809 = vrot.slane %v807, 7
        %v810 = vshll.u32 %v576, 16
        %v812 = vor.u32 %v809, %v810
        %v813 = vrot.slane %v809, 4
        %v815 = vshrl.u32 %v577, 16
        %v817 = vrot.slane %v815, 7
        %v818 = vshll.u32 %v577, 16
        %v820 = vor.u32 %v817, %v818
        %v821 = vsel %vm584, %v813, %v820
        %v822 = vrot.slane %v817, 4
        %v824 = vshrl.u32 %v578, 16
        %v826 = vrot.slane %v824, 7
        %v827 = vshll.u32 %v578, 16
        %v829 = vor.u32 %v826, %v827
        %v830 = vrot.slane %v826, 4
        %v832 = vshrl.u32 %v579, 16
        %v834 = vrot.slane %v832, 7
        %v835 = vshll.u32 %v579, 16
        %v837 = vor.u32 %v834, %v835
        %v838 = vsel %vm584, %v830, %v837
        %v839 = vrot.slane %v834, 4
        %v841 = vshrl.u32 %v580, 16
        %v843 = vrot.slane %v841, 7
        %v844 = vshll.u32 %v580, 16
        %v846 = vor.u32 %v843, %v844
        %v847 = vrot.slane %v843, 4
        %v849 = vshrl.u32 %v581, 16
        %v851 = vrot.slane %v849, 7
        %v852 = vshll.u32 %v581, 16
        %v854 = vor.u32 %v851, %v852
        %v855 = vsel %vm584, %v847, %v854
        %v856 = vrot.slane %v851, 4
        %857 = vrot.lane.b32.xlu0 %v591, 12
        %v858 = vpop.permute.xlu0 %857
        %859 = vrot.lane.b32.xlu0 %v600, 12
        %v860 = vpop.permute.xlu0 %859
        %861 = vrot.lane.b32.xlu0 %v601, 12
        %v862 = vpop.permute.xlu0 %861
        %863 = vrot.lane.b32.xlu0 %v608, 12
        %v864 = vpop.permute.xlu0 %863
        %865 = vrot.lane.b32.xlu0 %v617, 12
        %v866 = vpop.permute.xlu0 %865
        %867 = vrot.lane.b32.xlu0 %v618, 12
        %v868 = vpop.permute.xlu0 %867
        %869 = vrot.lane.b32.xlu0 %v625, 12
        %v870 = vpop.permute.xlu0 %869
        %871 = vrot.lane.b32.xlu0 %v634, 12
        %v872 = vpop.permute.xlu0 %871
        %873 = vrot.lane.b32.xlu0 %v635, 12
        %v874 = vpop.permute.xlu0 %873
        %875 = vrot.lane.b32.xlu0 %v642, 12
        %v876 = vpop.permute.xlu0 %875
        %877 = vrot.lane.b32.xlu0 %v651, 12
        %v878 = vpop.permute.xlu0 %877
        %879 = vrot.lane.b32.xlu0 %v652, 12
        %v880 = vpop.permute.xlu0 %879
        %881 = vrot.lane.b32.xlu0 %v659, 12
        %v882 = vpop.permute.xlu0 %881
        %883 = vrot.lane.b32.xlu0 %v668, 12
        %v884 = vpop.permute.xlu0 %883
        %885 = vrot.lane.b32.xlu0 %v669, 12
        %v886 = vpop.permute.xlu0 %885
        %887 = vrot.lane.b32.xlu0 %v676, 12
        %v888 = vpop.permute.xlu0 %887
        %889 = vrot.lane.b32.xlu0 %v685, 12
        %v890 = vpop.permute.xlu0 %889
        %891 = vrot.lane.b32.xlu0 %v686, 12
        %v892 = vpop.permute.xlu0 %891
        %893 = vrot.lane.b32.xlu0 %v693, 12
        %v894 = vpop.permute.xlu0 %893
        %895 = vrot.lane.b32.xlu0 %v702, 12
        %v896 = vpop.permute.xlu0 %895
        %897 = vrot.lane.b32.xlu0 %v703, 12
        %v898 = vpop.permute.xlu0 %897
        %899 = vrot.lane.b32.xlu0 %v710, 12
        %v900 = vpop.permute.xlu0 %899
        %901 = vrot.lane.b32.xlu0 %v719, 12
        %v902 = vpop.permute.xlu0 %901
        %903 = vrot.lane.b32.xlu0 %v720, 12
        %v904 = vpop.permute.xlu0 %903
        %905 = vrot.lane.b32.xlu0 %v727, 12
        %v906 = vpop.permute.xlu0 %905
        %907 = vrot.lane.b32.xlu0 %v736, 12
        %v908 = vpop.permute.xlu0 %907
        %909 = vrot.lane.b32.xlu0 %v737, 12
        %v910 = vpop.permute.xlu0 %909
        %911 = vrot.lane.b32.xlu0 %v744, 12
        %v912 = vpop.permute.xlu0 %911
        %913 = vrot.lane.b32.xlu0 %v753, 12
        %v914 = vpop.permute.xlu0 %913
        %915 = vrot.lane.b32.xlu0 %v754, 12
        %v916 = vpop.permute.xlu0 %915
        %917 = vrot.lane.b32.xlu0 %v761, 12
        %v918 = vpop.permute.xlu0 %917
        %919 = vrot.lane.b32.xlu0 %v770, 12
        %v920 = vpop.permute.xlu0 %919
        %921 = vrot.lane.b32.xlu0 %v771, 12
        %v922 = vpop.permute.xlu0 %921
        %923 = vrot.lane.b32.xlu0 %v778, 12
        %v924 = vpop.permute.xlu0 %923
        %925 = vrot.lane.b32.xlu0 %v787, 12
        %v926 = vpop.permute.xlu0 %925
        %927 = vrot.lane.b32.xlu0 %v788, 12
        %v928 = vpop.permute.xlu0 %927
        %929 = vrot.lane.b32.xlu0 %v795, 12
        %v930 = vpop.permute.xlu0 %929
        %931 = vrot.lane.b32.xlu0 %v804, 12
        %v932 = vpop.permute.xlu0 %931
        %933 = vrot.lane.b32.xlu0 %v805, 12
        %v934 = vpop.permute.xlu0 %933
        %935 = vrot.lane.b32.xlu0 %v812, 12
        %v936 = vpop.permute.xlu0 %935
        %937 = vrot.lane.b32.xlu0 %v821, 12
        %v938 = vpop.permute.xlu0 %937
        %939 = vrot.lane.b32.xlu0 %v822, 12
        %v940 = vpop.permute.xlu0 %939
        %941 = vrot.lane.b32.xlu0 %v829, 12
        %v942 = vpop.permute.xlu0 %941
        %943 = vrot.lane.b32.xlu0 %v838, 12
        %v944 = vpop.permute.xlu0 %943
        %945 = vrot.lane.b32.xlu0 %v839, 12
        %v946 = vpop.permute.xlu0 %945
        %947 = vrot.lane.b32.xlu0 %v846, 12
        %v948 = vpop.permute.xlu0 %947
        %949 = vrot.lane.b32.xlu0 %v855, 12
        %v950 = vpop.permute.xlu0 %949
        %951 = vrot.lane.b32.xlu0 %v856, 12
        %v952 = vpop.permute.xlu0 %951
        %vm1001 = vcmask 191584
        %vm1002 = vsmask.f32 7938
        %vm1003 = vmand %vm1001, %vm1002
        %v1004 = vld [vmem:[%s498] sm:$0xf]
        %v1005 = vsel %vm1003, %v858, %v1004
        %1006 = vst [vmem:[%s498] sm:$0xf] %v1005
        %vm1007 = vcmask 191584
        %1008 = vst.msk [vmem:[%s498 + $0x4] sm:$0xf] %vm1007, %v860
        %vm1009 = vcmask 188512
        %vm1010 = vmand %vm1009, %vm582
        %v1011 = vld [vmem:[%s498 + $0x8] sm:$0x1]
        %v1012 = vsel %vm1010, %v862, %v1011
        %1013 = vst [vmem:[%s498 + $0x8] sm:$0x1] %v1012
        %v1014 = vld [vmem:[%s498 + $0xc] sm:$0xf]
        %v1015 = vsel %vm1003, %v864, %v1014
        %1016 = vst [vmem:[%s498 + $0xc] sm:$0xf] %v1015
        %1017 = vst.msk [vmem:[%s498 + $0x10] sm:$0xf] %vm1007, %v866
        %v1018 = vld [vmem:[%s498 + $0x14] sm:$0x1]
        %v1019 = vsel %vm1010, %v868, %v1018
        %1020 = vst [vmem:[%s498 + $0x14] sm:$0x1] %v1019
        %v1021 = vld [vmem:[%s498 + $0x18] sm:$0xf]
        %v1022 = vsel %vm1003, %v870, %v1021
        %1023 = vst [vmem:[%s498 + $0x18] sm:$0xf] %v1022
        %1024 = vst.msk [vmem:[%s498 + $0x1c] sm:$0xf] %vm1007, %v872
        %v1025 = vld [vmem:[%s498 + $0x20] sm:$0x1]
        %v1026 = vsel %vm1010, %v874, %v1025
        %1027 = vst [vmem:[%s498 + $0x20] sm:$0x1] %v1026
        %v1028 = vld [vmem:[%s498 + $0x24] sm:$0xf]
        %v1029 = vsel %vm1003, %v876, %v1028
        %1030 = vst [vmem:[%s498 + $0x24] sm:$0xf] %v1029
        %1031 = vst.msk [vmem:[%s498 + $0x28] sm:$0xf] %vm1007, %v878
        %v1032 = vld [vmem:[%s498 + $0x2c] sm:$0x1]
        %v1033 = vsel %vm1010, %v880, %v1032
        %1034 = vst [vmem:[%s498 + $0x2c] sm:$0x1] %v1033
        %v1035 = vld [vmem:[%s498 + $0x30] sm:$0xf]
        %v1036 = vsel %vm1003, %v882, %v1035
        %1037 = vst [vmem:[%s498 + $0x30] sm:$0xf] %v1036
        %1038 = vst.msk [vmem:[%s498 + $0x34] sm:$0xf] %vm1007, %v884
        %v1039 = vld [vmem:[%s498 + $0x38] sm:$0x1]
        %v1040 = vsel %vm1010, %v886, %v1039
        %1041 = vst [vmem:[%s498 + $0x38] sm:$0x1] %v1040
        %v1042 = vld [vmem:[%s498 + $0x3c] sm:$0xf]
        %v1043 = vsel %vm1003, %v888, %v1042
        %1044 = vst [vmem:[%s498 + $0x3c] sm:$0xf] %v1043
        %1045 = vst.msk [vmem:[%s498 + $0x40] sm:$0xf] %vm1007, %v890
        %v1046 = vld [vmem:[%s498 + $0x44] sm:$0x1]
        %v1047 = vsel %vm1010, %v892, %v1046
        %1048 = vst [vmem:[%s498 + $0x44] sm:$0x1] %v1047
        %v1049 = vld [vmem:[%s498 + $0x48] sm:$0xf]
        %v1050 = vsel %vm1003, %v894, %v1049
        %1051 = vst [vmem:[%s498 + $0x48] sm:$0xf] %v1050
        %1052 = vst.msk [vmem:[%s498 + $0x4c] sm:$0xf] %vm1007, %v896
        %v1053 = vld [vmem:[%s498 + $0x50] sm:$0x1]
        %v1054 = vsel %vm1010, %v898, %v1053
        %1055 = vst [vmem:[%s498 + $0x50] sm:$0x1] %v1054
        %v1056 = vld [vmem:[%s498 + $0x54] sm:$0xf]
        %v1057 = vsel %vm1003, %v900, %v1056
        %1058 = vst [vmem:[%s498 + $0x54] sm:$0xf] %v1057
        %1059 = vst.msk [vmem:[%s498 + $0x58] sm:$0xf] %vm1007, %v902
        %v1060 = vld [vmem:[%s498 + $0x5c] sm:$0x1]
        %v1061 = vsel %vm1010, %v904, %v1060
        %1062 = vst [vmem:[%s498 + $0x5c] sm:$0x1] %v1061
        %v1063 = vld [vmem:[%s498 + $0x60] sm:$0xf]
        %v1064 = vsel %vm1003, %v906, %v1063
        %1065 = vst [vmem:[%s498 + $0x60] sm:$0xf] %v1064
        %1066 = vst.msk [vmem:[%s498 + $0x64] sm:$0xf] %vm1007, %v908
        %v1067 = vld [vmem:[%s498 + $0x68] sm:$0x1]
        %v1068 = vsel %vm1010, %v910, %v1067
        %1069 = vst [vmem:[%s498 + $0x68] sm:$0x1] %v1068
        %v1070 = vld [vmem:[%s498 + $0x6c] sm:$0xf]
        %v1071 = vsel %vm1003, %v912, %v1070
        %1072 = vst [vmem:[%s498 + $0x6c] sm:$0xf] %v1071
        %1073 = vst.msk [vmem:[%s498 + $0x70] sm:$0xf] %vm1007, %v914
        %v1074 = vld [vmem:[%s498 + $0x74] sm:$0x1]
        %v1075 = vsel %vm1010, %v916, %v1074
        %1076 = vst [vmem:[%s498 + $0x74] sm:$0x1] %v1075
        %v1077 = vld [vmem:[%s498 + $0x78] sm:$0xf]
        %v1078 = vsel %vm1003, %v918, %v1077
        %1079 = vst [vmem:[%s498 + $0x78] sm:$0xf] %v1078
        %1080 = vst.msk [vmem:[%s498 + $0x7c] sm:$0xf] %vm1007, %v920
        %v1081 = vld [vmem:[%s498 + $0x80] sm:$0x1]
        %v1082 = vsel %vm1010, %v922, %v1081
        %1083 = vst [vmem:[%s498 + $0x80] sm:$0x1] %v1082
        %v1084 = vld [vmem:[%s498 + $0x84] sm:$0xf]
        %v1085 = vsel %vm1003, %v924, %v1084
        %1086 = vst [vmem:[%s498 + $0x84] sm:$0xf] %v1085
        %1087 = vst.msk [vmem:[%s498 + $0x88] sm:$0xf] %vm1007, %v926
        %v1088 = vld [vmem:[%s498 + $0x8c] sm:$0x1]
        %v1089 = vsel %vm1010, %v928, %v1088
        %1090 = vst [vmem:[%s498 + $0x8c] sm:$0x1] %v1089
        %v1091 = vld [vmem:[%s498 + $0x90] sm:$0xf]
        %v1092 = vsel %vm1003, %v930, %v1091
        %1093 = vst [vmem:[%s498 + $0x90] sm:$0xf] %v1092
        %1094 = vst.msk [vmem:[%s498 + $0x94] sm:$0xf] %vm1007, %v932
        %v1095 = vld [vmem:[%s498 + $0x98] sm:$0x1]
        %v1096 = vsel %vm1010, %v934, %v1095
        %1097 = vst [vmem:[%s498 + $0x98] sm:$0x1] %v1096
        %v1098 = vld [vmem:[%s498 + $0x9c] sm:$0xf]
        %v1099 = vsel %vm1003, %v936, %v1098
        %1100 = vst [vmem:[%s498 + $0x9c] sm:$0xf] %v1099
        %1101 = vst.msk [vmem:[%s498 + $0xa0] sm:$0xf] %vm1007, %v938
        %v1102 = vld [vmem:[%s498 + $0xa4] sm:$0x1]
        %v1103 = vsel %vm1010, %v940, %v1102
        %1104 = vst [vmem:[%s498 + $0xa4] sm:$0x1] %v1103
        %v1105 = vld [vmem:[%s498 + $0xa8] sm:$0xf]
        %v1106 = vsel %vm1003, %v942, %v1105
        %1107 = vst [vmem:[%s498 + $0xa8] sm:$0xf] %v1106
        %1108 = vst.msk [vmem:[%s498 + $0xac] sm:$0xf] %vm1007, %v944
        %v1109 = vld [vmem:[%s498 + $0xb0] sm:$0x1]
        %v1110 = vsel %vm1010, %v946, %v1109
        %1111 = vst [vmem:[%s498 + $0xb0] sm:$0x1] %v1110
        %v1112 = vld [vmem:[%s498 + $0xb4] sm:$0xf]
        %v1113 = vsel %vm1003, %v948, %v1112
        %1114 = vst [vmem:[%s498 + $0xb4] sm:$0xf] %v1113
        %1115 = vst.msk [vmem:[%s498 + $0xb8] sm:$0xf] %vm1007, %v950
        %v1116 = vld [vmem:[%s498 + $0xbc] sm:$0x1]
        %v1117 = vsel %vm1010, %v952, %v1116
        %1118 = vst [vmem:[%s498 + $0xbc] sm:$0x1] %v1117
        %v1119 = vld [vmem:[%s213] sm:$0xf]
        %v1120 = vld [vmem:[%s213 + $0x4] sm:$0xf]
        %v1121 = vld [vmem:[%s213 + $0x8] sm:$0xf]
        %v1122 = vld [vmem:[%s213 + $0xc] sm:$0xf]
        %v1123 = vld [vmem:[%s213 + $0x10] sm:$0xf]
        %v1124 = vld [vmem:[%s213 + $0x14] sm:$0xf]
        %v1125 = vld [vmem:[%s213 + $0x18] sm:$0xf]
        %v1126 = vld [vmem:[%s213 + $0x1c] sm:$0xf]
        %v1127 = vld [vmem:[%s213 + $0x20] sm:$0xf]
        %v1128 = vld [vmem:[%s213 + $0x24] sm:$0xf]
        %v1129 = vld [vmem:[%s213 + $0x28] sm:$0xf]
        %v1130 = vld [vmem:[%s213 + $0x2c] sm:$0xf]
        %v1131 = vld [vmem:[%s213 + $0x30] sm:$0xf]
        %v1132 = vld [vmem:[%s213 + $0x34] sm:$0xf]
        %v1133 = vld [vmem:[%s213 + $0x38] sm:$0xf]
        %v1134 = vld [vmem:[%s213 + $0x3c] sm:$0xf]
        %v1135 = vld [vmem:[%s213 + $0x40] sm:$0xf]
        %v1136 = vld [vmem:[%s213 + $0x44] sm:$0xf]
        %v1137 = vld [vmem:[%s213 + $0x48] sm:$0xf]
        %v1138 = vld [vmem:[%s213 + $0x4c] sm:$0xf]
        %v1139 = vld [vmem:[%s213 + $0x50] sm:$0xf]
        %v1140 = vld [vmem:[%s213 + $0x54] sm:$0xf]
        %v1141 = vld [vmem:[%s213 + $0x58] sm:$0xf]
        %v1142 = vld [vmem:[%s213 + $0x5c] sm:$0xf]
        %v1143 = vld [vmem:[%s213 + $0x60] sm:$0xf]
        %v1144 = vld [vmem:[%s213 + $0x64] sm:$0xf]
        %v1145 = vld [vmem:[%s213 + $0x68] sm:$0xf]
        %v1146 = vld [vmem:[%s213 + $0x6c] sm:$0xf]
        %v1147 = vld [vmem:[%s213 + $0x70] sm:$0xf]
        %v1148 = vld [vmem:[%s213 + $0x74] sm:$0xf]
        %v1149 = vld [vmem:[%s213 + $0x78] sm:$0xf]
        %v1150 = vld [vmem:[%s213 + $0x7c] sm:$0xf]
        %1183 = vrot.lane.b32.xlu0 %v1119, 24
        %v1184 = vpop.permute.xlu0 %1183
        %1185 = vrot.lane.b32.xlu0 %v1120, 24
        %v1186 = vpop.permute.xlu0 %1185
        %1187 = vrot.lane.b32.xlu0 %v1121, 24
        %v1188 = vpop.permute.xlu0 %1187
        %1189 = vrot.lane.b32.xlu0 %v1122, 24
        %v1190 = vpop.permute.xlu0 %1189
        %1191 = vrot.lane.b32.xlu0 %v1123, 24
        %v1192 = vpop.permute.xlu0 %1191
        %1193 = vrot.lane.b32.xlu0 %v1124, 24
        %v1194 = vpop.permute.xlu0 %1193
        %1195 = vrot.lane.b32.xlu0 %v1125, 24
        %v1196 = vpop.permute.xlu0 %1195
        %1197 = vrot.lane.b32.xlu0 %v1126, 24
        %v1198 = vpop.permute.xlu0 %1197
        %1199 = vrot.lane.b32.xlu0 %v1127, 24
        %v1200 = vpop.permute.xlu0 %1199
        %1201 = vrot.lane.b32.xlu0 %v1128, 24
        %v1202 = vpop.permute.xlu0 %1201
        %1203 = vrot.lane.b32.xlu0 %v1129, 24
        %v1204 = vpop.permute.xlu0 %1203
        %1205 = vrot.lane.b32.xlu0 %v1130, 24
        %v1206 = vpop.permute.xlu0 %1205
        %1207 = vrot.lane.b32.xlu0 %v1131, 24
        %v1208 = vpop.permute.xlu0 %1207
        %1209 = vrot.lane.b32.xlu0 %v1132, 24
        %v1210 = vpop.permute.xlu0 %1209
        %1211 = vrot.lane.b32.xlu0 %v1133, 24
        %v1212 = vpop.permute.xlu0 %1211
        %1213 = vrot.lane.b32.xlu0 %v1134, 24
        %v1214 = vpop.permute.xlu0 %1213
        %1215 = vrot.lane.b32.xlu0 %v1135, 24
        %v1216 = vpop.permute.xlu0 %1215
        %1217 = vrot.lane.b32.xlu0 %v1136, 24
        %v1218 = vpop.permute.xlu0 %1217
        %1219 = vrot.lane.b32.xlu0 %v1137, 24
        %v1220 = vpop.permute.xlu0 %1219
        %1221 = vrot.lane.b32.xlu0 %v1138, 24
        %v1222 = vpop.permute.xlu0 %1221
        %1223 = vrot.lane.b32.xlu0 %v1139, 24
        %v1224 = vpop.permute.xlu0 %1223
        %1225 = vrot.lane.b32.xlu0 %v1140, 24
        %v1226 = vpop.permute.xlu0 %1225
        %1227 = vrot.lane.b32.xlu0 %v1141, 24
        %v1228 = vpop.permute.xlu0 %1227
        %1229 = vrot.lane.b32.xlu0 %v1142, 24
        %v1230 = vpop.permute.xlu0 %1229
        %1231 = vrot.lane.b32.xlu0 %v1143, 24
        %v1232 = vpop.permute.xlu0 %1231
        %1233 = vrot.lane.b32.xlu0 %v1144, 24
        %v1234 = vpop.permute.xlu0 %1233
        %1235 = vrot.lane.b32.xlu0 %v1145, 24
        %v1236 = vpop.permute.xlu0 %1235
        %1237 = vrot.lane.b32.xlu0 %v1146, 24
        %v1238 = vpop.permute.xlu0 %1237
        %1239 = vrot.lane.b32.xlu0 %v1147, 24
        %v1240 = vpop.permute.xlu0 %1239
        %1241 = vrot.lane.b32.xlu0 %v1148, 24
        %v1242 = vpop.permute.xlu0 %1241
        %1243 = vrot.lane.b32.xlu0 %v1149, 24
        %v1244 = vpop.permute.xlu0 %1243
        %1245 = vrot.lane.b32.xlu0 %v1150, 24
        %v1246 = vpop.permute.xlu0 %1245
        %vm1279 = vcmask 289984
        %1280 = vst.msk [vmem:[%s498] sm:$0xf] %vm1279, %v1184
        %1281 = vst.msk [vmem:[%s498 + $0x4] sm:$0xf] %vm1279, %v1186
        %1282 = vst.msk [vmem:[%s498 + $0xc] sm:$0xf] %vm1279, %v1188
        %1283 = vst.msk [vmem:[%s498 + $0x10] sm:$0xf] %vm1279, %v1190
        %1284 = vst.msk [vmem:[%s498 + $0x18] sm:$0xf] %vm1279, %v1192
        %1285 = vst.msk [vmem:[%s498 + $0x1c] sm:$0xf] %vm1279, %v1194
        %1286 = vst.msk [vmem:[%s498 + $0x24] sm:$0xf] %vm1279, %v1196
        %1287 = vst.msk [vmem:[%s498 + $0x28] sm:$0xf] %vm1279, %v1198
        %1288 = vst.msk [vmem:[%s498 + $0x30] sm:$0xf] %vm1279, %v1200
        %1289 = vst.msk [vmem:[%s498 + $0x34] sm:$0xf] %vm1279, %v1202
        %1290 = vst.msk [vmem:[%s498 + $0x3c] sm:$0xf] %vm1279, %v1204
        %1291 = vst.msk [vmem:[%s498 + $0x40] sm:$0xf] %vm1279, %v1206
        %1292 = vst.msk [vmem:[%s498 + $0x48] sm:$0xf] %vm1279, %v1208
        %1293 = vst.msk [vmem:[%s498 + $0x4c] sm:$0xf] %vm1279, %v1210
        %1294 = vst.msk [vmem:[%s498 + $0x54] sm:$0xf] %vm1279, %v1212
        %1295 = vst.msk [vmem:[%s498 + $0x58] sm:$0xf] %vm1279, %v1214
        %1296 = vst.msk [vmem:[%s498 + $0x60] sm:$0xf] %vm1279, %v1216
        %1297 = vst.msk [vmem:[%s498 + $0x64] sm:$0xf] %vm1279, %v1218
        %1298 = vst.msk [vmem:[%s498 + $0x6c] sm:$0xf] %vm1279, %v1220
        %1299 = vst.msk [vmem:[%s498 + $0x70] sm:$0xf] %vm1279, %v1222
        %1300 = vst.msk [vmem:[%s498 + $0x78] sm:$0xf] %vm1279, %v1224
        %1301 = vst.msk [vmem:[%s498 + $0x7c] sm:$0xf] %vm1279, %v1226
        %1302 = vst.msk [vmem:[%s498 + $0x84] sm:$0xf] %vm1279, %v1228
        %1303 = vst.msk [vmem:[%s498 + $0x88] sm:$0xf] %vm1279, %v1230
        %1304 = vst.msk [vmem:[%s498 + $0x90] sm:$0xf] %vm1279, %v1232
        %1305 = vst.msk [vmem:[%s498 + $0x94] sm:$0xf] %vm1279, %v1234
        %1306 = vst.msk [vmem:[%s498 + $0x9c] sm:$0xf] %vm1279, %v1236
        %1307 = vst.msk [vmem:[%s498 + $0xa0] sm:$0xf] %vm1279, %v1238
        %1308 = vst.msk [vmem:[%s498 + $0xa8] sm:$0xf] %vm1279, %v1240
        %1309 = vst.msk [vmem:[%s498 + $0xac] sm:$0xf] %vm1279, %v1242
        %1310 = vst.msk [vmem:[%s498 + $0xb4] sm:$0xf] %vm1279, %v1244
        %1311 = vst.msk [vmem:[%s498 + $0xb8] sm:$0xf] %vm1279, %v1246
        %v1312 = vld [vmem:[%s213] sm:$0xf]
        %v1313 = vld [vmem:[%s213 + $0x4] sm:$0xf]
        %v1314 = vld [vmem:[%s213 + $0x8] sm:$0xf]
        %v1315 = vld [vmem:[%s213 + $0xc] sm:$0xf]
        %v1316 = vld [vmem:[%s213 + $0x10] sm:$0xf]
        %v1317 = vld [vmem:[%s213 + $0x14] sm:$0xf]
        %v1318 = vld [vmem:[%s213 + $0x18] sm:$0xf]
        %v1319 = vld [vmem:[%s213 + $0x1c] sm:$0xf]
        %v1320 = vld [vmem:[%s213 + $0x20] sm:$0xf]
        %v1321 = vld [vmem:[%s213 + $0x24] sm:$0xf]
        %v1322 = vld [vmem:[%s213 + $0x28] sm:$0xf]
        %v1323 = vld [vmem:[%s213 + $0x2c] sm:$0xf]
        %v1324 = vld [vmem:[%s213 + $0x30] sm:$0xf]
        %v1325 = vld [vmem:[%s213 + $0x34] sm:$0xf]
        %v1326 = vld [vmem:[%s213 + $0x38] sm:$0xf]
        %v1327 = vld [vmem:[%s213 + $0x3c] sm:$0xf]
        %v1328 = vld [vmem:[%s213 + $0x40] sm:$0xf]
        %v1329 = vld [vmem:[%s213 + $0x44] sm:$0xf]
        %v1330 = vld [vmem:[%s213 + $0x48] sm:$0xf]
        %v1331 = vld [vmem:[%s213 + $0x4c] sm:$0xf]
        %v1332 = vld [vmem:[%s213 + $0x50] sm:$0xf]
        %v1333 = vld [vmem:[%s213 + $0x54] sm:$0xf]
        %v1334 = vld [vmem:[%s213 + $0x58] sm:$0xf]
        %v1335 = vld [vmem:[%s213 + $0x5c] sm:$0xf]
        %v1336 = vld [vmem:[%s213 + $0x60] sm:$0xf]
        %v1337 = vld [vmem:[%s213 + $0x64] sm:$0xf]
        %v1338 = vld [vmem:[%s213 + $0x68] sm:$0xf]
        %v1339 = vld [vmem:[%s213 + $0x6c] sm:$0xf]
        %v1340 = vld [vmem:[%s213 + $0x70] sm:$0xf]
        %v1341 = vld [vmem:[%s213 + $0x74] sm:$0xf]
        %v1342 = vld [vmem:[%s213 + $0x78] sm:$0xf]
        %v1343 = vld [vmem:[%s213 + $0x7c] sm:$0xf]
        %vm1344 = vsmask.f32 3328
        %vm1345 = vsmask.f32 7440
        %vm1346 = vmor %vm1344, %vm1345
        %v1348 = vshrl.u32 %v1312, 16
        %v1350 = vrot.slane %v1348, 4
        %v1351 = vshll.u32 %v1312, 16
        %v1353 = vrot.slane %v1351, 5
        %v1354 = vor.u32 %v1350, %v1353
        %v1355 = vrot.slane %v1354, 4
        %v1357 = vshll.u32 %v1313, 16
        %v1359 = vrot.slane %v1357, 5
        %v1360 = vsel %vm1346, %v1355, %v1359
        %v1361 = vshrl.u32 %v1313, 16
        %v1363 = vrot.slane %v1361, 4
        %v1364 = vor.u32 %v1363, %v1359
        %v1365 = vrot.slane %v1364, 4
        %v1367 = vshrl.u32 %v1314, 16
        %v1369 = vrot.slane %v1367, 4
        %v1370 = vshll.u32 %v1314, 16
        %v1372 = vrot.slane %v1370, 5
        %v1373 = vor.u32 %v1369, %v1372
        %v1374 = vrot.slane %v1373, 4
        %v1376 = vshll.u32 %v1315, 16
        %v1378 = vrot.slane %v1376, 5
        %v1379 = vsel %vm1346, %v1374, %v1378
        %v1380 = vshrl.u32 %v1315, 16
        %v1382 = vrot.slane %v1380, 4
        %v1383 = vor.u32 %v1382, %v1378
        %v1384 = vrot.slane %v1383, 4
        %v1386 = vshrl.u32 %v1316, 16
        %v1388 = vrot.slane %v1386, 4
        %v1389 = vshll.u32 %v1316, 16
        %v1391 = vrot.slane %v1389, 5
        %v1392 = vor.u32 %v1388, %v1391
        %v1393 = vrot.slane %v1392, 4
        %v1395 = vshll.u32 %v1317, 16
        %v1397 = vrot.slane %v1395, 5
        %v1398 = vsel %vm1346, %v1393, %v1397
        %v1399 = vshrl.u32 %v1317, 16
        %v1401 = vrot.slane %v1399, 4
        %v1402 = vor.u32 %v1401, %v1397
        %v1403 = vrot.slane %v1402, 4
        %v1405 = vshrl.u32 %v1318, 16
        %v1407 = vrot.slane %v1405, 4
        %v1408 = vshll.u32 %v1318, 16
        %v1410 = vrot.slane %v1408, 5
        %v1411 = vor.u32 %v1407, %v1410
        %v1412 = vrot.slane %v1411, 4
        %v1414 = vshll.u32 %v1319, 16
        %v1416 = vrot.slane %v1414, 5
        %v1417 = vsel %vm1346, %v1412, %v1416
        %v1418 = vshrl.u32 %v1319, 16
        %v1420 = vrot.slane %v1418, 4
        %v1421 = vor.u32 %v1420, %v1416
        %v1422 = vrot.slane %v1421, 4
        %v1424 = vshrl.u32 %v1320, 16
        %v1426 = vrot.slane %v1424, 4
        %v1427 = vshll.u32 %v1320, 16
        %v1429 = vrot.slane %v1427, 5
        %v1430 = vor.u32 %v1426, %v1429
        %v1431 = vrot.slane %v1430, 4
        %v1433 = vshll.u32 %v1321, 16
        %v1435 = vrot.slane %v1433, 5
        %v1436 = vsel %vm1346, %v1431, %v1435
        %v1437 = vshrl.u32 %v1321, 16
        %v1439 = vrot.slane %v1437, 4
        %v1440 = vor.u32 %v1439, %v1435
        %v1441 = vrot.slane %v1440, 4
        %v1443 = vshrl.u32 %v1322, 16
        %v1445 = vrot.slane %v1443, 4
        %v1446 = vshll.u32 %v1322, 16
        %v1448 = vrot.slane %v1446, 5
        %v1449 = vor.u32 %v1445, %v1448
        %v1450 = vrot.slane %v1449, 4
        %v1452 = vshll.u32 %v1323, 16
        %v1454 = vrot.slane %v1452, 5
        %v1455 = vsel %vm1346, %v1450, %v1454
        %v1456 = vshrl.u32 %v1323, 16
        %v1458 = vrot.slane %v1456, 4
        %v1459 = vor.u32 %v1458, %v1454
        %v1460 = vrot.slane %v1459, 4
        %v1462 = vshrl.u32 %v1324, 16
        %v1464 = vrot.slane %v1462, 4
        %v1465 = vshll.u32 %v1324, 16
        %v1467 = vrot.slane %v1465, 5
        %v1468 = vor.u32 %v1464, %v1467
        %v1469 = vrot.slane %v1468, 4
        %v1471 = vshll.u32 %v1325, 16
        %v1473 = vrot.slane %v1471, 5
        %v1474 = vsel %vm1346, %v1469, %v1473
        %v1475 = vshrl.u32 %v1325, 16
        %v1477 = vrot.slane %v1475, 4
        %v1478 = vor.u32 %v1477, %v1473
        %v1479 = vrot.slane %v1478, 4
        %v1481 = vshrl.u32 %v1326, 16
        %v1483 = vrot.slane %v1481, 4
        %v1484 = vshll.u32 %v1326, 16
        %v1486 = vrot.slane %v1484, 5
        %v1487 = vor.u32 %v1483, %v1486
        %v1488 = vrot.slane %v1487, 4
        %v1490 = vshll.u32 %v1327, 16
        %v1492 = vrot.slane %v1490, 5
        %v1493 = vsel %vm1346, %v1488, %v1492
        %v1494 = vshrl.u32 %v1327, 16
        %v1496 = vrot.slane %v1494, 4
        %v1497 = vor.u32 %v1496, %v1492
        %v1498 = vrot.slane %v1497, 4
        %v1500 = vshrl.u32 %v1328, 16
        %v1502 = vrot.slane %v1500, 4
        %v1503 = vshll.u32 %v1328, 16
        %v1505 = vrot.slane %v1503, 5
        %v1506 = vor.u32 %v1502, %v1505
        %v1507 = vrot.slane %v1506, 4
        %v1509 = vshll.u32 %v1329, 16
        %v1511 = vrot.slane %v1509, 5
        %v1512 = vsel %vm1346, %v1507, %v1511
        %v1513 = vshrl.u32 %v1329, 16
        %v1515 = vrot.slane %v1513, 4
        %v1516 = vor.u32 %v1515, %v1511
        %v1517 = vrot.slane %v1516, 4
        %v1519 = vshrl.u32 %v1330, 16
        %v1521 = vrot.slane %v1519, 4
        %v1522 = vshll.u32 %v1330, 16
        %v1524 = vrot.slane %v1522, 5
        %v1525 = vor.u32 %v1521, %v1524
        %v1526 = vrot.slane %v1525, 4
        %v1528 = vshll.u32 %v1331, 16
        %v1530 = vrot.slane %v1528, 5
        %v1531 = vsel %vm1346, %v1526, %v1530
        %v1532 = vshrl.u32 %v1331, 16
        %v1534 = vrot.slane %v1532, 4
        %v1535 = vor.u32 %v1534, %v1530
        %v1536 = vrot.slane %v1535, 4
        %v1538 = vshrl.u32 %v1332, 16
        %v1540 = vrot.slane %v1538, 4
        %v1541 = vshll.u32 %v1332, 16
        %v1543 = vrot.slane %v1541, 5
        %v1544 = vor.u32 %v1540, %v1543
        %v1545 = vrot.slane %v1544, 4
        %v1547 = vshll.u32 %v1333, 16
        %v1549 = vrot.slane %v1547, 5
        %v1550 = vsel %vm1346, %v1545, %v1549
        %v1551 = vshrl.u32 %v1333, 16
        %v1553 = vrot.slane %v1551, 4
        %v1554 = vor.u32 %v1553, %v1549
        %v1555 = vrot.slane %v1554, 4
        %v1557 = vshrl.u32 %v1334, 16
        %v1559 = vrot.slane %v1557, 4
        %v1560 = vshll.u32 %v1334, 16
        %v1562 = vrot.slane %v1560, 5
        %v1563 = vor.u32 %v1559, %v1562
        %v1564 = vrot.slane %v1563, 4
        %v1566 = vshll.u32 %v1335, 16
        %v1568 = vrot.slane %v1566, 5
        %v1569 = vsel %vm1346, %v1564, %v1568
        %v1570 = vshrl.u32 %v1335, 16
        %v1572 = vrot.slane %v1570, 4
        %v1573 = vor.u32 %v1572, %v1568
        %v1574 = vrot.slane %v1573, 4
        %v1576 = vshrl.u32 %v1336, 16
        %v1578 = vrot.slane %v1576, 4
        %v1579 = vshll.u32 %v1336, 16
        %v1581 = vrot.slane %v1579, 5
        %v1582 = vor.u32 %v1578, %v1581
        %v1583 = vrot.slane %v1582, 4
        %v1585 = vshll.u32 %v1337, 16
        %v1587 = vrot.slane %v1585, 5
        %v1588 = vsel %vm1346, %v1583, %v1587
        %v1589 = vshrl.u32 %v1337, 16
        %v1591 = vrot.slane %v1589, 4
        %v1592 = vor.u32 %v1591, %v1587
        %v1593 = vrot.slane %v1592, 4
        %v1595 = vshrl.u32 %v1338, 16
        %v1597 = vrot.slane %v1595, 4
        %v1598 = vshll.u32 %v1338, 16
        %v1600 = vrot.slane %v1598, 5
        %v1601 = vor.u32 %v1597, %v1600
        %v1602 = vrot.slane %v1601, 4
        %v1604 = vshll.u32 %v1339, 16
        %v1606 = vrot.slane %v1604, 5
        %v1607 = vsel %vm1346, %v1602, %v1606
        %v1608 = vshrl.u32 %v1339, 16
        %v1610 = vrot.slane %v1608, 4
        %v1611 = vor.u32 %v1610, %v1606
        %v1612 = vrot.slane %v1611, 4
        %v1614 = vshrl.u32 %v1340, 16
        %v1616 = vrot.slane %v1614, 4
        %v1617 = vshll.u32 %v1340, 16
        %v1619 = vrot.slane %v1617, 5
        %v1620 = vor.u32 %v1616, %v1619
        %v1621 = vrot.slane %v1620, 4
        %v1623 = vshll.u32 %v1341, 16
        %v1625 = vrot.slane %v1623, 5
        %v1626 = vsel %vm1346, %v1621, %v1625
        %v1627 = vshrl.u32 %v1341, 16
        %v1629 = vrot.slane %v1627, 4
        %v1630 = vor.u32 %v1629, %v1625
        %v1631 = vrot.slane %v1630, 4
        %v1633 = vshrl.u32 %v1342, 16
        %v1635 = vrot.slane %v1633, 4
        %v1636 = vshll.u32 %v1342, 16
        %v1638 = vrot.slane %v1636, 5
        %v1639 = vor.u32 %v1635, %v1638
        %v1640 = vrot.slane %v1639, 4
        %v1642 = vshll.u32 %v1343, 16
        %v1644 = vrot.slane %v1642, 5
        %v1645 = vsel %vm1346, %v1640, %v1644
        %v1646 = vshrl.u32 %v1343, 16
        %v1648 = vrot.slane %v1646, 4
        %v1649 = vor.u32 %v1648, %v1644
        %v1650 = vrot.slane %v1649, 4
        %1651 = vrot.lane.b32.xlu0 %v1360, 36
        %v1652 = vpop.permute.xlu0 %1651
        %1653 = vrot.lane.b32.xlu0 %v1365, 36
        %v1654 = vpop.permute.xlu0 %1653
        %1655 = vrot.lane.b32.xlu0 %v1379, 36
        %v1656 = vpop.permute.xlu0 %1655
        %1657 = vrot.lane.b32.xlu0 %v1384, 36
        %v1658 = vpop.permute.xlu0 %1657
        %1659 = vrot.lane.b32.xlu0 %v1398, 36
        %v1660 = vpop.permute.xlu0 %1659
        %1661 = vrot.lane.b32.xlu0 %v1403, 36
        %v1662 = vpop.permute.xlu0 %1661
        %1663 = vrot.lane.b32.xlu0 %v1417, 36
        %v1664 = vpop.permute.xlu0 %1663
        %1665 = vrot.lane.b32.xlu0 %v1422, 36
        %v1666 = vpop.permute.xlu0 %1665
        %1667 = vrot.lane.b32.xlu0 %v1436, 36
        %v1668 = vpop.permute.xlu0 %1667
        %1669 = vrot.lane.b32.xlu0 %v1441, 36
        %v1670 = vpop.permute.xlu0 %1669
        %1671 = vrot.lane.b32.xlu0 %v1455, 36
        %v1672 = vpop.permute.xlu0 %1671
        %1673 = vrot.lane.b32.xlu0 %v1460, 36
        %v1674 = vpop.permute.xlu0 %1673
        %1675 = vrot.lane.b32.xlu0 %v1474, 36
        %v1676 = vpop.permute.xlu0 %1675
        %1677 = vrot.lane.b32.xlu0 %v1479, 36
        %v1678 = vpop.permute.xlu0 %1677
        %1679 = vrot.lane.b32.xlu0 %v1493, 36
        %v1680 = vpop.permute.xlu0 %1679
        %1681 = vrot.lane.b32.xlu0 %v1498, 36
        %v1682 = vpop.permute.xlu0 %1681
        %1683 = vrot.lane.b32.xlu0 %v1512, 36
        %v1684 = vpop.permute.xlu0 %1683
        %1685 = vrot.lane.b32.xlu0 %v1517, 36
        %v1686 = vpop.permute.xlu0 %1685
        %1687 = vrot.lane.b32.xlu0 %v1531, 36
        %v1688 = vpop.permute.xlu0 %1687
        %1689 = vrot.lane.b32.xlu0 %v1536, 36
        %v1690 = vpop.permute.xlu0 %1689
        %1691 = vrot.lane.b32.xlu0 %v1550, 36
        %v1692 = vpop.permute.xlu0 %1691
        %1693 = vrot.lane.b32.xlu0 %v1555, 36
        %v1694 = vpop.permute.xlu0 %1693
        %1695 = vrot.lane.b32.xlu0 %v1569, 36
        %v1696 = vpop.permute.xlu0 %1695
        %1697 = vrot.lane.b32.xlu0 %v1574, 36
        %v1698 = vpop.permute.xlu0 %1697
        %1699 = vrot.lane.b32.xlu0 %v1588, 36
        %v1700 = vpop.permute.xlu0 %1699
        %1701 = vrot.lane.b32.xlu0 %v1593, 36
        %v1702 = vpop.permute.xlu0 %1701
        %1703 = vrot.lane.b32.xlu0 %v1607, 36
        %v1704 = vpop.permute.xlu0 %1703
        %1705 = vrot.lane.b32.xlu0 %v1612, 36
        %v1706 = vpop.permute.xlu0 %1705
        %1707 = vrot.lane.b32.xlu0 %v1626, 36
        %v1708 = vpop.permute.xlu0 %1707
        %1709 = vrot.lane.b32.xlu0 %v1631, 36
        %v1710 = vpop.permute.xlu0 %1709
        %1711 = vrot.lane.b32.xlu0 %v1645, 36
        %v1712 = vpop.permute.xlu0 %1711
        %1713 = vrot.lane.b32.xlu0 %v1650, 36
        %v1714 = vpop.permute.xlu0 %1713
        %vm1747 = vcmask 388384
        %1748 = vst.msk [vmem:[%s498] sm:$0xf] %vm1747, %v1652
        %vm1749 = vcmask 388384
        %vm1750 = vmand %vm1749, %vm1344
        %v1751 = vld [vmem:[%s498 + $0x4] sm:$0xf]
        %v1752 = vsel %vm1750, %v1654, %v1751
        %1753 = vst [vmem:[%s498 + $0x4] sm:$0xf] %v1752
        %1754 = vst.msk [vmem:[%s498 + $0xc] sm:$0xf] %vm1747, %v1656
        %v1755 = vld [vmem:[%s498 + $0x10] sm:$0xf]
        %v1756 = vsel %vm1750, %v1658, %v1755
        %1757 = vst [vmem:[%s498 + $0x10] sm:$0xf] %v1756
        %1758 = vst.msk [vmem:[%s498 + $0x18] sm:$0xf] %vm1747, %v1660
        %v1759 = vld [vmem:[%s498 + $0x1c] sm:$0xf]
        %v1760 = vsel %vm1750, %v1662, %v1759
        %1761 = vst [vmem:[%s498 + $0x1c] sm:$0xf] %v1760
        %1762 = vst.msk [vmem:[%s498 + $0x24] sm:$0xf] %vm1747, %v1664
        %v1763 = vld [vmem:[%s498 + $0x28] sm:$0xf]
        %v1764 = vsel %vm1750, %v1666, %v1763
        %1765 = vst [vmem:[%s498 + $0x28] sm:$0xf] %v1764
        %1766 = vst.msk [vmem:[%s498 + $0x30] sm:$0xf] %vm1747, %v1668
        %v1767 = vld [vmem:[%s498 + $0x34] sm:$0xf]
        %v1768 = vsel %vm1750, %v1670, %v1767
        %1769 = vst [vmem:[%s498 + $0x34] sm:$0xf] %v1768
        %1770 = vst.msk [vmem:[%s498 + $0x3c] sm:$0xf] %vm1747, %v1672
        %v1771 = vld [vmem:[%s498 + $0x40] sm:$0xf]
        %v1772 = vsel %vm1750, %v1674, %v1771
        %1773 = vst [vmem:[%s498 + $0x40] sm:$0xf] %v1772
        %1774 = vst.msk [vmem:[%s498 + $0x48] sm:$0xf] %vm1747, %v1676
        %v1775 = vld [vmem:[%s498 + $0x4c] sm:$0xf]
        %v1776 = vsel %vm1750, %v1678, %v1775
        %1777 = vst [vmem:[%s498 + $0x4c] sm:$0xf] %v1776
        %1778 = vst.msk [vmem:[%s498 + $0x54] sm:$0xf] %vm1747, %v1680
        %v1779 = vld [vmem:[%s498 + $0x58] sm:$0xf]
        %v1780 = vsel %vm1750, %v1682, %v1779
        %1781 = vst [vmem:[%s498 + $0x58] sm:$0xf] %v1780
        %1782 = vst.msk [vmem:[%s498 + $0x60] sm:$0xf] %vm1747, %v1684
        %v1783 = vld [vmem:[%s498 + $0x64] sm:$0xf]
        %v1784 = vsel %vm1750, %v1686, %v1783
        %1785 = vst [vmem:[%s498 + $0x64] sm:$0xf] %v1784
        %1786 = vst.msk [vmem:[%s498 + $0x6c] sm:$0xf] %vm1747, %v1688
        %v1787 = vld [vmem:[%s498 + $0x70] sm:$0xf]
        %v1788 = vsel %vm1750, %v1690, %v1787
        %1789 = vst [vmem:[%s498 + $0x70] sm:$0xf] %v1788
        %1790 = vst.msk [vmem:[%s498 + $0x78] sm:$0xf] %vm1747, %v1692
        %v1791 = vld [vmem:[%s498 + $0x7c] sm:$0xf]
        %v1792 = vsel %vm1750, %v1694, %v1791
        %1793 = vst [vmem:[%s498 + $0x7c] sm:$0xf] %v1792
        %1794 = vst.msk [vmem:[%s498 + $0x84] sm:$0xf] %vm1747, %v1696
        %v1795 = vld [vmem:[%s498 + $0x88] sm:$0xf]
        %v1796 = vsel %vm1750, %v1698, %v1795
        %1797 = vst [vmem:[%s498 + $0x88] sm:$0xf] %v1796
        %1798 = vst.msk [vmem:[%s498 + $0x90] sm:$0xf] %vm1747, %v1700
        %v1799 = vld [vmem:[%s498 + $0x94] sm:$0xf]
        %v1800 = vsel %vm1750, %v1702, %v1799
        %1801 = vst [vmem:[%s498 + $0x94] sm:$0xf] %v1800
        %1802 = vst.msk [vmem:[%s498 + $0x9c] sm:$0xf] %vm1747, %v1704
        %v1803 = vld [vmem:[%s498 + $0xa0] sm:$0xf]
        %v1804 = vsel %vm1750, %v1706, %v1803
        %1805 = vst [vmem:[%s498 + $0xa0] sm:$0xf] %v1804
        %1806 = vst.msk [vmem:[%s498 + $0xa8] sm:$0xf] %vm1747, %v1708
        %v1807 = vld [vmem:[%s498 + $0xac] sm:$0xf]
        %v1808 = vsel %vm1750, %v1710, %v1807
        %1809 = vst [vmem:[%s498 + $0xac] sm:$0xf] %v1808
        %1810 = vst.msk [vmem:[%s498 + $0xb4] sm:$0xf] %vm1747, %v1712
        %v1811 = vld [vmem:[%s498 + $0xb8] sm:$0xf]
        %v1812 = vsel %vm1750, %v1714, %v1811
        %1813 = vst [vmem:[%s498 + $0xb8] sm:$0xf] %v1812
        %v1814 = vld [vmem:[#allocation2] sm:$0xf]
        %v1815 = vld [vmem:[#allocation2 + $0x4] sm:$0xf]
        %v1816 = vld [vmem:[#allocation2 + $0x8] sm:$0xf]
        %v1817 = vld [vmem:[#allocation2 + $0xc] sm:$0xf]
        %v1818 = vld [vmem:[#allocation2 + $0x10] sm:$0xf]
        %v1819 = vld [vmem:[#allocation2 + $0x14] sm:$0xf]
        %v1820 = vld [vmem:[#allocation2 + $0x18] sm:$0xf]
        %v1821 = vld [vmem:[#allocation2 + $0x1c] sm:$0xf]
        %v1822 = vld [vmem:[#allocation2 + $0x20] sm:$0xf]
        %v1823 = vld [vmem:[#allocation2 + $0x24] sm:$0xf]
        %v1824 = vld [vmem:[#allocation2 + $0x28] sm:$0xf]
        %v1825 = vld [vmem:[#allocation2 + $0x2c] sm:$0xf]
        %v1826 = vld [vmem:[#allocation2 + $0x30] sm:$0xf]
        %v1827 = vld [vmem:[#allocation2 + $0x34] sm:$0xf]
        %v1828 = vld [vmem:[#allocation2 + $0x38] sm:$0xf]
        %v1829 = vld [vmem:[#allocation2 + $0x3c] sm:$0xf]
        %v1830 = vld [vmem:[#allocation2 + $0x40] sm:$0xf]
        %v1831 = vld [vmem:[#allocation2 + $0x44] sm:$0xf]
        %v1832 = vld [vmem:[#allocation2 + $0x48] sm:$0xf]
        %v1833 = vld [vmem:[#allocation2 + $0x4c] sm:$0xf]
        %v1834 = vld [vmem:[#allocation2 + $0x50] sm:$0xf]
        %v1835 = vld [vmem:[#allocation2 + $0x54] sm:$0xf]
        %v1836 = vld [vmem:[#allocation2 + $0x58] sm:$0xf]
        %v1837 = vld [vmem:[#allocation2 + $0x5c] sm:$0xf]
        %v1838 = vld [vmem:[#allocation2 + $0x60] sm:$0xf]
        %v1839 = vld [vmem:[#allocation2 + $0x64] sm:$0xf]
        %v1840 = vld [vmem:[#allocation2 + $0x68] sm:$0xf]
        %v1841 = vld [vmem:[#allocation2 + $0x6c] sm:$0xf]
        %v1842 = vld [vmem:[#allocation2 + $0x70] sm:$0xf]
        %v1843 = vld [vmem:[#allocation2 + $0x74] sm:$0xf]
        %v1844 = vld [vmem:[#allocation2 + $0x78] sm:$0xf]
        %v1845 = vld [vmem:[#allocation2 + $0x7c] sm:$0xf]
        %v1846 = vld [vmem:[#allocation2 + $0x80] sm:$0xf]
        %v1847 = vld [vmem:[#allocation2 + $0x84] sm:$0xf]
        %v1848 = vld [vmem:[#allocation2 + $0x88] sm:$0xf]
        %v1849 = vld [vmem:[#allocation2 + $0x8c] sm:$0xf]
        %v1850 = vld [vmem:[#allocation2 + $0x90] sm:$0xf]
        %v1851 = vld [vmem:[#allocation2 + $0x94] sm:$0xf]
        %v1852 = vld [vmem:[#allocation2 + $0x98] sm:$0xf]
        %v1853 = vld [vmem:[#allocation2 + $0x9c] sm:$0xf]
        %v1854 = vld [vmem:[#allocation2 + $0xa0] sm:$0xf]
        %v1855 = vld [vmem:[#allocation2 + $0xa4] sm:$0xf]
        %v1856 = vld [vmem:[#allocation2 + $0xa8] sm:$0xf]
        %v1857 = vld [vmem:[#allocation2 + $0xac] sm:$0xf]
        %v1858 = vld [vmem:[#allocation2 + $0xb0] sm:$0xf]
        %v1859 = vld [vmem:[#allocation2 + $0xb4] sm:$0xf]
        %v1860 = vld [vmem:[#allocation2 + $0xb8] sm:$0xf]
        %v1861 = vld [vmem:[#allocation2 + $0xbc] sm:$0xf]
        %v1862 = vld [vmem:[#allocation6] sm:$0xf]
        %v1863 = vld [vmem:[#allocation6 + $0x4] sm:$0xf]
        %v1864 = vld [vmem:[#allocation6 + $0x8] sm:$0xf]
        %v1865 = vld [vmem:[#allocation6 + $0xc] sm:$0xf]
        %v1866 = vld [vmem:[#allocation6 + $0x10] sm:$0xf]
        %v1867 = vld [vmem:[#allocation6 + $0x14] sm:$0xf]
        %s1868 = scalar_lea.vmem [#allocation2], 12
        %v1869 = vld [vmem:[%s1868] sm:$0xf]
        %v1870 = vld [vmem:[%s1868 + $0x4] sm:$0xf]
        %v1871 = vld [vmem:[%s1868 + $0x8] sm:$0xf]
        %v1872 = vld [vmem:[%s1868 + $0xc] sm:$0xf]
        %v1873 = vld [vmem:[%s1868 + $0x10] sm:$0xf]
        %v1874 = vld [vmem:[%s1868 + $0x14] sm:$0xf]
        %v1875 = vld [vmem:[%s1868 + $0x18] sm:$0xf]
        %v1876 = vld [vmem:[%s1868 + $0x1c] sm:$0xf]
        %v1877 = vld [vmem:[%s1868 + $0x20] sm:$0xf]
        %v1878 = vld [vmem:[%s1868 + $0x24] sm:$0xf]
        %v1879 = vld [vmem:[%s1868 + $0x28] sm:$0xf]
        %v1880 = vld [vmem:[%s1868 + $0x2c] sm:$0xf]
        %v1881 = vld [vmem:[%s1868 + $0x30] sm:$0xf]
        %v1882 = vld [vmem:[%s1868 + $0x34] sm:$0xf]
        %v1883 = vld [vmem:[%s1868 + $0x38] sm:$0xf]
        %v1884 = vld [vmem:[%s1868 + $0x3c] sm:$0xf]
        %v1885 = vld [vmem:[%s1868 + $0x40] sm:$0xf]
        %v1886 = vld [vmem:[%s1868 + $0x44] sm:$0xf]
        %v1887 = vld [vmem:[%s1868 + $0x48] sm:$0xf]
        %v1888 = vld [vmem:[%s1868 + $0x4c] sm:$0xf]
        %v1889 = vld [vmem:[%s1868 + $0x50] sm:$0xf]
        %v1890 = vld [vmem:[%s1868 + $0x54] sm:$0xf]
        %v1891 = vld [vmem:[%s1868 + $0x58] sm:$0xf]
        %v1892 = vld [vmem:[%s1868 + $0x5c] sm:$0xf]
        %v1893 = vld [vmem:[%s1868 + $0x60] sm:$0xf]
        %v1894 = vld [vmem:[%s1868 + $0x64] sm:$0xf]
        %v1895 = vld [vmem:[%s1868 + $0x68] sm:$0xf]
        %v1896 = vld [vmem:[%s1868 + $0x6c] sm:$0xf]
        %v1897 = vld [vmem:[%s1868 + $0x70] sm:$0xf]
        %v1898 = vld [vmem:[%s1868 + $0x74] sm:$0xf]
        %v1899 = vld [vmem:[%s1868 + $0x78] sm:$0xf]
        %v1900 = vld [vmem:[%s1868 + $0x7c] sm:$0xf]
        %v1901 = vld [vmem:[%s1868 + $0x80] sm:$0xf]
        %v1902 = vld [vmem:[%s1868 + $0x84] sm:$0xf]
        %v1903 = vld [vmem:[%s1868 + $0x88] sm:$0xf]
        %v1904 = vld [vmem:[%s1868 + $0x8c] sm:$0xf]
        %v1905 = vld [vmem:[%s1868 + $0x90] sm:$0xf]
        %v1906 = vld [vmem:[%s1868 + $0x94] sm:$0xf]
        %v1907 = vld [vmem:[%s1868 + $0x98] sm:$0xf]
        %v1908 = vld [vmem:[%s1868 + $0x9c] sm:$0xf]
        %v1909 = vld [vmem:[%s1868 + $0xa0] sm:$0xf]
        %v1910 = vld [vmem:[%s1868 + $0xa4] sm:$0xf]
        %v1911 = vld [vmem:[%s1868 + $0xa8] sm:$0xf]
        %v1912 = vld [vmem:[%s1868 + $0xac] sm:$0xf]
        %v1913 = vld [vmem:[%s1868 + $0xb0] sm:$0xf]
        %v1914 = vld [vmem:[%s1868 + $0xb4] sm:$0xf]
        %v1915 = vld [vmem:[%s1868 + $0xb8] sm:$0xf]
        %v1916 = vld [vmem:[%s1868 + $0xbc] sm:$0xf]
        %s1917 = scalar_lea.vmem [#allocation6], 24
        %v1918 = vld [vmem:[%s1917] sm:$0xf]
        %v1919 = vld [vmem:[%s1917 + $0x4] sm:$0xf]
        %v1920 = vld [vmem:[%s1917 + $0x8] sm:$0xf]
        %v1921 = vld [vmem:[%s1917 + $0xc] sm:$0xf]
        %v1922 = vld [vmem:[%s1917 + $0x10] sm:$0xf]
        %v1923 = vld [vmem:[%s1917 + $0x14] sm:$0xf]
        %v1972 = vunpack.c.l.b16 %v1869
        %v1973 = vunpack.c.l.b16 %v1870
        %v1974 = vunpack.c.l.b16 %v1871
        %v1975 = vunpack.c.l.b16 %v1872
        %v1976 = vunpack.c.l.b16 %v1873
        %v1977 = vunpack.c.l.b16 %v1874
        %v1978 = vunpack.c.l.b16 %v1875
        %v1979 = vunpack.c.l.b16 %v1876
        %v1980 = vunpack.c.l.b16 %v1877
        %v1981 = vunpack.c.l.b16 %v1878
        %v1982 = vunpack.c.l.b16 %v1879
        %v1983 = vunpack.c.l.b16 %v1880
        %v1984 = vunpack.c.l.b16 %v1881
        %v1985 = vunpack.c.l.b16 %v1882
        %v1986 = vunpack.c.l.b16 %v1883
        %v1987 = vunpack.c.l.b16 %v1884
        %v1988 = vunpack.c.l.b16 %v1885
        %v1989 = vunpack.c.l.b16 %v1886
        %v1990 = vunpack.c.l.b16 %v1887
        %v1991 = vunpack.c.l.b16 %v1888
        %v1992 = vunpack.c.l.b16 %v1889
        %v1993 = vunpack.c.l.b16 %v1890
        %v1994 = vunpack.c.l.b16 %v1891
        %v1995 = vunpack.c.l.b16 %v1892
        %v1996 = vunpack.c.l.b16 %v1893
        %v1997 = vunpack.c.l.b16 %v1894
        %v1998 = vunpack.c.l.b16 %v1895
        %v1999 = vunpack.c.l.b16 %v1896
        %v2000 = vunpack.c.l.b16 %v1897
        %v2001 = vunpack.c.l.b16 %v1898
        %v2002 = vunpack.c.l.b16 %v1899
        %v2003 = vunpack.c.l.b16 %v1900
        %v2004 = vunpack.c.l.b16 %v1901
        %v2005 = vunpack.c.l.b16 %v1902
        %v2006 = vunpack.c.l.b16 %v1903
        %v2007 = vunpack.c.l.b16 %v1904
        %v2008 = vunpack.c.l.b16 %v1905
        %v2009 = vunpack.c.l.b16 %v1906
        %v2010 = vunpack.c.l.b16 %v1907
        %v2011 = vunpack.c.l.b16 %v1908
        %v2012 = vunpack.c.l.b16 %v1909
        %v2013 = vunpack.c.l.b16 %v1910
        %v2014 = vunpack.c.l.b16 %v1911
        %v2015 = vunpack.c.l.b16 %v1912
        %v2016 = vunpack.c.l.b16 %v1913
        %v2017 = vunpack.c.l.b16 %v1914
        %v2018 = vunpack.c.l.b16 %v1915
        %v2019 = vunpack.c.l.b16 %v1916
        %v2020 = vpack.c.b16 %v1973, %v1972
        %v2021 = vpack.c.b16 %v1975, %v1974
        %v2022 = vpack.c.b16 %v1977, %v1976
        %v2023 = vpack.c.b16 %v1979, %v1978
        %v2024 = vpack.c.b16 %v1981, %v1980
        %v2025 = vpack.c.b16 %v1983, %v1982
        %v2026 = vpack.c.b16 %v1985, %v1984
        %v2027 = vpack.c.b16 %v1987, %v1986
        %v2028 = vpack.c.b16 %v1989, %v1988
        %v2029 = vpack.c.b16 %v1991, %v1990
        %v2030 = vpack.c.b16 %v1993, %v1992
        %v2031 = vpack.c.b16 %v1995, %v1994
        %v2032 = vpack.c.b16 %v1997, %v1996
        %v2033 = vpack.c.b16 %v1999, %v1998
        %v2034 = vpack.c.b16 %v2001, %v2000
        %v2035 = vpack.c.b16 %v2003, %v2002
        %v2036 = vpack.c.b16 %v2005, %v2004
        %v2037 = vpack.c.b16 %v2007, %v2006
        %v2038 = vpack.c.b16 %v2009, %v2008
        %v2039 = vpack.c.b16 %v2011, %v2010
        %v2040 = vpack.c.b16 %v2013, %v2012
        %v2041 = vpack.c.b16 %v2015, %v2014
        %v2042 = vpack.c.b16 %v2017, %v2016
        %v2043 = vpack.c.b16 %v2019, %v2018
        %v2050 = vunpack.c.l.b16 %v1918
        %v2051 = vunpack.c.l.b16 %v1919
        %v2052 = vunpack.c.l.b16 %v1920
        %v2053 = vunpack.c.l.b16 %v1921
        %v2054 = vunpack.c.l.b16 %v1922
        %v2055 = vunpack.c.l.b16 %v1923
        %v2056 = vpack.c.b16 %v2051, %v2050
        %v2057 = vpack.c.b16 %v2053, %v2052
        %v2058 = vpack.c.b16 %v2055, %v2054
        %vm2062 = vcmask 392192
        %v2064 = vsel %vm2062, %v2020, 0
        %v2067 = vsel %vm2062, %v2021, 0
        %v2070 = vsel %vm2062, %v2022, 0
        %v2073 = vsel %vm2062, %v2023, 0
        %v2076 = vsel %vm2062, %v2024, 0
        %v2079 = vsel %vm2062, %v2025, 0
        %v2082 = vsel %vm2062, %v2026, 0
        %v2085 = vsel %vm2062, %v2027, 0
        %v2088 = vsel %vm2062, %v2028, 0
        %v2091 = vsel %vm2062, %v2029, 0
        %v2094 = vsel %vm2062, %v2030, 0
        %v2097 = vsel %vm2062, %v2031, 0
        %v2100 = vsel %vm2062, %v2032, 0
        %v2103 = vsel %vm2062, %v2033, 0
        %v2106 = vsel %vm2062, %v2034, 0
        %v2109 = vsel %vm2062, %v2035, 0
        %v2112 = vsel %vm2062, %v2036, 0
        %v2115 = vsel %vm2062, %v2037, 0
        %v2118 = vsel %vm2062, %v2038, 0
        %v2121 = vsel %vm2062, %v2039, 0
        %v2124 = vsel %vm2062, %v2040, 0
        %v2127 = vsel %vm2062, %v2041, 0
        %v2130 = vsel %vm2062, %v2042, 0
        %v2133 = vsel %vm2062, %v2043, 0
        %2135 = vmatprep.subr.bf16.mxu0 0
        %2136 = vmatpush1.bf16.msra.mxu0 %v2056
        %2137 = vmatprep.subr.bf16.mxu0 0
        %2138 = vmatpush1.bf16.msra.mxu0 %v2057
        %2139 = vmatprep.subr.bf16.mxu0 0
        %2140 = vmatpush1.bf16.msra.mxu0 %v2058
        %2141 = vmatprep.subr.bf16.mxu0 0
        %2142 = vmatpush1.bf16.msra.mxu0 0
        %2143 = vmatprep.subr.bf16.mxu0 0
        %2144 = vmatpush1.bf16.msra.mxu0 0
        %2145 = vmatprep.subr.bf16.mxu0 0
        %2146 = vmatpush1.bf16.msra.mxu0 0
        %2147 = vmatprep.subr.bf16.mxu0 0
        %2148 = vmatpush1.bf16.msra.mxu0 0
        %2149 = vmatprep.subr.bf16.mxu0 0
        %2150 = vmatpush1.bf16.msra.mxu0 0
        %2151 = vmatprep.subr.bf16.mxu0 0
        %2152 = vmatpush1.bf16.msra.mxu0 0
        %2153 = vmatprep.subr.bf16.mxu0 0
        %2154 = vmatpush1.bf16.msra.mxu0 0
        %2155 = vmatprep.subr.bf16.mxu0 0
        %2156 = vmatpush1.bf16.msra.mxu0 0
        %2157 = vmatprep.subr.bf16.mxu0 0
        %2158 = vmatpush1.bf16.msra.mxu0 0
        %2159 = vmatprep.subr.bf16.mxu0 0
        %2160 = vmatpush1.bf16.msra.mxu0 0
        %2161 = vmatprep.subr.bf16.mxu0 0
        %2162 = vmatpush1.bf16.msra.mxu0 0
        %2163 = vmatprep.subr.bf16.mxu0 0
        %2164 = vmatpush1.bf16.msra.mxu0 0
        %2165 = vmatprep.subr.bf16.mxu0 0
        %2166 = vmatpush1.bf16.msra.mxu0 0
        %2167 = vmatprep.mubr.bf16.mxu0 0
        %2168 = vmatmul.mubr.bf16.gmra.mrb[0].mxu0 %v2064
        %v2169 = vpop.f32.mrb[0].mxu0
        %v2170 = vadd.f32 0.0, %v2169
        %v2171 = vpop.f32.mrb[0].mxu0
        %v2172 = vpop.f32.mrb[0].mxu0
        %v2173 = vadd.f32 0.0, %v2172
        %v2174 = vpop.f32.mrb[0].mxu0
        %2175 = vmatprep.mubr.bf16.mxu0 0
        %2176 = vmatmul.mubr.bf16.gmra.mrb[0].mxu0 %v2067
        %v2177 = vpop.f32.mrb[0].mxu0
        %v2178 = vpop.f32.mrb[0].mxu0
        %v2179 = vpop.f32.mrb[0].mxu0
        %v2180 = vadd.f32 0.0, %v2179
        %v2181 = vpop.f32.mrb[0].mxu0
        %2182 = vmatprep.mubr.bf16.mxu0 0
        %2183 = vmatmul.mubr.bf16.gmra.mrb[0].mxu0 %v2070
        %v2184 = vpop.f32.mrb[0].mxu0
        %v2185 = vadd.f32 0.0, %v2184
        %v2186 = vpop.f32.mrb[0].mxu0
        %v2187 = vpop.f32.mrb[0].mxu0
        %v2188 = vpop.f32.mrb[0].mxu0
        %2189 = vmatprep.mubr.bf16.mxu0 0
        %2190 = vmatmul.mubr.bf16.gmra.mrb[0].mxu0 %v2073
        %v2191 = vpop.f32.mrb[0].mxu0
        %v2192 = vadd.f32 0.0, %v2191
        %v2193 = vpop.f32.mrb[0].mxu0
        %v2194 = vpop.f32.mrb[0].mxu0
        %v2195 = vadd.f32 0.0, %v2194
        %v2196 = vpop.f32.mrb[0].mxu0
        %2197 = vmatprep.mubr.bf16.mxu0 0
        %2198 = vmatmul.mubr.bf16.gmra.mrb[0].mxu0 %v2076
        %v2199 = vpop.f32.mrb[0].mxu0
        %v2200 = vpop.f32.mrb[0].mxu0
        %v2201 = vpop.f32.mrb[0].mxu0
        %v2202 = vadd.f32 0.0, %v2201
        %v2203 = vpop.f32.mrb[0].mxu0
        %2204 = vmatprep.mubr.bf16.mxu0 0
        %2205 = vmatmul.mubr.bf16.gmra.mrb[0].mxu0 %v2079
        %v2206 = vpop.f32.mrb[0].mxu0
        %v2207 = vadd.f32 0.0, %v2206
        %v2208 = vpop.f32.mrb[0].mxu0
        %v2209 = vpop.f32.mrb[0].mxu0
        %v2210 = vpop.f32.mrb[0].mxu0
        %2211 = vmatprep.mubr.bf16.mxu0 0
        %2212 = vmatmul.mubr.bf16.gmra.mrb[0].mxu0 %v2082
        %v2213 = vpop.f32.mrb[0].mxu0
        %v2214 = vadd.f32 0.0, %v2213
        %v2215 = vpop.f32.mrb[0].mxu0
        %v2216 = vpop.f32.mrb[0].mxu0
        %v2217 = vadd.f32 0.0, %v2216
        %v2218 = vpop.f32.mrb[0].mxu0
        %2219 = vmatprep.mubr.bf16.mxu0 0
        %2220 = vmatmul.mubr.bf16.gmra.mrb[0].mxu0 %v2085
        %v2221 = vpop.f32.mrb[0].mxu0
        %v2222 = vpop.f32.mrb[0].mxu0
        %v2223 = vpop.f32.mrb[0].mxu0
        %v2224 = vadd.f32 0.0, %v2223
        %v2225 = vpop.f32.mrb[0].mxu0
        %2226 = vmatprep.mubr.bf16.mxu0 0
        %2227 = vmatmul.mubr.bf16.gmra.mrb[0].mxu0 %v2088
        %v2228 = vpop.f32.mrb[0].mxu0
        %v2229 = vadd.f32 0.0, %v2228
        %v2230 = vpop.f32.mrb[0].mxu0
        %v2231 = vpop.f32.mrb[0].mxu0
        %v2232 = vpop.f32.mrb[0].mxu0
        %2233 = vmatprep.mubr.bf16.mxu0 0
        %2234 = vmatmul.mubr.bf16.gmra.mrb[0].mxu0 %v2091
        %v2235 = vpop.f32.mrb[0].mxu0
        %v2236 = vadd.f32 0.0, %v2235
        %v2237 = vpop.f32.mrb[0].mxu0
        %v2238 = vpop.f32.mrb[0].mxu0
        %v2239 = vadd.f32 0.0, %v2238
        %v2240 = vpop.f32.mrb[0].mxu0
        %2241 = vmatprep.mubr.bf16.mxu0 0
        %2242 = vmatmul.mubr.bf16.gmra.mrb[0].mxu0 %v2094
        %v2243 = vpop.f32.mrb[0].mxu0
        %v2244 = vpop.f32.mrb[0].mxu0
        %v2245 = vpop.f32.mrb[0].mxu0
        %v2246 = vadd.f32 0.0, %v2245
        %v2247 = vpop.f32.mrb[0].mxu0
        %2248 = vmatprep.mubr.bf16.mxu0 0
        %2249 = vmatmul.mubr.bf16.gmra.mrb[0].mxu0 %v2097
        %v2250 = vpop.f32.mrb[0].mxu0
        %v2251 = vadd.f32 0.0, %v2250
        %v2252 = vpop.f32.mrb[0].mxu0
        %v2253 = vpop.f32.mrb[0].mxu0
        %v2254 = vpop.f32.mrb[0].mxu0
        %2255 = vmatprep.mubr.bf16.mxu0 0
        %2256 = vmatmul.mubr.bf16.gmra.mrb[0].mxu0 %v2100
        %v2257 = vpop.f32.mrb[0].mxu0
        %v2258 = vadd.f32 0.0, %v2257
        %v2259 = vpop.f32.mrb[0].mxu0
        %v2260 = vpop.f32.mrb[0].mxu0
        %v2261 = vadd.f32 0.0, %v2260
        %v2262 = vpop.f32.mrb[0].mxu0
        %2263 = vmatprep.mubr.bf16.mxu0 0
        %2264 = vmatmul.mubr.bf16.gmra.mrb[0].mxu0 %v2103
        %v2265 = vpop.f32.mrb[0].mxu0
        %v2266 = vpop.f32.mrb[0].mxu0
        %v2267 = vpop.f32.mrb[0].mxu0
        %v2268 = vadd.f32 0.0, %v2267
        %v2269 = vpop.f32.mrb[0].mxu0
        %2270 = vmatprep.mubr.bf16.mxu0 0
        %2271 = vmatmul.mubr.bf16.gmra.mrb[0].mxu0 %v2106
        %v2272 = vpop.f32.mrb[0].mxu0
        %v2273 = vadd.f32 0.0, %v2272
        %v2274 = vpop.f32.mrb[0].mxu0
        %v2275 = vpop.f32.mrb[0].mxu0
        %v2276 = vpop.f32.mrb[0].mxu0
        %2277 = vmatprep.mubr.bf16.mxu0 0
        %2278 = vmatmul.mubr.bf16.gmra.mrb[0].mxu0 %v2109
        %v2279 = vpop.f32.mrb[0].mxu0
        %v2280 = vadd.f32 0.0, %v2279
        %v2281 = vpop.f32.mrb[0].mxu0
        %v2282 = vpop.f32.mrb[0].mxu0
        %v2283 = vadd.f32 0.0, %v2282
        %v2284 = vpop.f32.mrb[0].mxu0
        %2285 = vmatprep.mubr.bf16.mxu0 0
        %2286 = vmatmul.mubr.bf16.gmra.mrb[0].mxu0 %v2112
        %v2287 = vpop.f32.mrb[0].mxu0
        %v2288 = vpop.f32.mrb[0].mxu0
        %v2289 = vpop.f32.mrb[0].mxu0
        %v2290 = vadd.f32 0.0, %v2289
        %v2291 = vpop.f32.mrb[0].mxu0
        %2292 = vmatprep.mubr.bf16.mxu0 0
        %2293 = vmatmul.mubr.bf16.gmra.mrb[0].mxu0 %v2115
        %v2294 = vpop.f32.mrb[0].mxu0
        %v2295 = vadd.f32 0.0, %v2294
        %v2296 = vpop.f32.mrb[0].mxu0
        %v2297 = vpop.f32.mrb[0].mxu0
        %v2298 = vpop.f32.mrb[0].mxu0
        %2299 = vmatprep.mubr.bf16.mxu0 0
        %2300 = vmatmul.mubr.bf16.gmra.mrb[0].mxu0 %v2118
        %v2301 = vpop.f32.mrb[0].mxu0
        %v2302 = vadd.f32 0.0, %v2301
        %v2303 = vpop.f32.mrb[0].mxu0
        %v2304 = vpop.f32.mrb[0].mxu0
        %v2305 = vadd.f32 0.0, %v2304
        %v2306 = vpop.f32.mrb[0].mxu0
        %2307 = vmatprep.mubr.bf16.mxu0 0
        %2308 = vmatmul.mubr.bf16.gmra.mrb[0].mxu0 %v2121
        %v2309 = vpop.f32.mrb[0].mxu0
        %v2310 = vpop.f32.mrb[0].mxu0
        %v2311 = vpop.f32.mrb[0].mxu0
        %v2312 = vadd.f32 0.0, %v2311
        %v2313 = vpop.f32.mrb[0].mxu0
        %2314 = vmatprep.mubr.bf16.mxu0 0
        %2315 = vmatmul.mubr.bf16.gmra.mrb[0].mxu0 %v2124
        %v2316 = vpop.f32.mrb[0].mxu0
        %v2317 = vadd.f32 0.0, %v2316
        %v2318 = vpop.f32.mrb[0].mxu0
        %v2319 = vpop.f32.mrb[0].mxu0
        %v2320 = vpop.f32.mrb[0].mxu0
        %2321 = vmatprep.mubr.bf16.mxu0 0
        %2322 = vmatmul.mubr.bf16.gmra.mrb[0].mxu0 %v2127
        %v2323 = vpop.f32.mrb[0].mxu0
        %v2324 = vadd.f32 0.0, %v2323
        %v2325 = vpop.f32.mrb[0].mxu0
        %v2326 = vpop.f32.mrb[0].mxu0
        %v2327 = vadd.f32 0.0, %v2326
        %v2328 = vpop.f32.mrb[0].mxu0
        %2329 = vmatprep.mubr.bf16.mxu0 0
        %2330 = vmatmul.mubr.bf16.gmra.mrb[0].mxu0 %v2130
        %v2331 = vpop.f32.mrb[0].mxu0
        %v2332 = vpop.f32.mrb[0].mxu0
        %v2333 = vpop.f32.mrb[0].mxu0
        %v2334 = vadd.f32 0.0, %v2333
        %v2335 = vpop.f32.mrb[0].mxu0
        %2336 = vmatprep.mubr.bf16.mxu0 0
        %2337 = vmatmul.mubr.bf16.gmra.mrb[0].mxu0 %v2133
        %v2338 = vpop.f32.mrb[0].mxu0
        %v2339 = vadd.f32 0.0, %v2338
        %v2340 = vpop.f32.mrb[0].mxu0
        %v2341 = vpop.f32.mrb[0].mxu0
        %v2342 = vpop.f32.mrb[0].mxu0
        %2343 = vdwg.mxu0
        %v2392 = vunpack.c.l.b16 %v1814
        %v2393 = vunpack.c.l.b16 %v1815
        %v2394 = vunpack.c.l.b16 %v1816
        %v2395 = vunpack.c.l.b16 %v1817
        %v2396 = vunpack.c.l.b16 %v1818
        %v2397 = vunpack.c.l.b16 %v1819
        %v2398 = vunpack.c.l.b16 %v1820
        %v2399 = vunpack.c.l.b16 %v1821
        %v2400 = vunpack.c.l.b16 %v1822
        %v2401 = vunpack.c.l.b16 %v1823
        %v2402 = vunpack.c.l.b16 %v1824
        %v2403 = vunpack.c.l.b16 %v1825
        %v2404 = vunpack.c.l.b16 %v1826
        %v2405 = vunpack.c.l.b16 %v1827
        %v2406 = vunpack.c.l.b16 %v1828
        %v2407 = vunpack.c.l.b16 %v1829
        %v2408 = vunpack.c.l.b16 %v1830
        %v2409 = vunpack.c.l.b16 %v1831
        %v2410 = vunpack.c.l.b16 %v1832
        %v2411 = vunpack.c.l.b16 %v1833
        %v2412 = vunpack.c.l.b16 %v1834
        %v2413 = vunpack.c.l.b16 %v1835
        %v2414 = vunpack.c.l.b16 %v1836
        %v2415 = vunpack.c.l.b16 %v1837
        %v2416 = vunpack.c.l.b16 %v1838
        %v2417 = vunpack.c.l.b16 %v1839
        %v2418 = vunpack.c.l.b16 %v1840
        %v2419 = vunpack.c.l.b16 %v1841
        %v2420 = vunpack.c.l.b16 %v1842
        %v2421 = vunpack.c.l.b16 %v1843
        %v2422 = vunpack.c.l.b16 %v1844
        %v2423 = vunpack.c.l.b16 %v1845
        %v2424 = vunpack.c.l.b16 %v1846
        %v2425 = vunpack.c.l.b16 %v1847
        %v2426 = vunpack.c.l.b16 %v1848
        %v2427 = vunpack.c.l.b16 %v1849
        %v2428 = vunpack.c.l.b16 %v1850
        %v2429 = vunpack.c.l.b16 %v1851
        %v2430 = vunpack.c.l.b16 %v1852
        %v2431 = vunpack.c.l.b16 %v1853
        %v2432 = vunpack.c.l.b16 %v1854
        %v2433 = vunpack.c.l.b16 %v1855
        %v2434 = vunpack.c.l.b16 %v1856
        %v2435 = vunpack.c.l.b16 %v1857
        %v2436 = vunpack.c.l.b16 %v1858
        %v2437 = vunpack.c.l.b16 %v1859
        %v2438 = vunpack.c.l.b16 %v1860
        %v2439 = vunpack.c.l.b16 %v1861
        %v2440 = vpack.c.b16 %v2393, %v2392
        %v2441 = vpack.c.b16 %v2395, %v2394
        %v2442 = vpack.c.b16 %v2397, %v2396
        %v2443 = vpack.c.b16 %v2399, %v2398
        %v2444 = vpack.c.b16 %v2401, %v2400
        %v2445 = vpack.c.b16 %v2403, %v2402
        %v2446 = vpack.c.b16 %v2405, %v2404
        %v2447 = vpack.c.b16 %v2407, %v2406
        %v2448 = vpack.c.b16 %v2409, %v2408
        %v2449 = vpack.c.b16 %v2411, %v2410
        %v2450 = vpack.c.b16 %v2413, %v2412
        %v2451 = vpack.c.b16 %v2415, %v2414
        %v2452 = vpack.c.b16 %v2417, %v2416
        %v2453 = vpack.c.b16 %v2419, %v2418
        %v2454 = vpack.c.b16 %v2421, %v2420
        %v2455 = vpack.c.b16 %v2423, %v2422
        %v2456 = vpack.c.b16 %v2425, %v2424
        %v2457 = vpack.c.b16 %v2427, %v2426
        %v2458 = vpack.c.b16 %v2429, %v2428
        %v2459 = vpack.c.b16 %v2431, %v2430
        %v2460 = vpack.c.b16 %v2433, %v2432
        %v2461 = vpack.c.b16 %v2435, %v2434
        %v2462 = vpack.c.b16 %v2437, %v2436
        %v2463 = vpack.c.b16 %v2439, %v2438
        %v2470 = vunpack.c.l.b16 %v1862
        %v2471 = vunpack.c.l.b16 %v1863
        %v2472 = vunpack.c.l.b16 %v1864
        %v2473 = vunpack.c.l.b16 %v1865
        %v2474 = vunpack.c.l.b16 %v1866
        %v2475 = vunpack.c.l.b16 %v1867
        %v2476 = vpack.c.b16 %v2471, %v2470
        %v2477 = vpack.c.b16 %v2473, %v2472
        %v2478 = vpack.c.b16 %v2475, %v2474
        %v2483 = vsel %vm2062, %v2440, 0
        %v2486 = vsel %vm2062, %v2441, 0
        %v2489 = vsel %vm2062, %v2442, 0
        %v2492 = vsel %vm2062, %v2443, 0
        %v2495 = vsel %vm2062, %v2444, 0
        %v2498 = vsel %vm2062, %v2445, 0
        %v2501 = vsel %vm2062, %v2446, 0
        %v2504 = vsel %vm2062, %v2447, 0
        %v2507 = vsel %vm2062, %v2448, 0
        %v2510 = vsel %vm2062, %v2449, 0
        %v2513 = vsel %vm2062, %v2450, 0
        %v2516 = vsel %vm2062, %v2451, 0
        %v2519 = vsel %vm2062, %v2452, 0
        %v2522 = vsel %vm2062, %v2453, 0
        %v2525 = vsel %vm2062, %v2454, 0
        %v2528 = vsel %vm2062, %v2455, 0
        %v2531 = vsel %vm2062, %v2456, 0
        %v2534 = vsel %vm2062, %v2457, 0
        %v2537 = vsel %vm2062, %v2458, 0
        %v2540 = vsel %vm2062, %v2459, 0
        %v2543 = vsel %vm2062, %v2460, 0
        %v2546 = vsel %vm2062, %v2461, 0
        %v2549 = vsel %vm2062, %v2462, 0
        %v2552 = vsel %vm2062, %v2463, 0
        %2554 = vmatprep.subr.bf16.mxu0 0
        %2555 = vmatpush1.bf16.msra.mxu0 %v2476
        %2556 = vmatprep.subr.bf16.mxu0 0
        %2557 = vmatpush1.bf16.msra.mxu0 %v2477
        %2558 = vmatprep.subr.bf16.mxu0 0
        %2559 = vmatpush1.bf16.msra.mxu0 %v2478
        %2560 = vmatprep.subr.bf16.mxu0 0
        %2561 = vmatpush1.bf16.msra.mxu0 0
        %2562 = vmatprep.subr.bf16.mxu0 0
        %2563 = vmatpush1.bf16.msra.mxu0 0
        %2564 = vmatprep.subr.bf16.mxu0 0
        %2565 = vmatpush1.bf16.msra.mxu0 0
        %2566 = vmatprep.subr.bf16.mxu0 0
        %2567 = vmatpush1.bf16.msra.mxu0 0
        %2568 = vmatprep.subr.bf16.mxu0 0
        %2569 = vmatpush1.bf16.msra.mxu0 0
        %2570 = vmatprep.subr.bf16.mxu0 0
        %2571 = vmatpush1.bf16.msra.mxu0 0
        %2572 = vmatprep.subr.bf16.mxu0 0
        %2573 = vmatpush1.bf16.msra.mxu0 0
        %2574 = vmatprep.subr.bf16.mxu0 0
        %2575 = vmatpush1.bf16.msra.mxu0 0
        %2576 = vmatprep.subr.bf16.mxu0 0
        %2577 = vmatpush1.bf16.msra.mxu0 0
        %2578 = vmatprep.subr.bf16.mxu0 0
        %2579 = vmatpush1.bf16.msra.mxu0 0
        %2580 = vmatprep.subr.bf16.mxu0 0
        %2581 = vmatpush1.bf16.msra.mxu0 0
        %2582 = vmatprep.subr.bf16.mxu0 0
        %2583 = vmatpush1.bf16.msra.mxu0 0
        %2584 = vmatprep.subr.bf16.mxu0 0
        %2585 = vmatpush1.bf16.msra.mxu0 0
        %2586 = vmatprep.mubr.bf16.mxu0 0
        %2587 = vmatmul.mubr.bf16.gmra.mrb[0].mxu0 %v2483
        %v2588 = vpop.f32.mrb[0].mxu0
        %v2589 = vadd.f32 %v2170, %v2588
        %v2590 = vpop.f32.mrb[0].mxu0
        %v2591 = vpop.f32.mrb[0].mxu0
        %v2592 = vadd.f32 %v2173, %v2591
        %v2593 = vpop.f32.mrb[0].mxu0
        %2594 = vmatprep.mubr.bf16.mxu0 0
        %2595 = vmatmul.mubr.bf16.gmra.mrb[0].mxu0 %v2486
        %v2596 = vpop.f32.mrb[0].mxu0
        %v2597 = vpop.f32.mrb[0].mxu0
        %v2598 = vpop.f32.mrb[0].mxu0
        %v2599 = vadd.f32 %v2180, %v2598
        %v2600 = vpop.f32.mrb[0].mxu0
        %2601 = vmatprep.mubr.bf16.mxu0 0
        %2602 = vmatmul.mubr.bf16.gmra.mrb[0].mxu0 %v2489
        %v2603 = vpop.f32.mrb[0].mxu0
        %v2604 = vadd.f32 %v2185, %v2603
        %v2605 = vpop.f32.mrb[0].mxu0
        %v2606 = vpop.f32.mrb[0].mxu0
        %v2607 = vpop.f32.mrb[0].mxu0
        %2608 = vmatprep.mubr.bf16.mxu0 0
        %2609 = vmatmul.mubr.bf16.gmra.mrb[0].mxu0 %v2492
        %v2610 = vpop.f32.mrb[0].mxu0
        %v2611 = vadd.f32 %v2192, %v2610
        %v2612 = vpop.f32.mrb[0].mxu0
        %v2613 = vpop.f32.mrb[0].mxu0
        %v2614 = vadd.f32 %v2195, %v2613
        %v2615 = vpop.f32.mrb[0].mxu0
        %2616 = vmatprep.mubr.bf16.mxu0 0
        %2617 = vmatmul.mubr.bf16.gmra.mrb[0].mxu0 %v2495
        %v2618 = vpop.f32.mrb[0].mxu0
        %v2619 = vpop.f32.mrb[0].mxu0
        %v2620 = vpop.f32.mrb[0].mxu0
        %v2621 = vadd.f32 %v2202, %v2620
        %v2622 = vpop.f32.mrb[0].mxu0
        %2623 = vmatprep.mubr.bf16.mxu0 0
        %2624 = vmatmul.mubr.bf16.gmra.mrb[0].mxu0 %v2498
        %v2625 = vpop.f32.mrb[0].mxu0
        %v2626 = vadd.f32 %v2207, %v2625
        %v2627 = vpop.f32.mrb[0].mxu0
        %v2628 = vpop.f32.mrb[0].mxu0
        %v2629 = vpop.f32.mrb[0].mxu0
        %2630 = vmatprep.mubr.bf16.mxu0 0
        %2631 = vmatmul.mubr.bf16.gmra.mrb[0].mxu0 %v2501
        %v2632 = vpop.f32.mrb[0].mxu0
        %v2633 = vadd.f32 %v2214, %v2632
        %v2634 = vpop.f32.mrb[0].mxu0
        %v2635 = vpop.f32.mrb[0].mxu0
        %v2636 = vadd.f32 %v2217, %v2635
        %v2637 = vpop.f32.mrb[0].mxu0
        %2638 = vmatprep.mubr.bf16.mxu0 0
        %2639 = vmatmul.mubr.bf16.gmra.mrb[0].mxu0 %v2504
        %v2640 = vpop.f32.mrb[0].mxu0
        %v2641 = vpop.f32.mrb[0].mxu0
        %v2642 = vpop.f32.mrb[0].mxu0
        %v2643 = vadd.f32 %v2224, %v2642
        %v2644 = vpop.f32.mrb[0].mxu0
        %2645 = vmatprep.mubr.bf16.mxu0 0
        %2646 = vmatmul.mubr.bf16.gmra.mrb[0].mxu0 %v2507
        %v2647 = vpop.f32.mrb[0].mxu0
        %v2648 = vadd.f32 %v2229, %v2647
        %v2649 = vpop.f32.mrb[0].mxu0
        %v2650 = vpop.f32.mrb[0].mxu0
        %v2651 = vpop.f32.mrb[0].mxu0
        %2652 = vmatprep.mubr.bf16.mxu0 0
        %2653 = vmatmul.mubr.bf16.gmra.mrb[0].mxu0 %v2510
        %v2654 = vpop.f32.mrb[0].mxu0
        %v2655 = vadd.f32 %v2236, %v2654
        %v2656 = vpop.f32.mrb[0].mxu0
        %v2657 = vpop.f32.mrb[0].mxu0
        %v2658 = vadd.f32 %v2239, %v2657
        %v2659 = vpop.f32.mrb[0].mxu0
        %2660 = vmatprep.mubr.bf16.mxu0 0
        %2661 = vmatmul.mubr.bf16.gmra.mrb[0].mxu0 %v2513
        %v2662 = vpop.f32.mrb[0].mxu0
        %v2663 = vpop.f32.mrb[0].mxu0
        %v2664 = vpop.f32.mrb[0].mxu0
        %v2665 = vadd.f32 %v2246, %v2664
        %v2666 = vpop.f32.mrb[0].mxu0
        %2667 = vmatprep.mubr.bf16.mxu0 0
        %2668 = vmatmul.mubr.bf16.gmra.mrb[0].mxu0 %v2516
        %v2669 = vpop.f32.mrb[0].mxu0
        %v2670 = vadd.f32 %v2251, %v2669
        %v2671 = vpop.f32.mrb[0].mxu0
        %v2672 = vpop.f32.mrb[0].mxu0
        %v2673 = vpop.f32.mrb[0].mxu0
        %2674 = vmatprep.mubr.bf16.mxu0 0
        %2675 = vmatmul.mubr.bf16.gmra.mrb[0].mxu0 %v2519
        %v2676 = vpop.f32.mrb[0].mxu0
        %v2677 = vadd.f32 %v2258, %v2676
        %v2678 = vpop.f32.mrb[0].mxu0
        %v2679 = vpop.f32.mrb[0].mxu0
        %v2680 = vadd.f32 %v2261, %v2679
        %v2681 = vpop.f32.mrb[0].mxu0
        %2682 = vmatprep.mubr.bf16.mxu0 0
        %2683 = vmatmul.mubr.bf16.gmra.mrb[0].mxu0 %v2522
        %v2684 = vpop.f32.mrb[0].mxu0
        %v2685 = vpop.f32.mrb[0].mxu0
        %v2686 = vpop.f32.mrb[0].mxu0
        %v2687 = vadd.f32 %v2268, %v2686
        %v2688 = vpop.f32.mrb[0].mxu0
        %2689 = vmatprep.mubr.bf16.mxu0 0
        %2690 = vmatmul.mubr.bf16.gmra.mrb[0].mxu0 %v2525
        %v2691 = vpop.f32.mrb[0].mxu0
        %v2692 = vadd.f32 %v2273, %v2691
        %v2693 = vpop.f32.mrb[0].mxu0
        %v2694 = vpop.f32.mrb[0].mxu0
        %v2695 = vpop.f32.mrb[0].mxu0
        %2696 = vmatprep.mubr.bf16.mxu0 0
        %2697 = vmatmul.mubr.bf16.gmra.mrb[0].mxu0 %v2528
        %v2698 = vpop.f32.mrb[0].mxu0
        %v2699 = vadd.f32 %v2280, %v2698
        %v2700 = vpop.f32.mrb[0].mxu0
        %v2701 = vpop.f32.mrb[0].mxu0
        %v2702 = vadd.f32 %v2283, %v2701
        %v2703 = vpop.f32.mrb[0].mxu0
        %2704 = vmatprep.mubr.bf16.mxu0 0
        %2705 = vmatmul.mubr.bf16.gmra.mrb[0].mxu0 %v2531
        %v2706 = vpop.f32.mrb[0].mxu0
        %v2707 = vpop.f32.mrb[0].mxu0
        %v2708 = vpop.f32.mrb[0].mxu0
        %v2709 = vadd.f32 %v2290, %v2708
        %v2710 = vpop.f32.mrb[0].mxu0
        %2711 = vmatprep.mubr.bf16.mxu0 0
        %2712 = vmatmul.mubr.bf16.gmra.mrb[0].mxu0 %v2534
        %v2713 = vpop.f32.mrb[0].mxu0
        %v2714 = vadd.f32 %v2295, %v2713
        %v2715 = vpop.f32.mrb[0].mxu0
        %v2716 = vpop.f32.mrb[0].mxu0
        %v2717 = vpop.f32.mrb[0].mxu0
        %2718 = vmatprep.mubr.bf16.mxu0 0
        %2719 = vmatmul.mubr.bf16.gmra.mrb[0].mxu0 %v2537
        %v2720 = vpop.f32.mrb[0].mxu0
        %v2721 = vadd.f32 %v2302, %v2720
        %v2722 = vpop.f32.mrb[0].mxu0
        %v2723 = vpop.f32.mrb[0].mxu0
        %v2724 = vadd.f32 %v2305, %v2723
        %v2725 = vpop.f32.mrb[0].mxu0
        %2726 = vmatprep.mubr.bf16.mxu0 0
        %2727 = vmatmul.mubr.bf16.gmra.mrb[0].mxu0 %v2540
        %v2728 = vpop.f32.mrb[0].mxu0
        %v2729 = vpop.f32.mrb[0].mxu0
        %v2730 = vpop.f32.mrb[0].mxu0
        %v2731 = vadd.f32 %v2312, %v2730
        %v2732 = vpop.f32.mrb[0].mxu0
        %2733 = vmatprep.mubr.bf16.mxu0 0
        %2734 = vmatmul.mubr.bf16.gmra.mrb[0].mxu0 %v2543
        %v2735 = vpop.f32.mrb[0].mxu0
        %v2736 = vadd.f32 %v2317, %v2735
        %v2737 = vpop.f32.mrb[0].mxu0
        %v2738 = vpop.f32.mrb[0].mxu0
        %v2739 = vpop.f32.mrb[0].mxu0
        %2740 = vmatprep.mubr.bf16.mxu0 0
        %2741 = vmatmul.mubr.bf16.gmra.mrb[0].mxu0 %v2546
        %v2742 = vpop.f32.mrb[0].mxu0
        %v2743 = vadd.f32 %v2324, %v2742
        %v2744 = vpop.f32.mrb[0].mxu0
        %v2745 = vpop.f32.mrb[0].mxu0
        %v2746 = vadd.f32 %v2327, %v2745
        %v2747 = vpop.f32.mrb[0].mxu0
        %2748 = vmatprep.mubr.bf16.mxu0 0
        %2749 = vmatmul.mubr.bf16.gmra.mrb[0].mxu0 %v2549
        %v2750 = vpop.f32.mrb[0].mxu0
        %v2751 = vpop.f32.mrb[0].mxu0
        %v2752 = vpop.f32.mrb[0].mxu0
        %v2753 = vadd.f32 %v2334, %v2752
        %v2754 = vpop.f32.mrb[0].mxu0
        %2755 = vmatprep.mubr.bf16.mxu0 0
        %2756 = vmatmul.mubr.bf16.gmra.mrb[0].mxu0 %v2552
        %v2757 = vpop.f32.mrb[0].mxu0
        %v2758 = vadd.f32 %v2339, %v2757
        %v2759 = vpop.f32.mrb[0].mxu0
        %v2760 = vpop.f32.mrb[0].mxu0
        %v2761 = vpop.f32.mrb[0].mxu0
        %2762 = vdwg.mxu0
        %v2763 = vld [vmem:[%s498] sm:$0xf]
        %v2764 = vld [vmem:[%s498 + $0x4] sm:$0xf]
        %v2765 = vld [vmem:[%s498 + $0x8] sm:$0xf]
        %v2766 = vld [vmem:[%s498 + $0xc] sm:$0xf]
        %v2767 = vld [vmem:[%s498 + $0x10] sm:$0xf]
        %v2768 = vld [vmem:[%s498 + $0x14] sm:$0xf]
        %v2769 = vld [vmem:[%s498 + $0x18] sm:$0xf]
        %v2770 = vld [vmem:[%s498 + $0x1c] sm:$0xf]
        %v2771 = vld [vmem:[%s498 + $0x20] sm:$0xf]
        %v2772 = vld [vmem:[%s498 + $0x24] sm:$0xf]
        %v2773 = vld [vmem:[%s498 + $0x28] sm:$0xf]
        %v2774 = vld [vmem:[%s498 + $0x2c] sm:$0xf]
        %v2775 = vld [vmem:[%s498 + $0x30] sm:$0xf]
        %v2776 = vld [vmem:[%s498 + $0x34] sm:$0xf]
        %v2777 = vld [vmem:[%s498 + $0x38] sm:$0xf]
        %v2778 = vld [vmem:[%s498 + $0x3c] sm:$0xf]
        %v2779 = vld [vmem:[%s498 + $0x40] sm:$0xf]
        %v2780 = vld [vmem:[%s498 + $0x44] sm:$0xf]
        %v2781 = vld [vmem:[%s498 + $0x48] sm:$0xf]
        %v2782 = vld [vmem:[%s498 + $0x4c] sm:$0xf]
        %v2783 = vld [vmem:[%s498 + $0x50] sm:$0xf]
        %v2784 = vld [vmem:[%s498 + $0x54] sm:$0xf]
        %v2785 = vld [vmem:[%s498 + $0x58] sm:$0xf]
        %v2786 = vld [vmem:[%s498 + $0x5c] sm:$0xf]
        %v2787 = vld [vmem:[%s498 + $0x60] sm:$0xf]
        %v2788 = vld [vmem:[%s498 + $0x64] sm:$0xf]
        %v2789 = vld [vmem:[%s498 + $0x68] sm:$0xf]
        %v2790 = vld [vmem:[%s498 + $0x6c] sm:$0xf]
        %v2791 = vld [vmem:[%s498 + $0x70] sm:$0xf]
        %v2792 = vld [vmem:[%s498 + $0x74] sm:$0xf]
        %v2793 = vld [vmem:[%s498 + $0x78] sm:$0xf]
        %v2794 = vld [vmem:[%s498 + $0x7c] sm:$0xf]
        %v2795 = vld [vmem:[%s498 + $0x80] sm:$0xf]
        %v2796 = vld [vmem:[%s498 + $0x84] sm:$0xf]
        %v2797 = vld [vmem:[%s498 + $0x88] sm:$0xf]
        %v2798 = vld [vmem:[%s498 + $0x8c] sm:$0xf]
        %v2799 = vld [vmem:[%s498 + $0x90] sm:$0xf]
        %v2800 = vld [vmem:[%s498 + $0x94] sm:$0xf]
        %v2801 = vld [vmem:[%s498 + $0x98] sm:$0xf]
        %v2802 = vld [vmem:[%s498 + $0x9c] sm:$0xf]
        %v2803 = vld [vmem:[%s498 + $0xa0] sm:$0xf]
        %v2804 = vld [vmem:[%s498 + $0xa4] sm:$0xf]
        %v2805 = vld [vmem:[%s498 + $0xa8] sm:$0xf]
        %v2806 = vld [vmem:[%s498 + $0xac] sm:$0xf]
        %v2807 = vld [vmem:[%s498 + $0xb0] sm:$0xf]
        %v2808 = vld [vmem:[%s498 + $0xb4] sm:$0xf]
        %v2809 = vld [vmem:[%s498 + $0xb8] sm:$0xf]
        %v2810 = vld [vmem:[%s498 + $0xbc] sm:$0xf]
        %s2811 = scalar_lea.vmem [#allocation6], 48
        %v2812 = vld [vmem:[%s2811] sm:$0xf]
        %v2813 = vld [vmem:[%s2811 + $0x4] sm:$0xf]
        %v2814 = vld [vmem:[%s2811 + $0x8] sm:$0xf]
        %v2815 = vld [vmem:[%s2811 + $0xc] sm:$0xf]
        %v2816 = vld [vmem:[%s2811 + $0x10] sm:$0xf]
        %v2817 = vld [vmem:[%s2811 + $0x14] sm:$0xf]
        %v2866 = vunpack.c.l.b16 %v2763
        %v2867 = vunpack.c.l.b16 %v2764
        %v2868 = vunpack.c.l.b16 %v2765
        %v2869 = vunpack.c.l.b16 %v2766
        %v2870 = vunpack.c.l.b16 %v2767
        %v2871 = vunpack.c.l.b16 %v2768
        %v2872 = vunpack.c.l.b16 %v2769
        %v2873 = vunpack.c.l.b16 %v2770
        %v2874 = vunpack.c.l.b16 %v2771
        %v2875 = vunpack.c.l.b16 %v2772
        %v2876 = vunpack.c.l.b16 %v2773
        %v2877 = vunpack.c.l.b16 %v2774
        %v2878 = vunpack.c.l.b16 %v2775
        %v2879 = vunpack.c.l.b16 %v2776
        %v2880 = vunpack.c.l.b16 %v2777
        %v2881 = vunpack.c.l.b16 %v2778
        %v2882 = vunpack.c.l.b16 %v2779
        %v2883 = vunpack.c.l.b16 %v2780
        %v2884 = vunpack.c.l.b16 %v2781
        %v2885 = vunpack.c.l.b16 %v2782
        %v2886 = vunpack.c.l.b16 %v2783
        %v2887 = vunpack.c.l.b16 %v2784
        %v2888 = vunpack.c.l.b16 %v2785
        %v2889 = vunpack.c.l.b16 %v2786
        %v2890 = vunpack.c.l.b16 %v2787
        %v2891 = vunpack.c.l.b16 %v2788
        %v2892 = vunpack.c.l.b16 %v2789
        %v2893 = vunpack.c.l.b16 %v2790
        %v2894 = vunpack.c.l.b16 %v2791
        %v2895 = vunpack.c.l.b16 %v2792
        %v2896 = vunpack.c.l.b16 %v2793
        %v2897 = vunpack.c.l.b16 %v2794
        %v2898 = vunpack.c.l.b16 %v2795
        %v2899 = vunpack.c.l.b16 %v2796
        %v2900 = vunpack.c.l.b16 %v2797
        %v2901 = vunpack.c.l.b16 %v2798
        %v2902 = vunpack.c.l.b16 %v2799
        %v2903 = vunpack.c.l.b16 %v2800
        %v2904 = vunpack.c.l.b16 %v2801
        %v2905 = vunpack.c.l.b16 %v2802
        %v2906 = vunpack.c.l.b16 %v2803
        %v2907 = vunpack.c.l.b16 %v2804
        %v2908 = vunpack.c.l.b16 %v2805
        %v2909 = vunpack.c.l.b16 %v2806
        %v2910 = vunpack.c.l.b16 %v2807
        %v2911 = vunpack.c.l.b16 %v2808
        %v2912 = vunpack.c.l.b16 %v2809
        %v2913 = vunpack.c.l.b16 %v2810
        %v2914 = vpack.c.b16 %v2867, %v2866
        %v2915 = vpack.c.b16 %v2869, %v2868
        %v2916 = vpack.c.b16 %v2871, %v2870
        %v2917 = vpack.c.b16 %v2873, %v2872
        %v2918 = vpack.c.b16 %v2875, %v2874
        %v2919 = vpack.c.b16 %v2877, %v2876
        %v2920 = vpack.c.b16 %v2879, %v2878
        %v2921 = vpack.c.b16 %v2881, %v2880
        %v2922 = vpack.c.b16 %v2883, %v2882
        %v2923 = vpack.c.b16 %v2885, %v2884
        %v2924 = vpack.c.b16 %v2887, %v2886
        %v2925 = vpack.c.b16 %v2889, %v2888
        %v2926 = vpack.c.b16 %v2891, %v2890
        %v2927 = vpack.c.b16 %v2893, %v2892
        %v2928 = vpack.c.b16 %v2895, %v2894
        %v2929 = vpack.c.b16 %v2897, %v2896
        %v2930 = vpack.c.b16 %v2899, %v2898
        %v2931 = vpack.c.b16 %v2901, %v2900
        %v2932 = vpack.c.b16 %v2903, %v2902
        %v2933 = vpack.c.b16 %v2905, %v2904
        %v2934 = vpack.c.b16 %v2907, %v2906
        %v2935 = vpack.c.b16 %v2909, %v2908
        %v2936 = vpack.c.b16 %v2911, %v2910
        %v2937 = vpack.c.b16 %v2913, %v2912
        %v2944 = vunpack.c.l.b16 %v2812
        %v2945 = vunpack.c.l.b16 %v2813
        %v2946 = vunpack.c.l.b16 %v2814
        %v2947 = vunpack.c.l.b16 %v2815
        %v2948 = vunpack.c.l.b16 %v2816
        %v2949 = vunpack.c.l.b16 %v2817
        %v2950 = vpack.c.b16 %v2945, %v2944
        %v2951 = vpack.c.b16 %v2947, %v2946
        %v2952 = vpack.c.b16 %v2949, %v2948
        %v2957 = vsel %vm2062, %v2914, 0
        %v2960 = vsel %vm2062, %v2915, 0
        %v2963 = vsel %vm2062, %v2916, 0
        %v2966 = vsel %vm2062, %v2917, 0
        %v2969 = vsel %vm2062, %v2918, 0
        %v2972 = vsel %vm2062, %v2919, 0
        %v2975 = vsel %vm2062, %v2920, 0
        %v2978 = vsel %vm2062, %v2921, 0
        %v2981 = vsel %vm2062, %v2922, 0
        %v2984 = vsel %vm2062, %v2923, 0
        %v2987 = vsel %vm2062, %v2924, 0
        %v2990 = vsel %vm2062, %v2925, 0
        %v2993 = vsel %vm2062, %v2926, 0
        %v2996 = vsel %vm2062, %v2927, 0
        %v2999 = vsel %vm2062, %v2928, 0
        %v3002 = vsel %vm2062, %v2929, 0
        %v3005 = vsel %vm2062, %v2930, 0
        %v3008 = vsel %vm2062, %v2931, 0
        %v3011 = vsel %vm2062, %v2932, 0
        %v3014 = vsel %vm2062, %v2933, 0
        %v3017 = vsel %vm2062, %v2934, 0
        %v3020 = vsel %vm2062, %v2935, 0
        %v3023 = vsel %vm2062, %v2936, 0
        %v3026 = vsel %vm2062, %v2937, 0
        %3028 = vmatprep.subr.bf16.mxu0 0
        %3029 = vmatpush1.bf16.msra.mxu0 %v2950
        %3030 = vmatprep.subr.bf16.mxu0 0
        %3031 = vmatpush1.bf16.msra.mxu0 %v2951
        %3032 = vmatprep.subr.bf16.mxu0 0
        %3033 = vmatpush1.bf16.msra.mxu0 %v2952
        %3034 = vmatprep.subr.bf16.mxu0 0
        %3035 = vmatpush1.bf16.msra.mxu0 0
        %3036 = vmatprep.subr.bf16.mxu0 0
        %3037 = vmatpush1.bf16.msra.mxu0 0
        %3038 = vmatprep.subr.bf16.mxu0 0
        %3039 = vmatpush1.bf16.msra.mxu0 0
        %3040 = vmatprep.subr.bf16.mxu0 0
        %3041 = vmatpush1.bf16.msra.mxu0 0
        %3042 = vmatprep.subr.bf16.mxu0 0
        %3043 = vmatpush1.bf16.msra.mxu0 0
        %3044 = vmatprep.subr.bf16.mxu0 0
        %3045 = vmatpush1.bf16.msra.mxu0 0
        %3046 = vmatprep.subr.bf16.mxu0 0
        %3047 = vmatpush1.bf16.msra.mxu0 0
        %3048 = vmatprep.subr.bf16.mxu0 0
        %3049 = vmatpush1.bf16.msra.mxu0 0
        %3050 = vmatprep.subr.bf16.mxu0 0
        %3051 = vmatpush1.bf16.msra.mxu0 0
        %3052 = vmatprep.subr.bf16.mxu0 0
        %3053 = vmatpush1.bf16.msra.mxu0 0
        %3054 = vmatprep.subr.bf16.mxu0 0
        %3055 = vmatpush1.bf16.msra.mxu0 0
        %3056 = vmatprep.subr.bf16.mxu0 0
        %3057 = vmatpush1.bf16.msra.mxu0 0
        %3058 = vmatprep.subr.bf16.mxu0 0
        %3059 = vmatpush1.bf16.msra.mxu0 0
        %3060 = vmatprep.mubr.bf16.mxu0 0
        %3061 = vmatmul.mubr.bf16.gmra.mrb[0].mxu0 %v2957
        %v3062 = vpop.f32.mrb[0].mxu0
        %v3063 = vadd.f32 0.0, %v3062
        %v3064 = vpop.f32.mrb[0].mxu0
        %v3065 = vpop.f32.mrb[0].mxu0
        %v3066 = vadd.f32 0.0, %v3065
        %v3067 = vpop.f32.mrb[0].mxu0
        %3068 = vmatprep.mubr.bf16.mxu0 0
        %3069 = vmatmul.mubr.bf16.gmra.mrb[0].mxu0 %v2960
        %v3070 = vpop.f32.mrb[0].mxu0
        %v3071 = vpop.f32.mrb[0].mxu0
        %v3072 = vpop.f32.mrb[0].mxu0
        %v3073 = vadd.f32 0.0, %v3072
        %v3074 = vpop.f32.mrb[0].mxu0
        %3075 = vmatprep.mubr.bf16.mxu0 0
        %3076 = vmatmul.mubr.bf16.gmra.mrb[0].mxu0 %v2963
        %v3077 = vpop.f32.mrb[0].mxu0
        %v3078 = vadd.f32 0.0, %v3077
        %v3079 = vpop.f32.mrb[0].mxu0
        %v3080 = vpop.f32.mrb[0].mxu0
        %v3081 = vpop.f32.mrb[0].mxu0
        %3082 = vmatprep.mubr.bf16.mxu0 0
        %3083 = vmatmul.mubr.bf16.gmra.mrb[0].mxu0 %v2966
        %v3084 = vpop.f32.mrb[0].mxu0
        %v3085 = vadd.f32 0.0, %v3084
        %v3086 = vpop.f32.mrb[0].mxu0
        %v3087 = vpop.f32.mrb[0].mxu0
        %v3088 = vadd.f32 0.0, %v3087
        %v3089 = vpop.f32.mrb[0].mxu0
        %3090 = vmatprep.mubr.bf16.mxu0 0
        %3091 = vmatmul.mubr.bf16.gmra.mrb[0].mxu0 %v2969
        %v3092 = vpop.f32.mrb[0].mxu0
        %v3093 = vpop.f32.mrb[0].mxu0
        %v3094 = vpop.f32.mrb[0].mxu0
        %v3095 = vadd.f32 0.0, %v3094
        %v3096 = vpop.f32.mrb[0].mxu0
        %3097 = vmatprep.mubr.bf16.mxu0 0
        %3098 = vmatmul.mubr.bf16.gmra.mrb[0].mxu0 %v2972
        %v3099 = vpop.f32.mrb[0].mxu0
        %v3100 = vadd.f32 0.0, %v3099
        %v3101 = vpop.f32.mrb[0].mxu0
        %v3102 = vpop.f32.mrb[0].mxu0
        %v3103 = vpop.f32.mrb[0].mxu0
        %3104 = vmatprep.mubr.bf16.mxu0 0
        %3105 = vmatmul.mubr.bf16.gmra.mrb[0].mxu0 %v2975
        %v3106 = vpop.f32.mrb[0].mxu0
        %v3107 = vadd.f32 0.0, %v3106
        %v3108 = vpop.f32.mrb[0].mxu0
        %v3109 = vpop.f32.mrb[0].mxu0
        %v3110 = vadd.f32 0.0, %v3109
        %v3111 = vpop.f32.mrb[0].mxu0
        %3112 = vmatprep.mubr.bf16.mxu0 0
        %3113 = vmatmul.mubr.bf16.gmra.mrb[0].mxu0 %v2978
        %v3114 = vpop.f32.mrb[0].mxu0
        %v3115 = vpop.f32.mrb[0].mxu0
        %v3116 = vpop.f32.mrb[0].mxu0
        %v3117 = vadd.f32 0.0, %v3116
        %v3118 = vpop.f32.mrb[0].mxu0
        %3119 = vmatprep.mubr.bf16.mxu0 0
        %3120 = vmatmul.mubr.bf16.gmra.mrb[0].mxu0 %v2981
        %v3121 = vpop.f32.mrb[0].mxu0
        %v3122 = vadd.f32 0.0, %v3121
        %v3123 = vpop.f32.mrb[0].mxu0
        %v3124 = vpop.f32.mrb[0].mxu0
        %v3125 = vpop.f32.mrb[0].mxu0
        %3126 = vmatprep.mubr.bf16.mxu0 0
        %3127 = vmatmul.mubr.bf16.gmra.mrb[0].mxu0 %v2984
        %v3128 = vpop.f32.mrb[0].mxu0
        %v3129 = vadd.f32 0.0, %v3128
        %v3130 = vpop.f32.mrb[0].mxu0
        %v3131 = vpop.f32.mrb[0].mxu0
        %v3132 = vadd.f32 0.0, %v3131
        %v3133 = vpop.f32.mrb[0].mxu0
        %3134 = vmatprep.mubr.bf16.mxu0 0
        %3135 = vmatmul.mubr.bf16.gmra.mrb[0].mxu0 %v2987
        %v3136 = vpop.f32.mrb[0].mxu0
        %v3137 = vpop.f32.mrb[0].mxu0
        %v3138 = vpop.f32.mrb[0].mxu0
        %v3139 = vadd.f32 0.0, %v3138
        %v3140 = vpop.f32.mrb[0].mxu0
        %3141 = vmatprep.mubr.bf16.mxu0 0
        %3142 = vmatmul.mubr.bf16.gmra.mrb[0].mxu0 %v2990
        %v3143 = vpop.f32.mrb[0].mxu0
        %v3144 = vadd.f32 0.0, %v3143
        %v3145 = vpop.f32.mrb[0].mxu0
        %v3146 = vpop.f32.mrb[0].mxu0
        %v3147 = vpop.f32.mrb[0].mxu0
        %3148 = vmatprep.mubr.bf16.mxu0 0
        %3149 = vmatmul.mubr.bf16.gmra.mrb[0].mxu0 %v2993
        %v3150 = vpop.f32.mrb[0].mxu0
        %v3151 = vadd.f32 0.0, %v3150
        %v3152 = vpop.f32.mrb[0].mxu0
        %v3153 = vpop.f32.mrb[0].mxu0
        %v3154 = vadd.f32 0.0, %v3153
        %v3155 = vpop.f32.mrb[0].mxu0
        %3156 = vmatprep.mubr.bf16.mxu0 0
        %3157 = vmatmul.mubr.bf16.gmra.mrb[0].mxu0 %v2996
        %v3158 = vpop.f32.mrb[0].mxu0
        %v3159 = vpop.f32.mrb[0].mxu0
        %v3160 = vpop.f32.mrb[0].mxu0
        %v3161 = vadd.f32 0.0, %v3160
        %v3162 = vpop.f32.mrb[0].mxu0
        %3163 = vmatprep.mubr.bf16.mxu0 0
        %3164 = vmatmul.mubr.bf16.gmra.mrb[0].mxu0 %v2999
        %v3165 = vpop.f32.mrb[0].mxu0
        %v3166 = vadd.f32 0.0, %v3165
        %v3167 = vpop.f32.mrb[0].mxu0
        %v3168 = vpop.f32.mrb[0].mxu0
        %v3169 = vpop.f32.mrb[0].mxu0
        %3170 = vmatprep.mubr.bf16.mxu0 0
        %3171 = vmatmul.mubr.bf16.gmra.mrb[0].mxu0 %v3002
        %v3172 = vpop.f32.mrb[0].mxu0
        %v3173 = vadd.f32 0.0, %v3172
        %v3174 = vpop.f32.mrb[0].mxu0
        %v3175 = vpop.f32.mrb[0].mxu0
        %v3176 = vadd.f32 0.0, %v3175
        %v3177 = vpop.f32.mrb[0].mxu0
        %3178 = vmatprep.mubr.bf16.mxu0 0
        %3179 = vmatmul.mubr.bf16.gmra.mrb[0].mxu0 %v3005
        %v3180 = vpop.f32.mrb[0].mxu0
        %v3181 = vpop.f32.mrb[0].mxu0
        %v3182 = vpop.f32.mrb[0].mxu0
        %v3183 = vadd.f32 0.0, %v3182
        %v3184 = vpop.f32.mrb[0].mxu0
        %3185 = vmatprep.mubr.bf16.mxu0 0
        %3186 = vmatmul.mubr.bf16.gmra.mrb[0].mxu0 %v3008
        %v3187 = vpop.f32.mrb[0].mxu0
        %v3188 = vadd.f32 0.0, %v3187
        %v3189 = vpop.f32.mrb[0].mxu0
        %v3190 = vpop.f32.mrb[0].mxu0
        %v3191 = vpop.f32.mrb[0].mxu0
        %3192 = vmatprep.mubr.bf16.mxu0 0
        %3193 = vmatmul.mubr.bf16.gmra.mrb[0].mxu0 %v3011
        %v3194 = vpop.f32.mrb[0].mxu0
        %v3195 = vadd.f32 0.0, %v3194
        %v3196 = vpop.f32.mrb[0].mxu0
        %v3197 = vpop.f32.mrb[0].mxu0
        %v3198 = vadd.f32 0.0, %v3197
        %v3199 = vpop.f32.mrb[0].mxu0
        %3200 = vmatprep.mubr.bf16.mxu0 0
        %3201 = vmatmul.mubr.bf16.gmra.mrb[0].mxu0 %v3014
        %v3202 = vpop.f32.mrb[0].mxu0
        %v3203 = vpop.f32.mrb[0].mxu0
        %v3204 = vpop.f32.mrb[0].mxu0
        %v3205 = vadd.f32 0.0, %v3204
        %v3206 = vpop.f32.mrb[0].mxu0
        %3207 = vmatprep.mubr.bf16.mxu0 0
        %3208 = vmatmul.mubr.bf16.gmra.mrb[0].mxu0 %v3017
        %v3209 = vpop.f32.mrb[0].mxu0
        %v3210 = vadd.f32 0.0, %v3209
        %v3211 = vpop.f32.mrb[0].mxu0
        %v3212 = vpop.f32.mrb[0].mxu0
        %v3213 = vpop.f32.mrb[0].mxu0
        %3214 = vmatprep.mubr.bf16.mxu0 0
        %3215 = vmatmul.mubr.bf16.gmra.mrb[0].mxu0 %v3020
        %v3216 = vpop.f32.mrb[0].mxu0
        %v3217 = vadd.f32 0.0, %v3216
        %v3218 = vpop.f32.mrb[0].mxu0
        %v3219 = vpop.f32.mrb[0].mxu0
        %v3220 = vadd.f32 0.0, %v3219
        %v3221 = vpop.f32.mrb[0].mxu0
        %3222 = vmatprep.mubr.bf16.mxu0 0
        %3223 = vmatmul.mubr.bf16.gmra.mrb[0].mxu0 %v3023
        %v3224 = vpop.f32.mrb[0].mxu0
        %v3225 = vpop.f32.mrb[0].mxu0
        %v3226 = vpop.f32.mrb[0].mxu0
        %v3227 = vadd.f32 0.0, %v3226
        %v3228 = vpop.f32.mrb[0].mxu0
        %3229 = vmatprep.mubr.bf16.mxu0 0
        %3230 = vmatmul.mubr.bf16.gmra.mrb[0].mxu0 %v3026
        %v3231 = vpop.f32.mrb[0].mxu0
        %v3232 = vadd.f32 0.0, %v3231
        %v3233 = vpop.f32.mrb[0].mxu0
        %v3234 = vpop.f32.mrb[0].mxu0
        %v3235 = vpop.f32.mrb[0].mxu0
        %3236 = vdwg.mxu0
        %v3237 = vadd.f32 %v2589, %v3063
        %v3238 = vadd.f32 %v2592, %v3066
        %v3239 = vadd.f32 %v2599, %v3073
        %v3240 = vadd.f32 %v2604, %v3078
        %v3241 = vadd.f32 %v2611, %v3085
        %v3242 = vadd.f32 %v2614, %v3088
        %v3243 = vadd.f32 %v2621, %v3095
        %v3244 = vadd.f32 %v2626, %v3100
        %v3245 = vadd.f32 %v2633, %v3107
        %v3246 = vadd.f32 %v2636, %v3110
        %v3247 = vadd.f32 %v2643, %v3117
        %v3248 = vadd.f32 %v2648, %v3122
        %v3249 = vadd.f32 %v2655, %v3129
        %v3250 = vadd.f32 %v2658, %v3132
        %v3251 = vadd.f32 %v2665, %v3139
        %v3252 = vadd.f32 %v2670, %v3144
        %v3253 = vadd.f32 %v2677, %v3151
        %v3254 = vadd.f32 %v2680, %v3154
        %v3255 = vadd.f32 %v2687, %v3161
        %v3256 = vadd.f32 %v2692, %v3166
        %v3257 = vadd.f32 %v2699, %v3173
        %v3258 = vadd.f32 %v2702, %v3176
        %v3259 = vadd.f32 %v2709, %v3183
        %v3260 = vadd.f32 %v2714, %v3188
        %v3261 = vadd.f32 %v2721, %v3195
        %v3262 = vadd.f32 %v2724, %v3198
        %v3263 = vadd.f32 %v2731, %v3205
        %v3264 = vadd.f32 %v2736, %v3210
        %v3265 = vadd.f32 %v2743, %v3217
        %v3266 = vadd.f32 %v2746, %v3220
        %v3267 = vadd.f32 %v2753, %v3227
        %v3268 = vadd.f32 %v2758, %v3232
        %s3269 = scalar_lea.vmem [#allocation2], 36
        %v3270 = vld [vmem:[%s3269] sm:$0xf]
        %v3271 = vld [vmem:[%s3269 + $0x4] sm:$0xf]
        %v3272 = vld [vmem:[%s3269 + $0x8] sm:$0xf]
        %v3273 = vld [vmem:[%s3269 + $0xc] sm:$0xf]
        %v3274 = vld [vmem:[%s3269 + $0x10] sm:$0xf]
        %v3275 = vld [vmem:[%s3269 + $0x14] sm:$0xf]
        %v3276 = vld [vmem:[%s3269 + $0x18] sm:$0xf]
        %v3277 = vld [vmem:[%s3269 + $0x1c] sm:$0xf]
        %v3278 = vld [vmem:[%s3269 + $0x20] sm:$0xf]
        %v3279 = vld [vmem:[%s3269 + $0x24] sm:$0xf]
        %v3280 = vld [vmem:[%s3269 + $0x28] sm:$0xf]
        %v3281 = vld [vmem:[%s3269 + $0x2c] sm:$0xf]
        %v3282 = vld [vmem:[%s3269 + $0x30] sm:$0xf]
        %v3283 = vld [vmem:[%s3269 + $0x34] sm:$0xf]
        %v3284 = vld [vmem:[%s3269 + $0x38] sm:$0xf]
        %v3285 = vld [vmem:[%s3269 + $0x3c] sm:$0xf]
        %v3286 = vld [vmem:[%s3269 + $0x40] sm:$0xf]
        %v3287 = vld [vmem:[%s3269 + $0x44] sm:$0xf]
        %v3288 = vld [vmem:[%s3269 + $0x48] sm:$0xf]
        %v3289 = vld [vmem:[%s3269 + $0x4c] sm:$0xf]
        %v3290 = vld [vmem:[%s3269 + $0x50] sm:$0xf]
        %v3291 = vld [vmem:[%s3269 + $0x54] sm:$0xf]
        %v3292 = vld [vmem:[%s3269 + $0x58] sm:$0xf]
        %v3293 = vld [vmem:[%s3269 + $0x5c] sm:$0xf]
        %v3294 = vld [vmem:[%s3269 + $0x60] sm:$0xf]
        %v3295 = vld [vmem:[%s3269 + $0x64] sm:$0xf]
        %v3296 = vld [vmem:[%s3269 + $0x68] sm:$0xf]
        %v3297 = vld [vmem:[%s3269 + $0x6c] sm:$0xf]
        %v3298 = vld [vmem:[%s3269 + $0x70] sm:$0xf]
        %v3299 = vld [vmem:[%s3269 + $0x74] sm:$0xf]
        %v3300 = vld [vmem:[%s3269 + $0x78] sm:$0xf]
        %v3301 = vld [vmem:[%s3269 + $0x7c] sm:$0xf]
        %v3302 = vld [vmem:[%s3269 + $0x80] sm:$0xf]
        %v3303 = vld [vmem:[%s3269 + $0x84] sm:$0xf]
        %v3304 = vld [vmem:[%s3269 + $0x88] sm:$0xf]
        %v3305 = vld [vmem:[%s3269 + $0x8c] sm:$0xf]
        %v3306 = vld [vmem:[%s3269 + $0x90] sm:$0xf]
        %v3307 = vld [vmem:[%s3269 + $0x94] sm:$0xf]
        %v3308 = vld [vmem:[%s3269 + $0x98] sm:$0xf]
        %v3309 = vld [vmem:[%s3269 + $0x9c] sm:$0xf]
        %v3310 = vld [vmem:[%s3269 + $0xa0] sm:$0xf]
        %v3311 = vld [vmem:[%s3269 + $0xa4] sm:$0xf]
        %v3312 = vld [vmem:[%s3269 + $0xa8] sm:$0xf]
        %v3313 = vld [vmem:[%s3269 + $0xac] sm:$0xf]
        %v3314 = vld [vmem:[%s3269 + $0xb0] sm:$0xf]
        %v3315 = vld [vmem:[%s3269 + $0xb4] sm:$0xf]
        %v3316 = vld [vmem:[%s3269 + $0xb8] sm:$0xf]
        %v3317 = vld [vmem:[%s3269 + $0xbc] sm:$0xf]
        %s3318 = scalar_lea.vmem [#allocation6], 72
        %v3319 = vld [vmem:[%s3318] sm:$0xf]
        %v3320 = vld [vmem:[%s3318 + $0x4] sm:$0xf]
        %v3321 = vld [vmem:[%s3318 + $0x8] sm:$0xf]
        %v3322 = vld [vmem:[%s3318 + $0xc] sm:$0xf]
        %v3323 = vld [vmem:[%s3318 + $0x10] sm:$0xf]
        %v3324 = vld [vmem:[%s3318 + $0x14] sm:$0xf]
        %v3373 = vunpack.c.l.b16 %v3270
        %v3374 = vunpack.c.l.b16 %v3271
        %v3375 = vunpack.c.l.b16 %v3272
        %v3376 = vunpack.c.l.b16 %v3273
        %v3377 = vunpack.c.l.b16 %v3274
        %v3378 = vunpack.c.l.b16 %v3275
        %v3379 = vunpack.c.l.b16 %v3276
        %v3380 = vunpack.c.l.b16 %v3277
        %v3381 = vunpack.c.l.b16 %v3278
        %v3382 = vunpack.c.l.b16 %v3279
        %v3383 = vunpack.c.l.b16 %v3280
        %v3384 = vunpack.c.l.b16 %v3281
        %v3385 = vunpack.c.l.b16 %v3282
        %v3386 = vunpack.c.l.b16 %v3283
        %v3387 = vunpack.c.l.b16 %v3284
        %v3388 = vunpack.c.l.b16 %v3285
        %v3389 = vunpack.c.l.b16 %v3286
        %v3390 = vunpack.c.l.b16 %v3287
        %v3391 = vunpack.c.l.b16 %v3288
        %v3392 = vunpack.c.l.b16 %v3289
        %v3393 = vunpack.c.l.b16 %v3290
        %v3394 = vunpack.c.l.b16 %v3291
        %v3395 = vunpack.c.l.b16 %v3292
        %v3396 = vunpack.c.l.b16 %v3293
        %v3397 = vunpack.c.l.b16 %v3294
        %v3398 = vunpack.c.l.b16 %v3295
        %v3399 = vunpack.c.l.b16 %v3296
        %v3400 = vunpack.c.l.b16 %v3297
        %v3401 = vunpack.c.l.b16 %v3298
        %v3402 = vunpack.c.l.b16 %v3299
        %v3403 = vunpack.c.l.b16 %v3300
        %v3404 = vunpack.c.l.b16 %v3301
        %v3405 = vunpack.c.l.b16 %v3302
        %v3406 = vunpack.c.l.b16 %v3303
        %v3407 = vunpack.c.l.b16 %v3304
        %v3408 = vunpack.c.l.b16 %v3305
        %v3409 = vunpack.c.l.b16 %v3306
        %v3410 = vunpack.c.l.b16 %v3307
        %v3411 = vunpack.c.l.b16 %v3308
        %v3412 = vunpack.c.l.b16 %v3309
        %v3413 = vunpack.c.l.b16 %v3310
        %v3414 = vunpack.c.l.b16 %v3311
        %v3415 = vunpack.c.l.b16 %v3312
        %v3416 = vunpack.c.l.b16 %v3313
        %v3417 = vunpack.c.l.b16 %v3314
        %v3418 = vunpack.c.l.b16 %v3315
        %v3419 = vunpack.c.l.b16 %v3316
        %v3420 = vunpack.c.l.b16 %v3317
        %v3421 = vpack.c.b16 %v3374, %v3373
        %v3422 = vpack.c.b16 %v3376, %v3375
        %v3423 = vpack.c.b16 %v3378, %v3377
        %v3424 = vpack.c.b16 %v3380, %v3379
        %v3425 = vpack.c.b16 %v3382, %v3381
        %v3426 = vpack.c.b16 %v3384, %v3383
        %v3427 = vpack.c.b16 %v3386, %v3385
        %v3428 = vpack.c.b16 %v3388, %v3387
        %v3429 = vpack.c.b16 %v3390, %v3389
        %v3430 = vpack.c.b16 %v3392, %v3391
        %v3431 = vpack.c.b16 %v3394, %v3393
        %v3432 = vpack.c.b16 %v3396, %v3395
        %v3433 = vpack.c.b16 %v3398, %v3397
        %v3434 = vpack.c.b16 %v3400, %v3399
        %v3435 = vpack.c.b16 %v3402, %v3401
        %v3436 = vpack.c.b16 %v3404, %v3403
        %v3437 = vpack.c.b16 %v3406, %v3405
        %v3438 = vpack.c.b16 %v3408, %v3407
        %v3439 = vpack.c.b16 %v3410, %v3409
        %v3440 = vpack.c.b16 %v3412, %v3411
        %v3441 = vpack.c.b16 %v3414, %v3413
        %v3442 = vpack.c.b16 %v3416, %v3415
        %v3443 = vpack.c.b16 %v3418, %v3417
        %v3444 = vpack.c.b16 %v3420, %v3419
        %v3451 = vunpack.c.l.b16 %v3319
        %v3452 = vunpack.c.l.b16 %v3320
        %v3453 = vunpack.c.l.b16 %v3321
        %v3454 = vunpack.c.l.b16 %v3322
        %v3455 = vunpack.c.l.b16 %v3323
        %v3456 = vunpack.c.l.b16 %v3324
        %v3457 = vpack.c.b16 %v3452, %v3451
        %v3458 = vpack.c.b16 %v3454, %v3453
        %v3459 = vpack.c.b16 %v3456, %v3455
        %v3464 = vsel %vm2062, %v3421, 0
        %v3467 = vsel %vm2062, %v3422, 0
        %v3470 = vsel %vm2062, %v3423, 0
        %v3473 = vsel %vm2062, %v3424, 0
        %v3476 = vsel %vm2062, %v3425, 0
        %v3479 = vsel %vm2062, %v3426, 0
        %v3482 = vsel %vm2062, %v3427, 0
        %v3485 = vsel %vm2062, %v3428, 0
        %v3488 = vsel %vm2062, %v3429, 0
        %v3491 = vsel %vm2062, %v3430, 0
        %v3494 = vsel %vm2062, %v3431, 0
        %v3497 = vsel %vm2062, %v3432, 0
        %v3500 = vsel %vm2062, %v3433, 0
        %v3503 = vsel %vm2062, %v3434, 0
        %v3506 = vsel %vm2062, %v3435, 0
        %v3509 = vsel %vm2062, %v3436, 0
        %v3512 = vsel %vm2062, %v3437, 0
        %v3515 = vsel %vm2062, %v3438, 0
        %v3518 = vsel %vm2062, %v3439, 0
        %v3521 = vsel %vm2062, %v3440, 0
        %v3524 = vsel %vm2062, %v3441, 0
        %v3527 = vsel %vm2062, %v3442, 0
        %v3530 = vsel %vm2062, %v3443, 0
        %v3533 = vsel %vm2062, %v3444, 0
        %3535 = vmatprep.subr.bf16.mxu0 0
        %3536 = vmatpush1.bf16.msra.mxu0 %v3457
        %3537 = vmatprep.subr.bf16.mxu0 0
        %3538 = vmatpush1.bf16.msra.mxu0 %v3458
        %3539 = vmatprep.subr.bf16.mxu0 0
        %3540 = vmatpush1.bf16.msra.mxu0 %v3459
        %3541 = vmatprep.subr.bf16.mxu0 0
        %3542 = vmatpush1.bf16.msra.mxu0 0
        %3543 = vmatprep.subr.bf16.mxu0 0
        %3544 = vmatpush1.bf16.msra.mxu0 0
        %3545 = vmatprep.subr.bf16.mxu0 0
        %3546 = vmatpush1.bf16.msra.mxu0 0
        %3547 = vmatprep.subr.bf16.mxu0 0
        %3548 = vmatpush1.bf16.msra.mxu0 0
        %3549 = vmatprep.subr.bf16.mxu0 0
        %3550 = vmatpush1.bf16.msra.mxu0 0
        %3551 = vmatprep.subr.bf16.mxu0 0
        %3552 = vmatpush1.bf16.msra.mxu0 0
        %3553 = vmatprep.subr.bf16.mxu0 0
        %3554 = vmatpush1.bf16.msra.mxu0 0
        %3555 = vmatprep.subr.bf16.mxu0 0
        %3556 = vmatpush1.bf16.msra.mxu0 0
        %3557 = vmatprep.subr.bf16.mxu0 0
        %3558 = vmatpush1.bf16.msra.mxu0 0
        %3559 = vmatprep.subr.bf16.mxu0 0
        %3560 = vmatpush1.bf16.msra.mxu0 0
        %3561 = vmatprep.subr.bf16.mxu0 0
        %3562 = vmatpush1.bf16.msra.mxu0 0
        %3563 = vmatprep.subr.bf16.mxu0 0
        %3564 = vmatpush1.bf16.msra.mxu0 0
        %3565 = vmatprep.subr.bf16.mxu0 0
        %3566 = vmatpush1.bf16.msra.mxu0 0
        %3567 = vmatprep.mubr.bf16.mxu0 0
        %3568 = vmatmul.mubr.bf16.gmra.mrb[0].mxu0 %v3464
        %v3569 = vpop.f32.mrb[0].mxu0
        %v3570 = vadd.f32 0.0, %v3569
        %v3571 = vpop.f32.mrb[0].mxu0
        %v3572 = vpop.f32.mrb[0].mxu0
        %v3573 = vadd.f32 0.0, %v3572
        %v3574 = vpop.f32.mrb[0].mxu0
        %3575 = vmatprep.mubr.bf16.mxu0 0
        %3576 = vmatmul.mubr.bf16.gmra.mrb[0].mxu0 %v3467
        %v3577 = vpop.f32.mrb[0].mxu0
        %v3578 = vpop.f32.mrb[0].mxu0
        %v3579 = vpop.f32.mrb[0].mxu0
        %v3580 = vadd.f32 0.0, %v3579
        %v3581 = vpop.f32.mrb[0].mxu0
        %3582 = vmatprep.mubr.bf16.mxu0 0
        %3583 = vmatmul.mubr.bf16.gmra.mrb[0].mxu0 %v3470
        %v3584 = vpop.f32.mrb[0].mxu0
        %v3585 = vadd.f32 0.0, %v3584
        %v3586 = vpop.f32.mrb[0].mxu0
        %v3587 = vpop.f32.mrb[0].mxu0
        %v3588 = vpop.f32.mrb[0].mxu0
        %3589 = vmatprep.mubr.bf16.mxu0 0
        %3590 = vmatmul.mubr.bf16.gmra.mrb[0].mxu0 %v3473
        %v3591 = vpop.f32.mrb[0].mxu0
        %v3592 = vadd.f32 0.0, %v3591
        %v3593 = vpop.f32.mrb[0].mxu0
        %v3594 = vpop.f32.mrb[0].mxu0
        %v3595 = vadd.f32 0.0, %v3594
        %v3596 = vpop.f32.mrb[0].mxu0
        %3597 = vmatprep.mubr.bf16.mxu0 0
        %3598 = vmatmul.mubr.bf16.gmra.mrb[0].mxu0 %v3476
        %v3599 = vpop.f32.mrb[0].mxu0
        %v3600 = vpop.f32.mrb[0].mxu0
        %v3601 = vpop.f32.mrb[0].mxu0
        %v3602 = vadd.f32 0.0, %v3601
        %v3603 = vpop.f32.mrb[0].mxu0
        %3604 = vmatprep.mubr.bf16.mxu0 0
        %3605 = vmatmul.mubr.bf16.gmra.mrb[0].mxu0 %v3479
        %v3606 = vpop.f32.mrb[0].mxu0
        %v3607 = vadd.f32 0.0, %v3606
        %v3608 = vpop.f32.mrb[0].mxu0
        %v3609 = vpop.f32.mrb[0].mxu0
        %v3610 = vpop.f32.mrb[0].mxu0
        %3611 = vmatprep.mubr.bf16.mxu0 0
        %3612 = vmatmul.mubr.bf16.gmra.mrb[0].mxu0 %v3482
        %v3613 = vpop.f32.mrb[0].mxu0
        %v3614 = vadd.f32 0.0, %v3613
        %v3615 = vpop.f32.mrb[0].mxu0
        %v3616 = vpop.f32.mrb[0].mxu0
        %v3617 = vadd.f32 0.0, %v3616
        %v3618 = vpop.f32.mrb[0].mxu0
        %3619 = vmatprep.mubr.bf16.mxu0 0
        %3620 = vmatmul.mubr.bf16.gmra.mrb[0].mxu0 %v3485
        %v3621 = vpop.f32.mrb[0].mxu0
        %v3622 = vpop.f32.mrb[0].mxu0
        %v3623 = vpop.f32.mrb[0].mxu0
        %v3624 = vadd.f32 0.0, %v3623
        %v3625 = vpop.f32.mrb[0].mxu0
        %3626 = vmatprep.mubr.bf16.mxu0 0
        %3627 = vmatmul.mubr.bf16.gmra.mrb[0].mxu0 %v3488
        %v3628 = vpop.f32.mrb[0].mxu0
        %v3629 = vadd.f32 0.0, %v3628
        %v3630 = vpop.f32.mrb[0].mxu0
        %v3631 = vpop.f32.mrb[0].mxu0
        %v3632 = vpop.f32.mrb[0].mxu0
        %3633 = vmatprep.mubr.bf16.mxu0 0
        %3634 = vmatmul.mubr.bf16.gmra.mrb[0].mxu0 %v3491
        %v3635 = vpop.f32.mrb[0].mxu0
        %v3636 = vadd.f32 0.0, %v3635
        %v3637 = vpop.f32.mrb[0].mxu0
        %v3638 = vpop.f32.mrb[0].mxu0
        %v3639 = vadd.f32 0.0, %v3638
        %v3640 = vpop.f32.mrb[0].mxu0
        %3641 = vmatprep.mubr.bf16.mxu0 0
        %3642 = vmatmul.mubr.bf16.gmra.mrb[0].mxu0 %v3494
        %v3643 = vpop.f32.mrb[0].mxu0
        %v3644 = vpop.f32.mrb[0].mxu0
        %v3645 = vpop.f32.mrb[0].mxu0
        %v3646 = vadd.f32 0.0, %v3645
        %v3647 = vpop.f32.mrb[0].mxu0
        %3648 = vmatprep.mubr.bf16.mxu0 0
        %3649 = vmatmul.mubr.bf16.gmra.mrb[0].mxu0 %v3497
        %v3650 = vpop.f32.mrb[0].mxu0
        %v3651 = vadd.f32 0.0, %v3650
        %v3652 = vpop.f32.mrb[0].mxu0
        %v3653 = vpop.f32.mrb[0].mxu0
        %v3654 = vpop.f32.mrb[0].mxu0
        %3655 = vmatprep.mubr.bf16.mxu0 0
        %3656 = vmatmul.mubr.bf16.gmra.mrb[0].mxu0 %v3500
        %v3657 = vpop.f32.mrb[0].mxu0
        %v3658 = vadd.f32 0.0, %v3657
        %v3659 = vpop.f32.mrb[0].mxu0
        %v3660 = vpop.f32.mrb[0].mxu0
        %v3661 = vadd.f32 0.0, %v3660
        %v3662 = vpop.f32.mrb[0].mxu0
        %3663 = vmatprep.mubr.bf16.mxu0 0
        %3664 = vmatmul.mubr.bf16.gmra.mrb[0].mxu0 %v3503
        %v3665 = vpop.f32.mrb[0].mxu0
        %v3666 = vpop.f32.mrb[0].mxu0
        %v3667 = vpop.f32.mrb[0].mxu0
        %v3668 = vadd.f32 0.0, %v3667
        %v3669 = vpop.f32.mrb[0].mxu0
        %3670 = vmatprep.mubr.bf16.mxu0 0
        %3671 = vmatmul.mubr.bf16.gmra.mrb[0].mxu0 %v3506
        %v3672 = vpop.f32.mrb[0].mxu0
        %v3673 = vadd.f32 0.0, %v3672
        %v3674 = vpop.f32.mrb[0].mxu0
        %v3675 = vpop.f32.mrb[0].mxu0
        %v3676 = vpop.f32.mrb[0].mxu0
        %3677 = vmatprep.mubr.bf16.mxu0 0
        %3678 = vmatmul.mubr.bf16.gmra.mrb[0].mxu0 %v3509
        %v3679 = vpop.f32.mrb[0].mxu0
        %v3680 = vadd.f32 0.0, %v3679
        %v3681 = vpop.f32.mrb[0].mxu0
        %v3682 = vpop.f32.mrb[0].mxu0
        %v3683 = vadd.f32 0.0, %v3682
        %v3684 = vpop.f32.mrb[0].mxu0
        %3685 = vmatprep.mubr.bf16.mxu0 0
        %3686 = vmatmul.mubr.bf16.gmra.mrb[0].mxu0 %v3512
        %v3687 = vpop.f32.mrb[0].mxu0
        %v3688 = vpop.f32.mrb[0].mxu0
        %v3689 = vpop.f32.mrb[0].mxu0
        %v3690 = vadd.f32 0.0, %v3689
        %v3691 = vpop.f32.mrb[0].mxu0
        %3692 = vmatprep.mubr.bf16.mxu0 0
        %3693 = vmatmul.mubr.bf16.gmra.mrb[0].mxu0 %v3515
        %v3694 = vpop.f32.mrb[0].mxu0
        %v3695 = vadd.f32 0.0, %v3694
        %v3696 = vpop.f32.mrb[0].mxu0
        %v3697 = vpop.f32.mrb[0].mxu0
        %v3698 = vpop.f32.mrb[0].mxu0
        %3699 = vmatprep.mubr.bf16.mxu0 0
        %3700 = vmatmul.mubr.bf16.gmra.mrb[0].mxu0 %v3518
        %v3701 = vpop.f32.mrb[0].mxu0
        %v3702 = vadd.f32 0.0, %v3701
        %v3703 = vpop.f32.mrb[0].mxu0
        %v3704 = vpop.f32.mrb[0].mxu0
        %v3705 = vadd.f32 0.0, %v3704
        %v3706 = vpop.f32.mrb[0].mxu0
        %3707 = vmatprep.mubr.bf16.mxu0 0
        %3708 = vmatmul.mubr.bf16.gmra.mrb[0].mxu0 %v3521
        %v3709 = vpop.f32.mrb[0].mxu0
        %v3710 = vpop.f32.mrb[0].mxu0
        %v3711 = vpop.f32.mrb[0].mxu0
        %v3712 = vadd.f32 0.0, %v3711
        %v3713 = vpop.f32.mrb[0].mxu0
        %3714 = vmatprep.mubr.bf16.mxu0 0
        %3715 = vmatmul.mubr.bf16.gmra.mrb[0].mxu0 %v3524
        %v3716 = vpop.f32.mrb[0].mxu0
        %v3717 = vadd.f32 0.0, %v3716
        %v3718 = vpop.f32.mrb[0].mxu0
        %v3719 = vpop.f32.mrb[0].mxu0
        %v3720 = vpop.f32.mrb[0].mxu0
        %3721 = vmatprep.mubr.bf16.mxu0 0
        %3722 = vmatmul.mubr.bf16.gmra.mrb[0].mxu0 %v3527
        %v3723 = vpop.f32.mrb[0].mxu0
        %v3724 = vadd.f32 0.0, %v3723
        %v3725 = vpop.f32.mrb[0].mxu0
        %v3726 = vpop.f32.mrb[0].mxu0
        %v3727 = vadd.f32 0.0, %v3726
        %v3728 = vpop.f32.mrb[0].mxu0
        %3729 = vmatprep.mubr.bf16.mxu0 0
        %3730 = vmatmul.mubr.bf16.gmra.mrb[0].mxu0 %v3530
        %v3731 = vpop.f32.mrb[0].mxu0
        %v3732 = vpop.f32.mrb[0].mxu0
        %v3733 = vpop.f32.mrb[0].mxu0
        %v3734 = vadd.f32 0.0, %v3733
        %v3735 = vpop.f32.mrb[0].mxu0
        %3736 = vmatprep.mubr.bf16.mxu0 0
        %3737 = vmatmul.mubr.bf16.gmra.mrb[0].mxu0 %v3533
        %v3738 = vpop.f32.mrb[0].mxu0
        %v3739 = vadd.f32 0.0, %v3738
        %v3740 = vpop.f32.mrb[0].mxu0
        %v3741 = vpop.f32.mrb[0].mxu0
        %v3742 = vpop.f32.mrb[0].mxu0
        %3743 = vdwg.mxu0
        %v3744 = vadd.f32 %v3237, %v3570
        %v3745 = vadd.f32 %v3238, %v3573
        %v3746 = vadd.f32 %v3239, %v3580
        %v3747 = vadd.f32 %v3240, %v3585
        %v3748 = vadd.f32 %v3241, %v3592
        %v3749 = vadd.f32 %v3242, %v3595
        %v3750 = vadd.f32 %v3243, %v3602
        %v3751 = vadd.f32 %v3244, %v3607
        %v3752 = vadd.f32 %v3245, %v3614
        %v3753 = vadd.f32 %v3246, %v3617
        %v3754 = vadd.f32 %v3247, %v3624
        %v3755 = vadd.f32 %v3248, %v3629
        %v3756 = vadd.f32 %v3249, %v3636
        %v3757 = vadd.f32 %v3250, %v3639
        %v3758 = vadd.f32 %v3251, %v3646
        %v3759 = vadd.f32 %v3252, %v3651
        %v3760 = vadd.f32 %v3253, %v3658
        %v3761 = vadd.f32 %v3254, %v3661
        %v3762 = vadd.f32 %v3255, %v3668
        %v3763 = vadd.f32 %v3256, %v3673
        %v3764 = vadd.f32 %v3257, %v3680
        %v3765 = vadd.f32 %v3258, %v3683
        %v3766 = vadd.f32 %v3259, %v3690
        %v3767 = vadd.f32 %v3260, %v3695
        %v3768 = vadd.f32 %v3261, %v3702
        %v3769 = vadd.f32 %v3262, %v3705
        %v3770 = vadd.f32 %v3263, %v3712
        %v3771 = vadd.f32 %v3264, %v3717
        %v3772 = vadd.f32 %v3265, %v3724
        %v3773 = vadd.f32 %v3266, %v3727
        %v3774 = vadd.f32 %v3267, %v3734
        %v3775 = vadd.f32 %v3268, %v3739
        %v3776 = vld [vmem:[#allocation8] sm:$0x1]
        %v3778 = vlaneseq
        %v3779 = vshrl.u32 %v3778, 7
        %v3780 = vsub.s32 0, %v3779
        %v3781 = vrot.slane %v3776, %v3780
        %v3783 = vadd.f32 %v3744, %v3781
        %v3784 = vadd.f32 %v3745, %v3781
        %v3785 = vadd.f32 %v3746, %v3781
        %v3786 = vadd.f32 %v3747, %v3781
        %v3787 = vadd.f32 %v3748, %v3781
        %v3788 = vadd.f32 %v3749, %v3781
        %v3789 = vadd.f32 %v3750, %v3781
        %v3790 = vadd.f32 %v3751, %v3781
        %v3791 = vadd.f32 %v3752, %v3781
        %v3792 = vadd.f32 %v3753, %v3781
        %v3793 = vadd.f32 %v3754, %v3781
        %v3794 = vadd.f32 %v3755, %v3781
        %v3795 = vadd.f32 %v3756, %v3781
        %v3796 = vadd.f32 %v3757, %v3781
        %v3797 = vadd.f32 %v3758, %v3781
        %v3798 = vadd.f32 %v3759, %v3781
        %v3799 = vadd.f32 %v3760, %v3781
        %v3800 = vadd.f32 %v3761, %v3781
        %v3801 = vadd.f32 %v3762, %v3781
        %v3802 = vadd.f32 %v3763, %v3781
        %v3803 = vadd.f32 %v3764, %v3781
        %v3804 = vadd.f32 %v3765, %v3781
        %v3805 = vadd.f32 %v3766, %v3781
        %v3806 = vadd.f32 %v3767, %v3781
        %v3807 = vadd.f32 %v3768, %v3781
        %v3808 = vadd.f32 %v3769, %v3781
        %v3809 = vadd.f32 %v3770, %v3781
        %v3810 = vadd.f32 %v3771, %v3781
        %v3811 = vadd.f32 %v3772, %v3781
        %v3812 = vadd.f32 %v3773, %v3781
        %v3813 = vadd.f32 %v3774, %v3781
        %v3814 = vadd.f32 %v3775, %v3781
        %v3815 = vmax.f32 %v3783, 0.0
        %v3816 = vmax.f32 %v3784, 0.0
        %v3817 = vmax.f32 %v3785, 0.0
        %v3818 = vmax.f32 %v3786, 0.0
        %v3819 = vmax.f32 %v3787, 0.0
        %v3820 = vmax.f32 %v3788, 0.0
        %v3821 = vmax.f32 %v3789, 0.0
        %v3822 = vmax.f32 %v3790, 0.0
        %v3823 = vmax.f32 %v3791, 0.0
        %v3824 = vmax.f32 %v3792, 0.0
        %v3825 = vmax.f32 %v3793, 0.0
        %v3826 = vmax.f32 %v3794, 0.0
        %v3827 = vmax.f32 %v3795, 0.0
        %v3828 = vmax.f32 %v3796, 0.0
        %v3829 = vmax.f32 %v3797, 0.0
        %v3830 = vmax.f32 %v3798, 0.0
        %v3831 = vmax.f32 %v3799, 0.0
        %v3832 = vmax.f32 %v3800, 0.0
        %v3833 = vmax.f32 %v3801, 0.0
        %v3834 = vmax.f32 %v3802, 0.0
        %v3835 = vmax.f32 %v3803, 0.0
        %v3836 = vmax.f32 %v3804, 0.0
        %v3837 = vmax.f32 %v3805, 0.0
        %v3838 = vmax.f32 %v3806, 0.0
        %v3839 = vmax.f32 %v3807, 0.0
        %v3840 = vmax.f32 %v3808, 0.0
        %v3841 = vmax.f32 %v3809, 0.0
        %v3842 = vmax.f32 %v3810, 0.0
        %v3843 = vmax.f32 %v3811, 0.0
        %v3844 = vmax.f32 %v3812, 0.0
        %v3845 = vmax.f32 %v3813, 0.0
        %v3846 = vmax.f32 %v3814, 0.0
        %v3847 = vpack.c.bf16 %v3816, %v3815
        %v3848 = vpack.c.bf16 %v3818, %v3817
        %v3849 = vpack.c.bf16 %v3820, %v3819
        %v3850 = vpack.c.bf16 %v3822, %v3821
        %v3851 = vpack.c.bf16 %v3824, %v3823
        %v3852 = vpack.c.bf16 %v3826, %v3825
        %v3853 = vpack.c.bf16 %v3828, %v3827
        %v3854 = vpack.c.bf16 %v3830, %v3829
        %v3855 = vpack.c.bf16 %v3832, %v3831
        %v3856 = vpack.c.bf16 %v3834, %v3833
        %v3857 = vpack.c.bf16 %v3836, %v3835
        %v3858 = vpack.c.bf16 %v3838, %v3837
        %v3859 = vpack.c.bf16 %v3840, %v3839
        %v3860 = vpack.c.bf16 %v3842, %v3841
        %v3861 = vpack.c.bf16 %v3844, %v3843
        %v3862 = vpack.c.bf16 %v3846, %v3845
        %v3879 = vunpack.c.l.b16 %v3847
        %v3880 = vunpack.c.h.b16 %v3847
        %v3881 = vunpack.c.l.b16 %v3848
        %v3882 = vunpack.c.h.b16 %v3848
        %v3883 = vunpack.c.l.b16 %v3849
        %v3884 = vunpack.c.h.b16 %v3849
        %v3885 = vunpack.c.l.b16 %v3850
        %v3886 = vunpack.c.h.b16 %v3850
        %v3887 = vunpack.c.l.b16 %v3851
        %v3888 = vunpack.c.h.b16 %v3851
        %v3889 = vunpack.c.l.b16 %v3852
        %v3890 = vunpack.c.h.b16 %v3852
        %v3891 = vunpack.c.l.b16 %v3853
        %v3892 = vunpack.c.h.b16 %v3853
        %v3893 = vunpack.c.l.b16 %v3854
        %v3894 = vunpack.c.h.b16 %v3854
        %v3895 = vunpack.c.l.b16 %v3855
        %v3896 = vunpack.c.h.b16 %v3855
        %v3897 = vunpack.c.l.b16 %v3856
        %v3898 = vunpack.c.h.b16 %v3856
        %v3899 = vunpack.c.l.b16 %v3857
        %v3900 = vunpack.c.h.b16 %v3857
        %v3901 = vunpack.c.l.b16 %v3858
        %v3902 = vunpack.c.h.b16 %v3858
        %v3903 = vunpack.c.l.b16 %v3859
        %v3904 = vunpack.c.h.b16 %v3859
        %v3905 = vunpack.c.l.b16 %v3860
        %v3906 = vunpack.c.h.b16 %v3860
        %v3907 = vunpack.c.l.b16 %v3861
        %v3908 = vunpack.c.h.b16 %v3861
        %v3909 = vunpack.c.l.b16 %v3862
        %v3910 = vunpack.c.h.b16 %v3862
        %v3911 = vpack.c.b16 %v3879, %v3879
        %v3912 = vpack.c.b16 %v3880, %v3880
        %v3913 = vpack.c.b16 %v3881, %v3881
        %v3914 = vpack.c.b16 %v3882, %v3882
        %v3915 = vpack.c.b16 %v3883, %v3883
        %v3916 = vpack.c.b16 %v3884, %v3884
        %v3917 = vpack.c.b16 %v3885, %v3885
        %v3918 = vpack.c.b16 %v3886, %v3886
        %v3919 = vpack.c.b16 %v3887, %v3887
        %v3920 = vpack.c.b16 %v3888, %v3888
        %v3921 = vpack.c.b16 %v3889, %v3889
        %v3922 = vpack.c.b16 %v3890, %v3890
        %v3923 = vpack.c.b16 %v3891, %v3891
        %v3924 = vpack.c.b16 %v3892, %v3892
        %v3925 = vpack.c.b16 %v3893, %v3893
        %v3926 = vpack.c.b16 %v3894, %v3894
        %v3927 = vpack.c.b16 %v3895, %v3895
        %v3928 = vpack.c.b16 %v3896, %v3896
        %v3929 = vpack.c.b16 %v3897, %v3897
        %v3930 = vpack.c.b16 %v3898, %v3898
        %v3931 = vpack.c.b16 %v3899, %v3899
        %v3932 = vpack.c.b16 %v3900, %v3900
        %v3933 = vpack.c.b16 %v3901, %v3901
        %v3934 = vpack.c.b16 %v3902, %v3902
        %v3935 = vpack.c.b16 %v3903, %v3903
        %v3936 = vpack.c.b16 %v3904, %v3904
        %v3937 = vpack.c.b16 %v3905, %v3905
        %v3938 = vpack.c.b16 %v3906, %v3906
        %v3939 = vpack.c.b16 %v3907, %v3907
        %v3940 = vpack.c.b16 %v3908, %v3908
        %v3941 = vpack.c.b16 %v3909, %v3909
        %v3942 = vpack.c.b16 %v3910, %v3910
        %vm3975 = vcmask 519168
        %3976 = vst.msk [vmem:[%s243] sm:$0xf] %vm3975, %v3911
        %3977 = vst.msk [vmem:[%s243 + $0x4] sm:$0xf] %vm3975, %v3912
        %3978 = vst.msk [vmem:[%s243 + $0x8] sm:$0xf] %vm3975, %v3913
        %3979 = vst.msk [vmem:[%s243 + $0xc] sm:$0xf] %vm3975, %v3914
        %3980 = vst.msk [vmem:[%s243 + $0x10] sm:$0xf] %vm3975, %v3915
        %3981 = vst.msk [vmem:[%s243 + $0x14] sm:$0xf] %vm3975, %v3916
        %3982 = vst.msk [vmem:[%s243 + $0x18] sm:$0xf] %vm3975, %v3917
        %3983 = vst.msk [vmem:[%s243 + $0x1c] sm:$0xf] %vm3975, %v3918
        %3984 = vst.msk [vmem:[%s243 + $0x20] sm:$0xf] %vm3975, %v3919
        %3985 = vst.msk [vmem:[%s243 + $0x24] sm:$0xf] %vm3975, %v3920
        %3986 = vst.msk [vmem:[%s243 + $0x28] sm:$0xf] %vm3975, %v3921
        %3987 = vst.msk [vmem:[%s243 + $0x2c] sm:$0xf] %vm3975, %v3922
        %3988 = vst.msk [vmem:[%s243 + $0x30] sm:$0xf] %vm3975, %v3923
        %3989 = vst.msk [vmem:[%s243 + $0x34] sm:$0xf] %vm3975, %v3924
        %3990 = vst.msk [vmem:[%s243 + $0x38] sm:$0xf] %vm3975, %v3925
        %3991 = vst.msk [vmem:[%s243 + $0x3c] sm:$0xf] %vm3975, %v3926
        %3992 = vst.msk [vmem:[%s243 + $0x40] sm:$0xf] %vm3975, %v3927
        %3993 = vst.msk [vmem:[%s243 + $0x44] sm:$0xf] %vm3975, %v3928
        %3994 = vst.msk [vmem:[%s243 + $0x48] sm:$0xf] %vm3975, %v3929
        %3995 = vst.msk [vmem:[%s243 + $0x4c] sm:$0xf] %vm3975, %v3930
        %3996 = vst.msk [vmem:[%s243 + $0x50] sm:$0xf] %vm3975, %v3931
        %3997 = vst.msk [vmem:[%s243 + $0x54] sm:$0xf] %vm3975, %v3932
        %3998 = vst.msk [vmem:[%s243 + $0x58] sm:$0xf] %vm3975, %v3933
        %3999 = vst.msk [vmem:[%s243 + $0x5c] sm:$0xf] %vm3975, %v3934
        %4000 = vst.msk [vmem:[%s243 + $0x60] sm:$0xf] %vm3975, %v3935
        %4001 = vst.msk [vmem:[%s243 + $0x64] sm:$0xf] %vm3975, %v3936
        %4002 = vst.msk [vmem:[%s243 + $0x68] sm:$0xf] %vm3975, %v3937
        %4003 = vst.msk [vmem:[%s243 + $0x6c] sm:$0xf] %vm3975, %v3938
        %4004 = vst.msk [vmem:[%s243 + $0x70] sm:$0xf] %vm3975, %v3939
        %4005 = vst.msk [vmem:[%s243 + $0x74] sm:$0xf] %vm3975, %v3940
        %4006 = vst.msk [vmem:[%s243 + $0x78] sm:$0xf] %vm3975, %v3941
        %4007 = vst.msk [vmem:[%s243 + $0x7c] sm:$0xf] %vm3975, %v3942
        %s4008 = sand.u32 %s121, 1
        %s4009 = scalar_lea.sflag [#allocation5], %s4008
        %s4010 = sand.u32 %s121, 1
        %s4011 = smul.addr %s4010, 128
        %s4012 = scalar_lea.vmem [#allocation9], %s4011
        // Predicated region
        $region45: #{tpu_custom_call.1} parent=31 // pred_check
          %p4013 = pneg %p131
        $region46: #{tpu_custom_call.1} parent=31 // pred_check_branch
          %4015 = sbr.rel (%p4013) target = $region48
        $region47: #{tpu_custom_call.1} parent=31 // pred_region
          %s4017 = ssub.s32 2048, 2048
          %4018 = vsyncadd %s4009, %s4017
          %s4019 = smul.addr %s25, 32
          %s4020 = sadd.s32 %s26, %s4019
          %s4021 = smul.addr %s4020, 64
          %s4022 = scalar_lea.hbm %s3, %s4021
          %s4023 = sshll.u32 %s4012, 4
          %s4024 = int_to_ptr.vmem [resolvable:$true] %s4023
          %4029 = dma.vmem_to_hbm [thread:$0]  %s4024, 2048, %s4022, %s4009, 64, 64, 4
        $region48: #{tpu_custom_call.1} parent=31 // pred_fallthru
          _
      $region32: #{tpu_custom_call.1} parent=5 // pred_fallthru
        _
      %p4030 = scmp.le.s32.totalorder 2, %s16
      // Predicated region
      $region49: #{tpu_custom_call.1} parent=5 // pred_check
        %p4031 = pneg %p4030
      $region50: #{tpu_custom_call.1} parent=5 // pred_check_branch
        %4033 = sbr.rel (%p4031) target = $region52
      $region51: #{tpu_custom_call.1} parent=5 // pred_region
        %s4034 = ssub.s32 %s16, 2
        // Predicated region
        $region53: #{tpu_custom_call.1} parent=51 // pred_check
          %p4035 = pneg %p137
        $region54: #{tpu_custom_call.1} parent=51 // pred_check_branch
          %4037 = sbr.rel (%p4035) target = $region56
        $region55: #{tpu_custom_call.1} parent=51 // pred_region
          %s4038 = sand.u32 %s122, 1
          %s4039 = scalar_lea.sflag [#allocation5], %s4038
          %s4040 = sand.u32 %s122, 1
          %s4041 = smul.addr %s4040, 128
          %s4042 = scalar_lea.vmem [#allocation9], %s4041
          %4043 = dma.done %s4039, 2048
        $region56: #{tpu_custom_call.1} parent=51 // pred_fallthru
          _
      $region52: #{tpu_custom_call.1} parent=5 // pred_fallthru
        _
    $region6: #{tpu_custom_call.1} parent=1 // loop_footer
      %s20 = sadd.s32 1, %s16
    $region7: #{tpu_custom_call.1} parent=1 // loop_footer_branch
      %15 = sbr.rel target = $region3
    $region8: #{tpu_custom_call.1} parent=1 // loop_exit
      _
    %4044 = vsyncpa [#allocation4], 1
    %s4045 = scalar_lea.sflag [#allocation4], 1
    %4046 = vsyncpa %s4045, 1
    %4047 = vsyncpa [#allocation7], 1
    %4048 = vsyncpa [#allocation5], 1
    %s4049 = scalar_lea.sflag [#allocation5], 1
    %4050 = vsyncpa %s4049, 1

</llo_original>
